<compile_context>
chip_gen: v6e
topology: v6e:2x2x1
jax: 0.10.0
libtpu: 0.0.40
codegen_flags: <defaults>
</compile_context>

<pallas_src>
import math
from functools import partial

import jax
import jax.numpy as jnp
from jax import lax
from jax.experimental import pallas as pl
from jax.experimental.pallas import tpu as pltpu  # noqa: F401  (TPU backend)


_SQRT_HALF = 1.0 / math.sqrt(2.0)


# ----------------------------------------------------------------------------
# In-kernel helpers (only elementwise / MXU friendly ops)
# ----------------------------------------------------------------------------

def _erf(x):
    """Abramowitz & Stegun 7.1.26 erf approximation (|err| < 1.5e-7).

    Uses only abs/exp/mul/add/div so it always lowers in Mosaic (exact
    erf-GELU semantics of nn.GELU() to within float tolerance)."""
    a1, a2, a3, a4, a5 = (0.254829592, -0.284496736, 1.421413741,
                          -1.453152027, 1.061405429)
    pcoef = 0.3275911
    sgn = jnp.where(x >= 0.0, 1.0, -1.0)
    ax = jnp.abs(x)
    t = 1.0 / (1.0 + pcoef * ax)
    poly = ((((a5 * t + a4) * t + a3) * t + a2) * t + a1) * t
    return sgn * (1.0 - poly * jnp.exp(-ax * ax))


def _gelu(x):
    return 0.5 * x * (1.0 + _erf(x * _SQRT_HALF))


def _layernorm(x, g, b, eps=1e-5):
    mu = jnp.mean(x, axis=-1, keepdims=True)
    xc = x - mu
    var = jnp.mean(xc * xc, axis=-1, keepdims=True)
    return xc * lax.rsqrt(var + eps) * g + b


# ----------------------------------------------------------------------------
# Fused transformer layer kernel (used for both type and hop layers)
# ----------------------------------------------------------------------------

def _fused_layer_kernel(x_ref, emb_w_ref, emb_b_ref, bias_ref, hmask_ref,
                        ln1g_ref, ln1b_ref,
                        wq_ref, bq_ref, wk_ref, bk_ref, wv_ref, bv_ref,
                        wo_ref, bo_ref, ln2g_ref, ln2b_ref,
                        w1_ref, b1_ref, w2_ref, b2_ref,
                        fg_ref, fb_ref, o_ref, *,
                        num_heads, scale, fuse_embed, apply_final_ln):
    # Optional fused input embedding (att_embeddings_nope).
    if fuse_embed:
        x = (jnp.dot(x_ref[...].astype(jnp.bfloat16), emb_w_ref[...],
                     preferred_element_type=jnp.float32) + emb_b_ref[...])
    else:
        x = x_ref[...]
    M, d = x.shape

    # ---- LN1 + QKV projections (bf16 MXU, f32 accumulation) ----
    y = _layernorm(x, ln1g_ref[...], ln1b_ref[...])
    yb = y.astype(jnp.bfloat16)
    q = jnp.dot(yb, wq_ref[...], preferred_element_type=jnp.float32) + bq_ref[...]
    k = jnp.dot(yb, wk_ref[...], preferred_element_type=jnp.float32) + bk_ref[...]
    v = jnp.dot(yb, wv_ref[...], preferred_element_type=jnp.float32) + bv_ref[...]

    # ---- block-diagonal multi-head attention over all groups at once ----
    bias = bias_ref[...]            # [M, M]: 0 inside a group, -1e9 outside
    hmask = hmask_ref[...]          # [H, d]: lane mask per head
    kb = k.astype(jnp.bfloat16)
    qs = q * scale
    attn = jnp.zeros((M, d), jnp.float32)
    for h in range(num_heads):      # H=4, unrolled at trace time
        hm = hmask[h:h + 1, :]                                 # [1, d]
        qh = (qs * hm).astype(jnp.bfloat16)                    # zero non-head lanes
        s = lax.dot_general(qh, kb, (((1,), (1,)), ((), ())),
                            preferred_element_type=jnp.float32) + bias   # [M, M]
        s = s - jnp.max(s, axis=-1, keepdims=True)
        p = jnp.exp(s)
        p = p / jnp.sum(p, axis=-1, keepdims=True)
        vh = (v * hm).astype(jnp.bfloat16)                     # head-h columns only
        attn = attn + jnp.dot(p.astype(jnp.bfloat16), vh,
                              preferred_element_type=jnp.float32)

    z = x + jnp.dot(attn.astype(jnp.bfloat16), wo_ref[...],
                    preferred_element_type=jnp.float32) + bo_ref[...]

    # ---- LN2 + FFN (Linear -> GELU -> Linear) ----
    y2 = _layernorm(z, ln2g_ref[...], ln2b_ref[...])
    h1 = jnp.dot(y2.astype(jnp.bfloat16), w1_ref[...],
                 preferred_element_type=jnp.float32) + b1_ref[...]
    h1 = _gelu(h1)
    z = z + jnp.dot(h1.astype(jnp.bfloat16), w2_ref[...],
                    preferred_element_type=jnp.float32) + b2_ref[...]

    # Optional fused final LayerNorm of the surrounding (Type)Transformer.
    if apply_final_ln:
        z = _layernorm(z, fg_ref[...], fb_ref[...])
    o_ref[...] = z


def fused_transformer_layer(x2d, lp, *, attn_bias, head_mask, num_heads,
                            emb=None, final_ln=None):
    M = x2d.shape[0]
    d = lp['wq'].shape[1]
    dk = d // num_heads
    fuse_embed = emb is not None
    apply_final_ln = final_ln is not None
    dummy_f = jnp.zeros((1, 1), jnp.float32)
    dummy_b = jnp.zeros((1, 1), jnp.bfloat16)
    emb_w, emb_b = emb if fuse_embed else (dummy_b, dummy_f)
    fg, fb = final_ln if apply_final_ln else (dummy_f, dummy_f)
    kernel = partial(_fused_layer_kernel, num_heads=num_heads, scale=dk ** -0.5,
                     fuse_embed=fuse_embed, apply_final_ln=apply_final_ln)
    return pl.pallas_call(
        kernel,
        out_shape=jax.ShapeDtypeStruct((M, d), jnp.float32),
    )(x2d, emb_w, emb_b, attn_bias, head_mask,
      lp['ln1_g'], lp['ln1_b'],
      lp['wq'], lp['bq'], lp['wk'], lp['bk'], lp['wv'], lp['bv'],
      lp['wo'], lp['bo'], lp['ln2_g'], lp['ln2_b'],
      lp['ffn_w1'], lp['ffn_b1'], lp['ffn_w2'], lp['ffn_b2'],
      fg, fb)


# ----------------------------------------------------------------------------
# TypeTransformer tail: node MLP + (bmm, bmm) aggregation (NO softmax — matches
# the reference), expressed as full 2-D matmuls with precomputed masks.
# ----------------------------------------------------------------------------

def _type_tail_kernel(node_cat_ref, sub_ref, expand_ref, block_ref,
                      w1_ref, b1_ref, w2_ref, b2_ref,
                      node_out_ref, neigh_out_ref):
    # node MLP: Linear(T*d, 256) -> ReLU -> Linear(256, d)
    nc = node_cat_ref[...]                                          # [N, T*d]
    h1 = jnp.dot(nc.astype(jnp.bfloat16), w1_ref[...],
                 preferred_element_type=jnp.float32) + b1_ref[...]
    h1 = jnp.maximum(h1, 0.0)
    agg = jnp.dot(h1.astype(jnp.bfloat16), w2_ref[...],
                  preferred_element_type=jnp.float32) + b2_ref[...]  # [N, d]
    node_out_ref[...] = agg

    # per-(n, hop) aggregation: atten = node_agg @ sub^T ; out = atten @ sub
    sub = sub_ref[...].astype(jnp.bfloat16)                          # [R*T, d]
    agg_exp = jnp.dot(expand_ref[...], agg,
                      preferred_element_type=jnp.float32)            # [R, d]
    scores = lax.dot_general(agg_exp.astype(jnp.bfloat16), sub,
                             (((1,), (1,)), ((), ())),
                             preferred_element_type=jnp.float32)     # [R, R*T]
    masked = (scores * block_ref[...]).astype(jnp.bfloat16)          # keep own block
    neigh_out_ref[...] = jnp.dot(masked, sub,
                                 preferred_element_type=jnp.float32)  # [R, d]


# ----------------------------------------------------------------------------
# HopTransformer tail: final LN + attn_layer scoring + softmax over hops +
# weighted neighbor sum + residual with the node row.  One block, VPU math.
# ----------------------------------------------------------------------------

def _hop_tail_kernel(x_ref, g_ref, b_ref, wt_ref, wn_ref, ab_ref, o_ref, *, S):
    ln = _layernorm(x_ref[...], g_ref[...], b_ref[...])              # [N*S, d]
    t_sc = jnp.sum(ln * wt_ref[...], axis=-1, keepdims=True)         # [N*S, 1]
    n_sc = jnp.sum(ln * wn_ref[...], axis=-1, keepdims=True)         # [N*S, 1]
    bias = ab_ref[...]                                               # [1, 1]
    M = ln.shape[0]
    N = M // S
    for n in range(N):                                   # small, unrolled
        base = n * S
        node = ln[base:base + 1, :]                                  # [1, d]
        t_s = t_sc[base:base + 1, :]                                 # [1, 1]
        rows = [ln[base + j:base + j + 1, :] for j in range(1, S)]   # [1, d] each
        scs = [n_sc[base + j:base + j + 1, :] + t_s + bias
               for j in range(1, S)]                                 # [1, 1] each
        m = scs[0]
        for sc in scs[1:]:
            m = jnp.maximum(m, sc)
        es = [jnp.exp(sc - m) for sc in scs]
        denom = es[0]
        for e in es[1:]:
            denom = denom + e
        agg = es[0] * rows[0]
        for e, r in zip(es[1:], rows[1:]):
            agg = agg + e * r
        agg = agg / denom
        o_ref[pl.ds(n, 1), :] = node + agg


# ----------------------------------------------------------------------------
# Mask / selection constants (computed in plain JAX; folded by XLA)
# ----------------------------------------------------------------------------

def _group_bias(M, group):
    gid = jnp.arange(M, dtype=jnp.int32) // group
    same = gid[:, None] == gid[None, :]
    return jnp.where(same, 0.0, -1e9).astype(jnp.float32)


def _head_mask(num_heads, d):
    dk = d // num_heads
    lane = jnp.arange(d, dtype=jnp.int32)
    head = jnp.arange(num_heads, dtype=jnp.int32)
    return ((lane[None, :] // dk) == head[:, None]).astype(jnp.float32)


def _expand_mat(N, S):
    r = jnp.arange(N * (S - 1), dtype=jnp.int32)
    n = jnp.arange(N, dtype=jnp.int32)
    return ((r[:, None] // (S - 1)) == n[None, :]).astype(jnp.float32)


def _block_mat(R, T):
    r = jnp.arange(R, dtype=jnp.int32)
    c = jnp.arange(R * T, dtype=jnp.int32)
    return (r[:, None] == (c[None, :] // T)).astype(jnp.float32)


# ----------------------------------------------------------------------------
# Full forward
# ----------------------------------------------------------------------------

def hierarchical_transformer_forward(params, x, *, num_heads, d_model,
                                     seq_len, type_):
    """x: [D0, B, seq_len, type, input_dim] -> output: [D0, B, d_model]"""
    D0, B, S, T, F = x.shape
    assert S == seq_len and T == type_
    d = d_model
    N = D0 * B

    head_mask = _head_mask(num_heads, d)

    # -------- TypeTransformer (attention over the type axis, groups of T) -----
    h = x.reshape(D0 * B * S * T, F)
    bias_type = _group_bias(D0 * B * S * T, T)
    type_layers = params['type_layers']
    n_type = len(type_layers)
    for li, lp in enumerate(type_layers):
        h = fused_transformer_layer(
            h, lp, attn_bias=bias_type, head_mask=head_mask, num_heads=num_heads,
            emb=(params['emb_w'], params['emb_b']) if li == 0 else None,
            final_ln=((params['type_ln_g'], params['type_ln_b'])
                      if li == n_type - 1 else None))
    h5 = h.reshape(D0, B, S, T, d)

    # tail: node MLP + type aggregation (layout plumbing done in the wrapper)
    node_cat = h5[:, :, 0, :, :].reshape(N, T * d)
    sub_flat = h5[:, :, 1:, :, :].reshape(N * (S - 1) * T, d)
    R = N * (S - 1)
    node_agg, neigh = pl.pallas_call(
        _type_tail_kernel,
        out_shape=(jax.ShapeDtypeStruct((N, d), jnp.float32),
                   jax.ShapeDtypeStruct((R, d), jnp.float32)),
    )(node_cat, sub_flat, _expand_mat(N, S), _block_mat(R, T),
      params['mlp_w1'], params['mlp_b1'], params['mlp_w2'], params['mlp_b2'])

    type_output = jnp.concatenate(
        [node_agg.reshape(N, 1, d), neigh.reshape(N, S - 1, d)], axis=1)

    # -------- HopTransformer (attention over the hop axis, groups of S) -------
    h2 = type_output.reshape(N * S, d)
    bias_hop = _group_bias(N * S, S)
    for lp in params['hop_layers']:
        h2 = fused_transformer_layer(
            h2, lp, attn_bias=bias_hop, head_mask=head_mask, num_heads=num_heads)

    out = pl.pallas_call(
        partial(_hop_tail_kernel, S=S),
        out_shape=jax.ShapeDtypeStruct((N, d), jnp.float32),
    )(h2, params['hop_ln_g'], params['hop_ln_b'],
      params['attn_wt'], params['attn_wn'], params['attn_b'])
    return out.reshape(D0, B, d)


# ----------------------------------------------------------------------------
# Deterministic parameter initialization (matches init_params semantics;
# Linear weights stored as [in, out], matmul weights in bfloat16)
# ----------------------------------------------------------------------------

def _init_linear(key, fan_in, fan_out, std, w_dtype=jnp.bfloat16):
    w = (std * jax.random.normal(key, (fan_in, fan_out), jnp.float32)).astype(w_dtype)
    b = jnp.zeros((1, fan_out), jnp.float32)
    return w, b


def _init_layer(key, d, ffn_dim, std):
    ks = jax.random.split(key, 6)
    p = {'ln1_g': jnp.ones((1, d), jnp.float32), 'ln1_b': jnp.zeros((1, d), jnp.float32),
         'ln2_g': jnp.ones((1, d), jnp.float32), 'ln2_b': jnp.zeros((1, d), jnp.float32)}
    p['wq'], p['bq'] = _init_linear(ks[0], d, d, std)
    p['wk'], p['bk'] = _init_linear(ks[1], d, d, std)
    p['wv'], p['bv'] = _init_linear(ks[2], d, d, std)
    p['wo'], p['bo'] = _init_linear(ks[3], d, d, std)
    p['ffn_w1'], p['ffn_b1'] = _init_linear(ks[4], d, ffn_dim, std)
    p['ffn_w2'], p['ffn_b2'] = _init_linear(ks[5], ffn_dim, d, std)
    return p


def init_model(key, *, type_, hops, input_dim, L_hop, L_type, num_heads, d_model):
    ffn_dim = 2 * d_model
    L = L_hop + L_type
    std = 0.02 / math.sqrt(L)
    keys = jax.random.split(key, 4 + L_type + L_hop)
    params = {}
    params['emb_w'], params['emb_b'] = _init_linear(keys[0], input_dim, d_model, std)
    params['type_layers'] = [_init_layer(keys[4 + i], d_model, ffn_dim, std)
                             for i in range(L_type)]
    params['type_ln_g'] = jnp.ones((1, d_model), jnp.float32)
    params['type_ln_b'] = jnp.zeros((1, d_model), jnp.float32)
    params['mlp_w1'], params['mlp_b1'] = _init_linear(keys[1], type_ * d_model, 256, std)
    params['mlp_w2'], params['mlp_b2'] = _init_linear(keys[2], 256, d_model, std)
    params['hop_layers'] = [_init_layer(keys[4 + L_type + i], d_model, ffn_dim, std)
                            for i in range(L_hop)]
    params['hop_ln_g'] = jnp.ones((1, d_model), jnp.float32)
    params['hop_ln_b'] = jnp.zeros((1, d_model), jnp.float32)
    # attn_layer: Linear(2*d_model, 1); split into target / neighbor halves.
    aw = std * jax.random.normal(keys[3], (2 * d_model, 1), jnp.float32)
    params['attn_wt'] = aw[:d_model, 0].reshape(1, d_model)
    params['attn_wn'] = aw[d_model:, 0].reshape(1, d_model)
    params['attn_b'] = jnp.zeros((1, 1), jnp.float32)
    # TODO(synk): TypeTransformer.linear_layer(type, 1) exists in __init__ but is
    # never used in the reference forward, so it is intentionally not materialized.
    return params


# ----------------------------------------------------------------------------
# Main
# ----------------------------------------------------------------------------

if __name__ == "__main__":
    TYPE = 4
    HOPS = 3
    SEQ = HOPS + 1
    INPUT_DIM = 16
    D_MODEL = 32
    NUM_HEADS = 4
    L_HOP = 1
    L_TYPE = 1
    D0, B = 2, 2

    key = jax.random.PRNGKey(0)
    pkey, xkey = jax.random.split(key)

    params = init_model(pkey, type_=TYPE, hops=HOPS, input_dim=INPUT_DIM,
                        L_hop=L_HOP, L_type=L_TYPE,
                        num_heads=NUM_HEADS, d_model=D_MODEL)
    x = jax.random.normal(xkey, (D0, B, SEQ, TYPE, INPUT_DIM), dtype=jnp.float32)

    fwd = jax.jit(partial(hierarchical_transformer_forward,
                          num_heads=NUM_HEADS, d_model=D_MODEL,
                          seq_len=SEQ, type_=TYPE))
    out = fwd(params, x)
    jax.block_until_ready(out)

    assert out.shape == (D0, B, D_MODEL), out.shape
    assert bool(jnp.all(jnp.isfinite(out)))
    print("KERNEL_OK")
</pallas_src>

<mosaic_0001>
module attributes {stable_mosaic.version = 11 : i64} {
  func.func @_fused_layer_kernel(%arg0: memref<64x16xf32, #tpu.memory_space<vmem>>, %arg1: memref<16x32xbf16, #tpu.memory_space<vmem>>, %arg2: memref<1x32xf32, #tpu.memory_space<vmem>>, %arg3: memref<64x64xf32, #tpu.memory_space<vmem>>, %arg4: memref<4x32xf32, #tpu.memory_space<vmem>>, %arg5: memref<1x32xf32, #tpu.memory_space<vmem>>, %arg6: memref<1x32xf32, #tpu.memory_space<vmem>>, %arg7: memref<32x32xbf16, #tpu.memory_space<vmem>>, %arg8: memref<1x32xf32, #tpu.memory_space<vmem>>, %arg9: memref<32x32xbf16, #tpu.memory_space<vmem>>, %arg10: memref<1x32xf32, #tpu.memory_space<vmem>>, %arg11: memref<32x32xbf16, #tpu.memory_space<vmem>>, %arg12: memref<1x32xf32, #tpu.memory_space<vmem>>, %arg13: memref<32x32xbf16, #tpu.memory_space<vmem>>, %arg14: memref<1x32xf32, #tpu.memory_space<vmem>>, %arg15: memref<1x32xf32, #tpu.memory_space<vmem>>, %arg16: memref<1x32xf32, #tpu.memory_space<vmem>>, %arg17: memref<32x64xbf16, #tpu.memory_space<vmem>>, %arg18: memref<1x64xf32, #tpu.memory_space<vmem>>, %arg19: memref<64x32xbf16, #tpu.memory_space<vmem>>, %arg20: memref<1x32xf32, #tpu.memory_space<vmem>>, %arg21: memref<1x32xf32, #tpu.memory_space<vmem>>, %arg22: memref<1x32xf32, #tpu.memory_space<vmem>>, %arg23: memref<64x32xf32, #tpu.memory_space<vmem>>) attributes {dimension_semantics = [], scalar_prefetch = 0 : i64, scratch_operands = 0 : i64, tpu.core_type = #tpu.core_type<tc>} {
    %c0 = arith.constant 0 : index
    %c0_0 = arith.constant 0 : index
    %0 = vector.load %arg0[%c0, %c0_0] : memref<64x16xf32, #tpu.memory_space<vmem>>, vector<64x16xf32>
    %1 = arith.truncf %0 : vector<64x16xf32> to vector<64x16xbf16>
    %c0_1 = arith.constant 0 : index
    %c0_2 = arith.constant 0 : index
    %2 = vector.load %arg1[%c0_1, %c0_2] : memref<16x32xbf16, #tpu.memory_space<vmem>>, vector<16x32xbf16>
    %cst = arith.constant dense<0.000000e+00> : vector<64x32xf32>
    %3 = tpu.matmul %1, %2, %cst {dimension_numbers = #tpu.dot_dimension_numbers<[1], [0], [0], [1], [0, 0, 1, 1], [], []>} : vector<64x16xbf16>, vector<16x32xbf16>, vector<64x32xf32> -> vector<64x32xf32>
    %c0_3 = arith.constant 0 : index
    %c0_4 = arith.constant 0 : index
    %4 = vector.load %arg2[%c0_3, %c0_4] : memref<1x32xf32, #tpu.memory_space<vmem>>, vector<1x32xf32>
    %5 = vector.broadcast %4 : vector<1x32xf32> to vector<64x32xf32>
    %6 = arith.addf %3, %5 : vector<64x32xf32>
    %c0_5 = arith.constant 0 : index
    %c0_6 = arith.constant 0 : index
    %7 = vector.load %arg5[%c0_5, %c0_6] : memref<1x32xf32, #tpu.memory_space<vmem>>, vector<1x32xf32>
    %c0_7 = arith.constant 0 : index
    %c0_8 = arith.constant 0 : index
    %8 = vector.load %arg6[%c0_7, %c0_8] : memref<1x32xf32, #tpu.memory_space<vmem>>, vector<1x32xf32>
    %cst_9 = arith.constant dense<0.000000e+00> : vector<64xf32>
    %9 = vector.multi_reduction <add>, %6, %cst_9 [1] : vector<64x32xf32> to vector<64xf32>
    %10 = vector.shape_cast %9 : vector<64xf32> to vector<64x1xf32>
    %cst_10 = arith.constant 3.200000e+01 : f32
    %11 = vector.broadcast %cst_10 : f32 to vector<64x1xf32>
    %12 = arith.divf %10, %11 : vector<64x1xf32>
    %13 = vector.broadcast %12 : vector<64x1xf32> to vector<64x32xf32>
    %14 = arith.subf %6, %13 : vector<64x32xf32>
    %15 = arith.mulf %14, %14 : vector<64x32xf32>
    %cst_11 = arith.constant dense<0.000000e+00> : vector<64xf32>
    %16 = vector.multi_reduction <add>, %15, %cst_11 [1] : vector<64x32xf32> to vector<64xf32>
    %17 = vector.shape_cast %16 : vector<64xf32> to vector<64x1xf32>
    %cst_12 = arith.constant 3.200000e+01 : f32
    %18 = vector.broadcast %cst_12 : f32 to vector<64x1xf32>
    %19 = arith.divf %17, %18 : vector<64x1xf32>
    %cst_13 = arith.constant 9.99999974E-6 : f32
    %20 = vector.broadcast %cst_13 : f32 to vector<64x1xf32>
    %21 = arith.addf %19, %20 : vector<64x1xf32>
    %22 = math.rsqrt %21 : vector<64x1xf32>
    %23 = vector.broadcast %22 : vector<64x1xf32> to vector<64x32xf32>
    %24 = arith.mulf %14, %23 : vector<64x32xf32>
    %25 = vector.broadcast %7 : vector<1x32xf32> to vector<64x32xf32>
    %26 = arith.mulf %24, %25 : vector<64x32xf32>
    %27 = vector.broadcast %8 : vector<1x32xf32> to vector<64x32xf32>
    %28 = arith.addf %26, %27 : vector<64x32xf32>
    %29 = arith.truncf %28 : vector<64x32xf32> to vector<64x32xbf16>
    %c0_14 = arith.constant 0 : index
    %c0_15 = arith.constant 0 : index
    %30 = vector.load %arg7[%c0_14, %c0_15] : memref<32x32xbf16, #tpu.memory_space<vmem>>, vector<32x32xbf16>
    %cst_16 = arith.constant dense<0.000000e+00> : vector<64x32xf32>
    %31 = tpu.matmul %29, %30, %cst_16 {dimension_numbers = #tpu.dot_dimension_numbers<[1], [0], [0], [1], [0, 0, 1, 1], [], []>} : vector<64x32xbf16>, vector<32x32xbf16>, vector<64x32xf32> -> vector<64x32xf32>
    %c0_17 = arith.constant 0 : index
    %c0_18 = arith.constant 0 : index
    %32 = vector.load %arg8[%c0_17, %c0_18] : memref<1x32xf32, #tpu.memory_space<vmem>>, vector<1x32xf32>
    %33 = vector.broadcast %32 : vector<1x32xf32> to vector<64x32xf32>
    %34 = arith.addf %31, %33 : vector<64x32xf32>
    %c0_19 = arith.constant 0 : index
    %c0_20 = arith.constant 0 : index
    %35 = vector.load %arg9[%c0_19, %c0_20] : memref<32x32xbf16, #tpu.memory_space<vmem>>, vector<32x32xbf16>
    %cst_21 = arith.constant dense<0.000000e+00> : vector<64x32xf32>
    %36 = tpu.matmul %29, %35, %cst_21 {dimension_numbers = #tpu.dot_dimension_numbers<[1], [0], [0], [1], [0, 0, 1, 1], [], []>} : vector<64x32xbf16>, vector<32x32xbf16>, vector<64x32xf32> -> vector<64x32xf32>
    %c0_22 = arith.constant 0 : index
    %c0_23 = arith.constant 0 : index
    %37 = vector.load %arg10[%c0_22, %c0_23] : memref<1x32xf32, #tpu.memory_space<vmem>>, vector<1x32xf32>
    %38 = vector.broadcast %37 : vector<1x32xf32> to vector<64x32xf32>
    %39 = arith.addf %36, %38 : vector<64x32xf32>
    %c0_24 = arith.constant 0 : index
    %c0_25 = arith.constant 0 : index
    %40 = vector.load %arg11[%c0_24, %c0_25] : memref<32x32xbf16, #tpu.memory_space<vmem>>, vector<32x32xbf16>
    %cst_26 = arith.constant dense<0.000000e+00> : vector<64x32xf32>
    %41 = tpu.matmul %29, %40, %cst_26 {dimension_numbers = #tpu.dot_dimension_numbers<[1], [0], [0], [1], [0, 0, 1, 1], [], []>} : vector<64x32xbf16>, vector<32x32xbf16>, vector<64x32xf32> -> vector<64x32xf32>
    %c0_27 = arith.constant 0 : index
    %c0_28 = arith.constant 0 : index
    %42 = vector.load %arg12[%c0_27, %c0_28] : memref<1x32xf32, #tpu.memory_space<vmem>>, vector<1x32xf32>
    %43 = vector.broadcast %42 : vector<1x32xf32> to vector<64x32xf32>
    %44 = arith.addf %41, %43 : vector<64x32xf32>
    %c0_29 = arith.constant 0 : index
    %c0_30 = arith.constant 0 : index
    %45 = vector.load %arg3[%c0_29, %c0_30] : memref<64x64xf32, #tpu.memory_space<vmem>>, vector<64x64xf32>
    %c0_31 = arith.constant 0 : index
    %c0_32 = arith.constant 0 : index
    %46 = vector.load %arg4[%c0_31, %c0_32] : memref<4x32xf32, #tpu.memory_space<vmem>>, vector<4x32xf32>
    %47 = arith.truncf %39 : vector<64x32xf32> to vector<64x32xbf16>
    %cst_33 = arith.constant 0.353553385 : f32
    %48 = vector.broadcast %cst_33 : f32 to vector<64x32xf32>
    %49 = arith.mulf %34, %48 : vector<64x32xf32>
    %cst_34 = arith.constant 0.000000e+00 : f32
    %50 = vector.broadcast %cst_34 : f32 to vector<64x32xf32>
    %51 = vector.extract_strided_slice %46 {offsets = [0, 0], sizes = [1, 32], strides = [1, 1]} : vector<4x32xf32> to vector<1x32xf32>
    %52 = vector.broadcast %51 : vector<1x32xf32> to vector<64x32xf32>
    %53 = arith.mulf %49, %52 : vector<64x32xf32>
    %54 = arith.truncf %53 : vector<64x32xf32> to vector<64x32xbf16>
    %cst_35 = arith.constant dense<0.000000e+00> : vector<64x64xf32>
    %55 = tpu.matmul %54, %47, %cst_35 {dimension_numbers = #tpu.dot_dimension_numbers<[1], [1], [0], [0], [0, 0, 1, 0], [], []>} : vector<64x32xbf16>, vector<64x32xbf16>, vector<64x64xf32> -> vector<64x64xf32>
    %56 = arith.addf %55, %45 : vector<64x64xf32>
    %cst_36 = arith.constant dense<0xFF800000> : vector<64xf32>
    %57 = vector.multi_reduction <maximumf>, %56, %cst_36 [1] : vector<64x64xf32> to vector<64xf32>
    %58 = vector.shape_cast %57 : vector<64xf32> to vector<64x1xf32>
    %59 = vector.broadcast %58 : vector<64x1xf32> to vector<64x64xf32>
    %60 = arith.subf %56, %59 : vector<64x64xf32>
    %61 = math.exp %60 : vector<64x64xf32>
    %cst_37 = arith.constant dense<0.000000e+00> : vector<64xf32>
    %62 = vector.multi_reduction <add>, %61, %cst_37 [1] : vector<64x64xf32> to vector<64xf32>
    %63 = vector.shape_cast %62 : vector<64xf32> to vector<64x1xf32>
    %64 = vector.broadcast %63 : vector<64x1xf32> to vector<64x64xf32>
    %65 = arith.divf %61, %64 : vector<64x64xf32>
    %66 = vector.broadcast %51 : vector<1x32xf32> to vector<64x32xf32>
    %67 = arith.mulf %44, %66 : vector<64x32xf32>
    %68 = arith.truncf %67 : vector<64x32xf32> to vector<64x32xbf16>
    %69 = arith.truncf %65 : vector<64x64xf32> to vector<64x64xbf16>
    %cst_38 = arith.constant dense<0.000000e+00> : vector<64x32xf32>
    %70 = tpu.matmul %69, %68, %cst_38 {dimension_numbers = #tpu.dot_dimension_numbers<[1], [0], [0], [1], [0, 0, 1, 1], [], []>} : vector<64x64xbf16>, vector<64x32xbf16>, vector<64x32xf32> -> vector<64x32xf32>
    %71 = arith.addf %50, %70 : vector<64x32xf32>
    %72 = vector.extract_strided_slice %46 {offsets = [1, 0], sizes = [1, 32], strides = [1, 1]} : vector<4x32xf32> to vector<1x32xf32>
    %73 = vector.broadcast %72 : vector<1x32xf32> to vector<64x32xf32>
    %74 = arith.mulf %49, %73 : vector<64x32xf32>
    %75 = arith.truncf %74 : vector<64x32xf32> to vector<64x32xbf16>
    %cst_39 = arith.constant dense<0.000000e+00> : vector<64x64xf32>
    %76 = tpu.matmul %75, %47, %cst_39 {dimension_numbers = #tpu.dot_dimension_numbers<[1], [1], [0], [0], [0, 0, 1, 0], [], []>} : vector<64x32xbf16>, vector<64x32xbf16>, vector<64x64xf32> -> vector<64x64xf32>
    %77 = arith.addf %76, %45 : vector<64x64xf32>
    %cst_40 = arith.constant dense<0xFF800000> : vector<64xf32>
    %78 = vector.multi_reduction <maximumf>, %77, %cst_40 [1] : vector<64x64xf32> to vector<64xf32>
    %79 = vector.shape_cast %78 : vector<64xf32> to vector<64x1xf32>
    %80 = vector.broadcast %79 : vector<64x1xf32> to vector<64x64xf32>
    %81 = arith.subf %77, %80 : vector<64x64xf32>
    %82 = math.exp %81 : vector<64x64xf32>
    %cst_41 = arith.constant dense<0.000000e+00> : vector<64xf32>
    %83 = vector.multi_reduction <add>, %82, %cst_41 [1] : vector<64x64xf32> to vector<64xf32>
    %84 = vector.shape_cast %83 : vector<64xf32> to vector<64x1xf32>
    %85 = vector.broadcast %84 : vector<64x1xf32> to vector<64x64xf32>
    %86 = arith.divf %82, %85 : vector<64x64xf32>
    %87 = vector.broadcast %72 : vector<1x32xf32> to vector<64x32xf32>
    %88 = arith.mulf %44, %87 : vector<64x32xf32>
    %89 = arith.truncf %88 : vector<64x32xf32> to vector<64x32xbf16>
    %90 = arith.truncf %86 : vector<64x64xf32> to vector<64x64xbf16>
    %cst_42 = arith.constant dense<0.000000e+00> : vector<64x32xf32>
    %91 = tpu.matmul %90, %89, %cst_42 {dimension_numbers = #tpu.dot_dimension_numbers<[1], [0], [0], [1], [0, 0, 1, 1], [], []>} : vector<64x64xbf16>, vector<64x32xbf16>, vector<64x32xf32> -> vector<64x32xf32>
    %92 = arith.addf %71, %91 : vector<64x32xf32>
    %93 = vector.extract_strided_slice %46 {offsets = [2, 0], sizes = [1, 32], strides = [1, 1]} : vector<4x32xf32> to vector<1x32xf32>
    %94 = vector.broadcast %93 : vector<1x32xf32> to vector<64x32xf32>
    %95 = arith.mulf %49, %94 : vector<64x32xf32>
    %96 = arith.truncf %95 : vector<64x32xf32> to vector<64x32xbf16>
    %cst_43 = arith.constant dense<0.000000e+00> : vector<64x64xf32>
    %97 = tpu.matmul %96, %47, %cst_43 {dimension_numbers = #tpu.dot_dimension_numbers<[1], [1], [0], [0], [0, 0, 1, 0], [], []>} : vector<64x32xbf16>, vector<64x32xbf16>, vector<64x64xf32> -> vector<64x64xf32>
    %98 = arith.addf %97, %45 : vector<64x64xf32>
    %cst_44 = arith.constant dense<0xFF800000> : vector<64xf32>
    %99 = vector.multi_reduction <maximumf>, %98, %cst_44 [1] : vector<64x64xf32> to vector<64xf32>
    %100 = vector.shape_cast %99 : vector<64xf32> to vector<64x1xf32>
    %101 = vector.broadcast %100 : vector<64x1xf32> to vector<64x64xf32>
    %102 = arith.subf %98, %101 : vector<64x64xf32>
    %103 = math.exp %102 : vector<64x64xf32>
    %cst_45 = arith.constant dense<0.000000e+00> : vector<64xf32>
    %104 = vector.multi_reduction <add>, %103, %cst_45 [1] : vector<64x64xf32> to vector<64xf32>
    %105 = vector.shape_cast %104 : vector<64xf32> to vector<64x1xf32>
    %106 = vector.broadcast %105 : vector<64x1xf32> to vector<64x64xf32>
    %107 = arith.divf %103, %106 : vector<64x64xf32>
    %108 = vector.broadcast %93 : vector<1x32xf32> to vector<64x32xf32>
    %109 = arith.mulf %44, %108 : vector<64x32xf32>
    %110 = arith.truncf %109 : vector<64x32xf32> to vector<64x32xbf16>
    %111 = arith.truncf %107 : vector<64x64xf32> to vector<64x64xbf16>
    %cst_46 = arith.constant dense<0.000000e+00> : vector<64x32xf32>
    %112 = tpu.matmul %111, %110, %cst_46 {dimension_numbers = #tpu.dot_dimension_numbers<[1], [0], [0], [1], [0, 0, 1, 1], [], []>} : vector<64x64xbf16>, vector<64x32xbf16>, vector<64x32xf32> -> vector<64x32xf32>
    %113 = arith.addf %92, %112 : vector<64x32xf32>
    %114 = vector.extract_strided_slice %46 {offsets = [3, 0], sizes = [1, 32], strides = [1, 1]} : vector<4x32xf32> to vector<1x32xf32>
    %115 = vector.broadcast %114 : vector<1x32xf32> to vector<64x32xf32>
    %116 = arith.mulf %49, %115 : vector<64x32xf32>
    %117 = arith.truncf %116 : vector<64x32xf32> to vector<64x32xbf16>
    %cst_47 = arith.constant dense<0.000000e+00> : vector<64x64xf32>
    %118 = tpu.matmul %117, %47, %cst_47 {dimension_numbers = #tpu.dot_dimension_numbers<[1], [1], [0], [0], [0, 0, 1, 0], [], []>} : vector<64x32xbf16>, vector<64x32xbf16>, vector<64x64xf32> -> vector<64x64xf32>
    %119 = arith.addf %118, %45 : vector<64x64xf32>
    %cst_48 = arith.constant dense<0xFF800000> : vector<64xf32>
    %120 = vector.multi_reduction <maximumf>, %119, %cst_48 [1] : vector<64x64xf32> to vector<64xf32>
    %121 = vector.shape_cast %120 : vector<64xf32> to vector<64x1xf32>
    %122 = vector.broadcast %121 : vector<64x1xf32> to vector<64x64xf32>
    %123 = arith.subf %119, %122 : vector<64x64xf32>
    %124 = math.exp %123 : vector<64x64xf32>
    %cst_49 = arith.constant dense<0.000000e+00> : vector<64xf32>
    %125 = vector.multi_reduction <add>, %124, %cst_49 [1] : vector<64x64xf32> to vector<64xf32>
    %126 = vector.shape_cast %125 : vector<64xf32> to vector<64x1xf32>
    %127 = vector.broadcast %126 : vector<64x1xf32> to vector<64x64xf32>
    %128 = arith.divf %124, %127 : vector<64x64xf32>
    %129 = vector.broadcast %114 : vector<1x32xf32> to vector<64x32xf32>
    %130 = arith.mulf %44, %129 : vector<64x32xf32>
    %131 = arith.truncf %130 : vector<64x32xf32> to vector<64x32xbf16>
    %132 = arith.truncf %128 : vector<64x64xf32> to vector<64x64xbf16>
    %cst_50 = arith.constant dense<0.000000e+00> : vector<64x32xf32>
    %133 = tpu.matmul %132, %131, %cst_50 {dimension_numbers = #tpu.dot_dimension_numbers<[1], [0], [0], [1], [0, 0, 1, 1], [], []>} : vector<64x64xbf16>, vector<64x32xbf16>, vector<64x32xf32> -> vector<64x32xf32>
    %134 = arith.addf %113, %133 : vector<64x32xf32>
    %135 = arith.truncf %134 : vector<64x32xf32> to vector<64x32xbf16>
    %c0_51 = arith.constant 0 : index
    %c0_52 = arith.constant 0 : index
    %136 = vector.load %arg13[%c0_51, %c0_52] : memref<32x32xbf16, #tpu.memory_space<vmem>>, vector<32x32xbf16>
    %cst_53 = arith.constant dense<0.000000e+00> : vector<64x32xf32>
    %137 = tpu.matmul %135, %136, %cst_53 {dimension_numbers = #tpu.dot_dimension_numbers<[1], [0], [0], [1], [0, 0, 1, 1], [], []>} : vector<64x32xbf16>, vector<32x32xbf16>, vector<64x32xf32> -> vector<64x32xf32>
    %138 = arith.addf %6, %137 : vector<64x32xf32>
    %c0_54 = arith.constant 0 : index
    %c0_55 = arith.constant 0 : index
    %139 = vector.load %arg14[%c0_54, %c0_55] : memref<1x32xf32, #tpu.memory_space<vmem>>, vector<1x32xf32>
    %140 = vector.broadcast %139 : vector<1x32xf32> to vector<64x32xf32>
    %141 = arith.addf %138, %140 : vector<64x32xf32>
    %c0_56 = arith.constant 0 : index
    %c0_57 = arith.constant 0 : index
    %142 = vector.load %arg15[%c0_56, %c0_57] : memref<1x32xf32, #tpu.memory_space<vmem>>, vector<1x32xf32>
    %c0_58 = arith.constant 0 : index
    %c0_59 = arith.constant 0 : index
    %143 = vector.load %arg16[%c0_58, %c0_59] : memref<1x32xf32, #tpu.memory_space<vmem>>, vector<1x32xf32>
    %cst_60 = arith.constant dense<0.000000e+00> : vector<64xf32>
    %144 = vector.multi_reduction <add>, %141, %cst_60 [1] : vector<64x32xf32> to vector<64xf32>
    %145 = vector.shape_cast %144 : vector<64xf32> to vector<64x1xf32>
    %cst_61 = arith.constant 3.200000e+01 : f32
    %146 = vector.broadcast %cst_61 : f32 to vector<64x1xf32>
    %147 = arith.divf %145, %146 : vector<64x1xf32>
    %148 = vector.broadcast %147 : vector<64x1xf32> to vector<64x32xf32>
    %149 = arith.subf %141, %148 : vector<64x32xf32>
    %150 = arith.mulf %149, %149 : vector<64x32xf32>
    %cst_62 = arith.constant dense<0.000000e+00> : vector<64xf32>
    %151 = vector.multi_reduction <add>, %150, %cst_62 [1] : vector<64x32xf32> to vector<64xf32>
    %152 = vector.shape_cast %151 : vector<64xf32> to vector<64x1xf32>
    %cst_63 = arith.constant 3.200000e+01 : f32
    %153 = vector.broadcast %cst_63 : f32 to vector<64x1xf32>
    %154 = arith.divf %152, %153 : vector<64x1xf32>
    %cst_64 = arith.constant 9.99999974E-6 : f32
    %155 = vector.broadcast %cst_64 : f32 to vector<64x1xf32>
    %156 = arith.addf %154, %155 : vector<64x1xf32>
    %157 = math.rsqrt %156 : vector<64x1xf32>
    %158 = vector.broadcast %157 : vector<64x1xf32> to vector<64x32xf32>
    %159 = arith.mulf %149, %158 : vector<64x32xf32>
    %160 = vector.broadcast %142 : vector<1x32xf32> to vector<64x32xf32>
    %161 = arith.mulf %159, %160 : vector<64x32xf32>
    %162 = vector.broadcast %143 : vector<1x32xf32> to vector<64x32xf32>
    %163 = arith.addf %161, %162 : vector<64x32xf32>
    %164 = arith.truncf %163 : vector<64x32xf32> to vector<64x32xbf16>
    %c0_65 = arith.constant 0 : index
    %c0_66 = arith.constant 0 : index
    %165 = vector.load %arg17[%c0_65, %c0_66] : memref<32x64xbf16, #tpu.memory_space<vmem>>, vector<32x64xbf16>
    %cst_67 = arith.constant dense<0.000000e+00> : vector<64x64xf32>
    %166 = tpu.matmul %164, %165, %cst_67 {dimension_numbers = #tpu.dot_dimension_numbers<[1], [0], [0], [1], [0, 0, 1, 1], [], []>} : vector<64x32xbf16>, vector<32x64xbf16>, vector<64x64xf32> -> vector<64x64xf32>
    %c0_68 = arith.constant 0 : index
    %c0_69 = arith.constant 0 : index
    %167 = vector.load %arg18[%c0_68, %c0_69] : memref<1x64xf32, #tpu.memory_space<vmem>>, vector<1x64xf32>
    %168 = vector.broadcast %167 : vector<1x64xf32> to vector<64x64xf32>
    %169 = arith.addf %166, %168 : vector<64x64xf32>
    %cst_70 = arith.constant 5.000000e-01 : f32
    %170 = vector.broadcast %cst_70 : f32 to vector<64x64xf32>
    %171 = arith.mulf %170, %169 : vector<64x64xf32>
    %cst_71 = arith.constant 0.707106769 : f32
    %172 = vector.broadcast %cst_71 : f32 to vector<64x64xf32>
    %173 = arith.mulf %169, %172 : vector<64x64xf32>
    %cst_72 = arith.constant 0.000000e+00 : f32
    %174 = vector.broadcast %cst_72 : f32 to vector<64x64xf32>
    %175 = arith.cmpf oge, %173, %174 : vector<64x64xf32>
    %cst_73 = arith.constant 1.000000e+00 : f32
    %cst_74 = arith.constant -1.000000e+00 : f32
    %176 = vector.broadcast %cst_73 : f32 to vector<64x64xf32>
    %177 = vector.broadcast %cst_74 : f32 to vector<64x64xf32>
    %178 = arith.select %175, %176, %177 : vector<64x64xi1>, vector<64x64xf32>
    %179 = math.absf %173 : vector<64x64xf32>
    %cst_75 = arith.constant 0.327591091 : f32
    %180 = vector.broadcast %cst_75 : f32 to vector<64x64xf32>
    %181 = arith.mulf %180, %179 : vector<64x64xf32>
    %cst_76 = arith.constant 1.000000e+00 : f32
    %182 = vector.broadcast %cst_76 : f32 to vector<64x64xf32>
    %183 = arith.addf %182, %181 : vector<64x64xf32>
    %cst_77 = arith.constant 1.000000e+00 : f32
    %184 = vector.broadcast %cst_77 : f32 to vector<64x64xf32>
    %185 = arith.divf %184, %183 : vector<64x64xf32>
    %cst_78 = arith.constant 1.06140542 : f32
    %186 = vector.broadcast %cst_78 : f32 to vector<64x64xf32>
    %187 = arith.mulf %186, %185 : vector<64x64xf32>
    %cst_79 = arith.constant -1.45315206 : f32
    %188 = vector.broadcast %cst_79 : f32 to vector<64x64xf32>
    %189 = arith.addf %187, %188 : vector<64x64xf32>
    %190 = arith.mulf %189, %185 : vector<64x64xf32>
    %cst_80 = arith.constant 1.42141378 : f32
    %191 = vector.broadcast %cst_80 : f32 to vector<64x64xf32>
    %192 = arith.addf %190, %191 : vector<64x64xf32>
    %193 = arith.mulf %192, %185 : vector<64x64xf32>
    %cst_81 = arith.constant -0.284496725 : f32
    %194 = vector.broadcast %cst_81 : f32 to vector<64x64xf32>
    %195 = arith.addf %193, %194 : vector<64x64xf32>
    %196 = arith.mulf %195, %185 : vector<64x64xf32>
    %cst_82 = arith.constant 0.254829586 : f32
    %197 = vector.broadcast %cst_82 : f32 to vector<64x64xf32>
    %198 = arith.addf %196, %197 : vector<64x64xf32>
    %199 = arith.mulf %198, %185 : vector<64x64xf32>
    %cst_83 = arith.constant 0.000000e+00 : f32
    %200 = vector.broadcast %cst_83 : f32 to vector<64x64xf32>
    %201 = arith.subf %200, %179 : vector<64x64xf32>
    %202 = arith.mulf %201, %179 : vector<64x64xf32>
    %203 = math.exp %202 : vector<64x64xf32>
    %204 = arith.mulf %199, %203 : vector<64x64xf32>
    %cst_84 = arith.constant 1.000000e+00 : f32
    %205 = vector.broadcast %cst_84 : f32 to vector<64x64xf32>
    %206 = arith.subf %205, %204 : vector<64x64xf32>
    %207 = arith.mulf %178, %206 : vector<64x64xf32>
    %cst_85 = arith.constant 1.000000e+00 : f32
    %208 = vector.broadcast %cst_85 : f32 to vector<64x64xf32>
    %209 = arith.addf %208, %207 : vector<64x64xf32>
    %210 = arith.mulf %171, %209 : vector<64x64xf32>
    %211 = arith.truncf %210 : vector<64x64xf32> to vector<64x64xbf16>
    %c0_86 = arith.constant 0 : index
    %c0_87 = arith.constant 0 : index
    %212 = vector.load %arg19[%c0_86, %c0_87] : memref<64x32xbf16, #tpu.memory_space<vmem>>, vector<64x32xbf16>
    %cst_88 = arith.constant dense<0.000000e+00> : vector<64x32xf32>
    %213 = tpu.matmul %211, %212, %cst_88 {dimension_numbers = #tpu.dot_dimension_numbers<[1], [0], [0], [1], [0, 0, 1, 1], [], []>} : vector<64x64xbf16>, vector<64x32xbf16>, vector<64x32xf32> -> vector<64x32xf32>
    %214 = arith.addf %141, %213 : vector<64x32xf32>
    %c0_89 = arith.constant 0 : index
    %c0_90 = arith.constant 0 : index
    %215 = vector.load %arg20[%c0_89, %c0_90] : memref<1x32xf32, #tpu.memory_space<vmem>>, vector<1x32xf32>
    %216 = vector.broadcast %215 : vector<1x32xf32> to vector<64x32xf32>
    %217 = arith.addf %214, %216 : vector<64x32xf32>
    %c0_91 = arith.constant 0 : index
    %c0_92 = arith.constant 0 : index
    %218 = vector.load %arg21[%c0_91, %c0_92] : memref<1x32xf32, #tpu.memory_space<vmem>>, vector<1x32xf32>
    %c0_93 = arith.constant 0 : index
    %c0_94 = arith.constant 0 : index
    %219 = vector.load %arg22[%c0_93, %c0_94] : memref<1x32xf32, #tpu.memory_space<vmem>>, vector<1x32xf32>
    %cst_95 = arith.constant dense<0.000000e+00> : vector<64xf32>
    %220 = vector.multi_reduction <add>, %217, %cst_95 [1] : vector<64x32xf32> to vector<64xf32>
    %221 = vector.shape_cast %220 : vector<64xf32> to vector<64x1xf32>
    %cst_96 = arith.constant 3.200000e+01 : f32
    %222 = vector.broadcast %cst_96 : f32 to vector<64x1xf32>
    %223 = arith.divf %221, %222 : vector<64x1xf32>
    %224 = vector.broadcast %223 : vector<64x1xf32> to vector<64x32xf32>
    %225 = arith.subf %217, %224 : vector<64x32xf32>
    %226 = arith.mulf %225, %225 : vector<64x32xf32>
    %cst_97 = arith.constant dense<0.000000e+00> : vector<64xf32>
    %227 = vector.multi_reduction <add>, %226, %cst_97 [1] : vector<64x32xf32> to vector<64xf32>
    %228 = vector.shape_cast %227 : vector<64xf32> to vector<64x1xf32>
    %cst_98 = arith.constant 3.200000e+01 : f32
    %229 = vector.broadcast %cst_98 : f32 to vector<64x1xf32>
    %230 = arith.divf %228, %229 : vector<64x1xf32>
    %cst_99 = arith.constant 9.99999974E-6 : f32
    %231 = vector.broadcast %cst_99 : f32 to vector<64x1xf32>
    %232 = arith.addf %230, %231 : vector<64x1xf32>
    %233 = math.rsqrt %232 : vector<64x1xf32>
    %234 = vector.broadcast %233 : vector<64x1xf32> to vector<64x32xf32>
    %235 = arith.mulf %225, %234 : vector<64x32xf32>
    %236 = vector.broadcast %218 : vector<1x32xf32> to vector<64x32xf32>
    %237 = arith.mulf %235, %236 : vector<64x32xf32>
    %238 = vector.broadcast %219 : vector<1x32xf32> to vector<64x32xf32>
    %239 = arith.addf %237, %238 : vector<64x32xf32>
    %c0_100 = arith.constant 0 : index
    %c0_101 = arith.constant 0 : index
    %240 = vector.load %arg23[%c0_100, %c0_101] : memref<64x32xf32, #tpu.memory_space<vmem>>, vector<64x32xf32>
    tpu.vector_store %arg23[%c0_100, %c0_101], %239 {strides = array<i32>} : memref<64x32xf32, #tpu.memory_space<vmem>>, vector<64x32xf32>,
    return
  }
}

module attributes {stable_mosaic.version = 11 : i64} {
  func.func @_type_tail_kernel(%arg0: memref<4x128xf32, #tpu.memory_space<vmem>>, %arg1: memref<48x32xf32, #tpu.memory_space<vmem>>, %arg2: memref<12x4xf32, #tpu.memory_space<vmem>>, %arg3: memref<12x48xf32, #tpu.memory_space<vmem>>, %arg4: memref<128x256xbf16, #tpu.memory_space<vmem>>, %arg5: memref<1x256xf32, #tpu.memory_space<vmem>>, %arg6: memref<256x32xbf16, #tpu.memory_space<vmem>>, %arg7: memref<1x32xf32, #tpu.memory_space<vmem>>, %arg8: memref<4x32xf32, #tpu.memory_space<vmem>>, %arg9: memref<12x32xf32, #tpu.memory_space<vmem>>) attributes {dimension_semantics = [], scalar_prefetch = 0 : i64, scratch_operands = 0 : i64, tpu.core_type = #tpu.core_type<tc>} {
    %c0 = arith.constant 0 : index
    %c0_0 = arith.constant 0 : index
    %0 = vector.load %arg0[%c0, %c0_0] : memref<4x128xf32, #tpu.memory_space<vmem>>, vector<4x128xf32>
    %1 = arith.truncf %0 : vector<4x128xf32> to vector<4x128xbf16>
    %c0_1 = arith.constant 0 : index
    %c0_2 = arith.constant 0 : index
    %2 = vector.load %arg4[%c0_1, %c0_2] : memref<128x256xbf16, #tpu.memory_space<vmem>>, vector<128x256xbf16>
    %cst = arith.constant dense<0.000000e+00> : vector<4x256xf32>
    %3 = tpu.matmul %1, %2, %cst {dimension_numbers = #tpu.dot_dimension_numbers<[1], [0], [0], [1], [0, 0, 1, 1], [], []>} : vector<4x128xbf16>, vector<128x256xbf16>, vector<4x256xf32> -> vector<4x256xf32>
    %c0_3 = arith.constant 0 : index
    %c0_4 = arith.constant 0 : index
    %4 = vector.load %arg5[%c0_3, %c0_4] : memref<1x256xf32, #tpu.memory_space<vmem>>, vector<1x256xf32>
    %5 = vector.broadcast %4 : vector<1x256xf32> to vector<4x256xf32>
    %6 = arith.addf %3, %5 : vector<4x256xf32>
    %cst_5 = arith.constant 0.000000e+00 : f32
    %7 = vector.broadcast %cst_5 : f32 to vector<4x256xf32>
    %8 = arith.maximumf %6, %7 : vector<4x256xf32>
    %9 = arith.truncf %8 : vector<4x256xf32> to vector<4x256xbf16>
    %c0_6 = arith.constant 0 : index
    %c0_7 = arith.constant 0 : index
    %10 = vector.load %arg6[%c0_6, %c0_7] : memref<256x32xbf16, #tpu.memory_space<vmem>>, vector<256x32xbf16>
    %cst_8 = arith.constant dense<0.000000e+00> : vector<4x32xf32>
    %11 = tpu.matmul %9, %10, %cst_8 {dimension_numbers = #tpu.dot_dimension_numbers<[1], [0], [0], [1], [0, 0, 1, 1], [], []>} : vector<4x256xbf16>, vector<256x32xbf16>, vector<4x32xf32> -> vector<4x32xf32>
    %c0_9 = arith.constant 0 : index
    %c0_10 = arith.constant 0 : index
    %12 = vector.load %arg7[%c0_9, %c0_10] : memref<1x32xf32, #tpu.memory_space<vmem>>, vector<1x32xf32>
    %13 = vector.broadcast %12 : vector<1x32xf32> to vector<4x32xf32>
    %14 = arith.addf %11, %13 : vector<4x32xf32>
    %c0_11 = arith.constant 0 : index
    %c0_12 = arith.constant 0 : index
    %15 = vector.load %arg8[%c0_11, %c0_12] : memref<4x32xf32, #tpu.memory_space<vmem>>, vector<4x32xf32>
    tpu.vector_store %arg8[%c0_11, %c0_12], %14 {strides = array<i32>} : memref<4x32xf32, #tpu.memory_space<vmem>>, vector<4x32xf32>,
    %c0_13 = arith.constant 0 : index
    %c0_14 = arith.constant 0 : index
    %16 = vector.load %arg1[%c0_13, %c0_14] : memref<48x32xf32, #tpu.memory_space<vmem>>, vector<48x32xf32>
    %17 = arith.truncf %16 : vector<48x32xf32> to vector<48x32xbf16>
    %c0_15 = arith.constant 0 : index
    %c0_16 = arith.constant 0 : index
    %18 = vector.load %arg2[%c0_15, %c0_16] : memref<12x4xf32, #tpu.memory_space<vmem>>, vector<12x4xf32>
    %cst_17 = arith.constant dense<0.000000e+00> : vector<12x32xf32>
    %19 = tpu.matmul %18, %14, %cst_17 {dimension_numbers = #tpu.dot_dimension_numbers<[1], [0], [0], [1], [0, 0, 1, 1], [], []>} : vector<12x4xf32>, vector<4x32xf32>, vector<12x32xf32> -> vector<12x32xf32>
    %20 = arith.truncf %19 : vector<12x32xf32> to vector<12x32xbf16>
    %cst_18 = arith.constant dense<0.000000e+00> : vector<12x48xf32>
    %21 = tpu.matmul %20, %17, %cst_18 {dimension_numbers = #tpu.dot_dimension_numbers<[1], [1], [0], [0], [0, 0, 1, 0], [], []>} : vector<12x32xbf16>, vector<48x32xbf16>, vector<12x48xf32> -> vector<12x48xf32>
    %c0_19 = arith.constant 0 : index
    %c0_20 = arith.constant 0 : index
    %22 = vector.load %arg3[%c0_19, %c0_20] : memref<12x48xf32, #tpu.memory_space<vmem>>, vector<12x48xf32>
    %23 = arith.mulf %21, %22 : vector<12x48xf32>
    %24 = arith.truncf %23 : vector<12x48xf32> to vector<12x48xbf16>
    %cst_21 = arith.constant dense<0.000000e+00> : vector<12x32xf32>
    %25 = tpu.matmul %24, %17, %cst_21 {dimension_numbers = #tpu.dot_dimension_numbers<[1], [0], [0], [1], [0, 0, 1, 1], [], []>} : vector<12x48xbf16>, vector<48x32xbf16>, vector<12x32xf32> -> vector<12x32xf32>
    %c0_22 = arith.constant 0 : index
    %c0_23 = arith.constant 0 : index
    %26 = vector.load %arg9[%c0_22, %c0_23] : memref<12x32xf32, #tpu.memory_space<vmem>>, vector<12x32xf32>
    tpu.vector_store %arg9[%c0_22, %c0_23], %25 {strides = array<i32>} : memref<12x32xf32, #tpu.memory_space<vmem>>, vector<12x32xf32>,
    return
  }
}

module attributes {stable_mosaic.version = 11 : i64} {
  func.func @_hop_tail_kernel(%arg0: memref<16x32xf32, #tpu.memory_space<vmem>>, %arg1: memref<1x32xf32, #tpu.memory_space<vmem>>, %arg2: memref<1x32xf32, #tpu.memory_space<vmem>>, %arg3: memref<1x32xf32, #tpu.memory_space<vmem>>, %arg4: memref<1x32xf32, #tpu.memory_space<vmem>>, %arg5: memref<1x1xf32, #tpu.memory_space<vmem>>, %arg6: memref<4x32xf32, #tpu.memory_space<vmem>>) attributes {dimension_semantics = [], scalar_prefetch = 0 : i64, scratch_operands = 0 : i64, tpu.core_type = #tpu.core_type<tc>} {
    %c0 = arith.constant 0 : index
    %c0_0 = arith.constant 0 : index
    %0 = vector.load %arg0[%c0, %c0_0] : memref<16x32xf32, #tpu.memory_space<vmem>>, vector<16x32xf32>
    %c0_1 = arith.constant 0 : index
    %c0_2 = arith.constant 0 : index
    %1 = vector.load %arg1[%c0_1, %c0_2] : memref<1x32xf32, #tpu.memory_space<vmem>>, vector<1x32xf32>
    %c0_3 = arith.constant 0 : index
    %c0_4 = arith.constant 0 : index
    %2 = vector.load %arg2[%c0_3, %c0_4] : memref<1x32xf32, #tpu.memory_space<vmem>>, vector<1x32xf32>
    %cst = arith.constant dense<0.000000e+00> : vector<16xf32>
    %3 = vector.multi_reduction <add>, %0, %cst [1] : vector<16x32xf32> to vector<16xf32>
    %4 = vector.shape_cast %3 : vector<16xf32> to vector<16x1xf32>
    %cst_5 = arith.constant 3.200000e+01 : f32
    %5 = vector.broadcast %cst_5 : f32 to vector<16x1xf32>
    %6 = arith.divf %4, %5 : vector<16x1xf32>
    %7 = vector.broadcast %6 : vector<16x1xf32> to vector<16x32xf32>
    %8 = arith.subf %0, %7 : vector<16x32xf32>
    %9 = arith.mulf %8, %8 : vector<16x32xf32>
    %cst_6 = arith.constant dense<0.000000e+00> : vector<16xf32>
    %10 = vector.multi_reduction <add>, %9, %cst_6 [1] : vector<16x32xf32> to vector<16xf32>
    %11 = vector.shape_cast %10 : vector<16xf32> to vector<16x1xf32>
    %cst_7 = arith.constant 3.200000e+01 : f32
    %12 = vector.broadcast %cst_7 : f32 to vector<16x1xf32>
    %13 = arith.divf %11, %12 : vector<16x1xf32>
    %cst_8 = arith.constant 9.99999974E-6 : f32
    %14 = vector.broadcast %cst_8 : f32 to vector<16x1xf32>
    %15 = arith.addf %13, %14 : vector<16x1xf32>
    %16 = math.rsqrt %15 : vector<16x1xf32>
    %17 = vector.broadcast %16 : vector<16x1xf32> to vector<16x32xf32>
    %18 = arith.mulf %8, %17 : vector<16x32xf32>
    %19 = vector.broadcast %1 : vector<1x32xf32> to vector<16x32xf32>
    %20 = arith.mulf %18, %19 : vector<16x32xf32>
    %21 = vector.broadcast %2 : vector<1x32xf32> to vector<16x32xf32>
    %22 = arith.addf %20, %21 : vector<16x32xf32>
    %c0_9 = arith.constant 0 : index
    %c0_10 = arith.constant 0 : index
    %23 = vector.load %arg3[%c0_9, %c0_10] : memref<1x32xf32, #tpu.memory_space<vmem>>, vector<1x32xf32>
    %24 = vector.broadcast %23 : vector<1x32xf32> to vector<16x32xf32>
    %25 = arith.mulf %22, %24 : vector<16x32xf32>
    %cst_11 = arith.constant dense<0.000000e+00> : vector<16xf32>
    %26 = vector.multi_reduction <add>, %25, %cst_11 [1] : vector<16x32xf32> to vector<16xf32>
    %27 = vector.shape_cast %26 : vector<16xf32> to vector<16x1xf32>
    %c0_12 = arith.constant 0 : index
    %c0_13 = arith.constant 0 : index
    %28 = vector.load %arg4[%c0_12, %c0_13] : memref<1x32xf32, #tpu.memory_space<vmem>>, vector<1x32xf32>
    %29 = vector.broadcast %28 : vector<1x32xf32> to vector<16x32xf32>
    %30 = arith.mulf %22, %29 : vector<16x32xf32>
    %cst_14 = arith.constant dense<0.000000e+00> : vector<16xf32>
    %31 = vector.multi_reduction <add>, %30, %cst_14 [1] : vector<16x32xf32> to vector<16xf32>
    %32 = vector.shape_cast %31 : vector<16xf32> to vector<16x1xf32>
    %c0_15 = arith.constant 0 : index
    %c0_16 = arith.constant 0 : index
    %33 = vector.load %arg5[%c0_15, %c0_16] : memref<1x1xf32, #tpu.memory_space<vmem>>, vector<1x1xf32>
    %34 = vector.extract_strided_slice %22 {offsets = [0, 0], sizes = [1, 32], strides = [1, 1]} : vector<16x32xf32> to vector<1x32xf32>
    %35 = vector.extract_strided_slice %27 {offsets = [0, 0], sizes = [1, 1], strides = [1, 1]} : vector<16x1xf32> to vector<1x1xf32>
    %36 = vector.extract_strided_slice %22 {offsets = [1, 0], sizes = [1, 32], strides = [1, 1]} : vector<16x32xf32> to vector<1x32xf32>
    %37 = vector.extract_strided_slice %22 {offsets = [2, 0], sizes = [1, 32], strides = [1, 1]} : vector<16x32xf32> to vector<1x32xf32>
    %38 = vector.extract_strided_slice %22 {offsets = [3, 0], sizes = [1, 32], strides = [1, 1]} : vector<16x32xf32> to vector<1x32xf32>
    %39 = vector.extract_strided_slice %32 {offsets = [1, 0], sizes = [1, 1], strides = [1, 1]} : vector<16x1xf32> to vector<1x1xf32>
    %40 = arith.addf %39, %35 : vector<1x1xf32>
    %41 = arith.addf %40, %33 : vector<1x1xf32>
    %42 = vector.extract_strided_slice %32 {offsets = [2, 0], sizes = [1, 1], strides = [1, 1]} : vector<16x1xf32> to vector<1x1xf32>
    %43 = arith.addf %42, %35 : vector<1x1xf32>
    %44 = arith.addf %43, %33 : vector<1x1xf32>
    %45 = vector.extract_strided_slice %32 {offsets = [3, 0], sizes = [1, 1], strides = [1, 1]} : vector<16x1xf32> to vector<1x1xf32>
    %46 = arith.addf %45, %35 : vector<1x1xf32>
    %47 = arith.addf %46, %33 : vector<1x1xf32>
    %48 = arith.maximumf %41, %44 : vector<1x1xf32>
    %49 = arith.maximumf %48, %47 : vector<1x1xf32>
    %50 = arith.subf %41, %49 : vector<1x1xf32>
    %51 = math.exp %50 : vector<1x1xf32>
    %52 = arith.subf %44, %49 : vector<1x1xf32>
    %53 = math.exp %52 : vector<1x1xf32>
    %54 = arith.subf %47, %49 : vector<1x1xf32>
    %55 = math.exp %54 : vector<1x1xf32>
    %56 = arith.addf %51, %53 : vector<1x1xf32>
    %57 = arith.addf %56, %55 : vector<1x1xf32>
    %58 = vector.broadcast %51 : vector<1x1xf32> to vector<1x32xf32>
    %59 = arith.mulf %58, %36 : vector<1x32xf32>
    %60 = vector.broadcast %53 : vector<1x1xf32> to vector<1x32xf32>
    %61 = arith.mulf %60, %37 : vector<1x32xf32>
    %62 = arith.addf %59, %61 : vector<1x32xf32>
    %63 = vector.broadcast %55 : vector<1x1xf32> to vector<1x32xf32>
    %64 = arith.mulf %63, %38 : vector<1x32xf32>
    %65 = arith.addf %62, %64 : vector<1x32xf32>
    %66 = vector.broadcast %57 : vector<1x1xf32> to vector<1x32xf32>
    %67 = arith.divf %65, %66 : vector<1x32xf32>
    %68 = arith.addf %34, %67 : vector<1x32xf32>
    %c0_17 = arith.constant 0 : index
    %c0_18 = arith.constant 0 : index
    %69 = vector.load %arg6[%c0_17, %c0_18] : memref<4x32xf32, #tpu.memory_space<vmem>>, vector<1x32xf32>
    tpu.vector_store %arg6[%c0_17, %c0_18], %68 {strides = array<i32>} : memref<4x32xf32, #tpu.memory_space<vmem>>, vector<1x32xf32>,
    %70 = vector.extract_strided_slice %22 {offsets = [4, 0], sizes = [1, 32], strides = [1, 1]} : vector<16x32xf32> to vector<1x32xf32>
    %71 = vector.extract_strided_slice %27 {offsets = [4, 0], sizes = [1, 1], strides = [1, 1]} : vector<16x1xf32> to vector<1x1xf32>
    %72 = vector.extract_strided_slice %22 {offsets = [5, 0], sizes = [1, 32], strides = [1, 1]} : vector<16x32xf32> to vector<1x32xf32>
    %73 = vector.extract_strided_slice %22 {offsets = [6, 0], sizes = [1, 32], strides = [1, 1]} : vector<16x32xf32> to vector<1x32xf32>
    %74 = vector.extract_strided_slice %22 {offsets = [7, 0], sizes = [1, 32], strides = [1, 1]} : vector<16x32xf32> to vector<1x32xf32>
    %75 = vector.extract_strided_slice %32 {offsets = [5, 0], sizes = [1, 1], strides = [1, 1]} : vector<16x1xf32> to vector<1x1xf32>
    %76 = arith.addf %75, %71 : vector<1x1xf32>
    %77 = arith.addf %76, %33 : vector<1x1xf32>
    %78 = vector.extract_strided_slice %32 {offsets = [6, 0], sizes = [1, 1], strides = [1, 1]} : vector<16x1xf32> to vector<1x1xf32>
    %79 = arith.addf %78, %71 : vector<1x1xf32>
    %80 = arith.addf %79, %33 : vector<1x1xf32>
    %81 = vector.extract_strided_slice %32 {offsets = [7, 0], sizes = [1, 1], strides = [1, 1]} : vector<16x1xf32> to vector<1x1xf32>
    %82 = arith.addf %81, %71 : vector<1x1xf32>
    %83 = arith.addf %82, %33 : vector<1x1xf32>
    %84 = arith.maximumf %77, %80 : vector<1x1xf32>
    %85 = arith.maximumf %84, %83 : vector<1x1xf32>
    %86 = arith.subf %77, %85 : vector<1x1xf32>
    %87 = math.exp %86 : vector<1x1xf32>
    %88 = arith.subf %80, %85 : vector<1x1xf32>
    %89 = math.exp %88 : vector<1x1xf32>
    %90 = arith.subf %83, %85 : vector<1x1xf32>
    %91 = math.exp %90 : vector<1x1xf32>
    %92 = arith.addf %87, %89 : vector<1x1xf32>
    %93 = arith.addf %92, %91 : vector<1x1xf32>
    %94 = vector.broadcast %87 : vector<1x1xf32> to vector<1x32xf32>
    %95 = arith.mulf %94, %72 : vector<1x32xf32>
    %96 = vector.broadcast %89 : vector<1x1xf32> to vector<1x32xf32>
    %97 = arith.mulf %96, %73 : vector<1x32xf32>
    %98 = arith.addf %95, %97 : vector<1x32xf32>
    %99 = vector.broadcast %91 : vector<1x1xf32> to vector<1x32xf32>
    %100 = arith.mulf %99, %74 : vector<1x32xf32>
    %101 = arith.addf %98, %100 : vector<1x32xf32>
    %102 = vector.broadcast %93 : vector<1x1xf32> to vector<1x32xf32>
    %103 = arith.divf %101, %102 : vector<1x32xf32>
    %104 = arith.addf %70, %103 : vector<1x32xf32>
    %c1 = arith.constant 1 : index
    %c0_19 = arith.constant 0 : index
    %105 = vector.load %arg6[%c1, %c0_19] : memref<4x32xf32, #tpu.memory_space<vmem>>, vector<1x32xf32>
    tpu.vector_store %arg6[%c1, %c0_19], %104 {strides = array<i32>} : memref<4x32xf32, #tpu.memory_space<vmem>>, vector<1x32xf32>,
    %106 = vector.extract_strided_slice %22 {offsets = [8, 0], sizes = [1, 32], strides = [1, 1]} : vector<16x32xf32> to vector<1x32xf32>
    %107 = vector.extract_strided_slice %27 {offsets = [8, 0], sizes = [1, 1], strides = [1, 1]} : vector<16x1xf32> to vector<1x1xf32>
    %108 = vector.extract_strided_slice %22 {offsets = [9, 0], sizes = [1, 32], strides = [1, 1]} : vector<16x32xf32> to vector<1x32xf32>
    %109 = vector.extract_strided_slice %22 {offsets = [10, 0], sizes = [1, 32], strides = [1, 1]} : vector<16x32xf32> to vector<1x32xf32>
    %110 = vector.extract_strided_slice %22 {offsets = [11, 0], sizes = [1, 32], strides = [1, 1]} : vector<16x32xf32> to vector<1x32xf32>
    %111 = vector.extract_strided_slice %32 {offsets = [9, 0], sizes = [1, 1], strides = [1, 1]} : vector<16x1xf32> to vector<1x1xf32>
    %112 = arith.addf %111, %107 : vector<1x1xf32>
    %113 = arith.addf %112, %33 : vector<1x1xf32>
    %114 = vector.extract_strided_slice %32 {offsets = [10, 0], sizes = [1, 1], strides = [1, 1]} : vector<16x1xf32> to vector<1x1xf32>
    %115 = arith.addf %114, %107 : vector<1x1xf32>
    %116 = arith.addf %115, %33 : vector<1x1xf32>
    %117 = vector.extract_strided_slice %32 {offsets = [11, 0], sizes = [1, 1], strides = [1, 1]} : vector<16x1xf32> to vector<1x1xf32>
    %118 = arith.addf %117, %107 : vector<1x1xf32>
    %119 = arith.addf %118, %33 : vector<1x1xf32>
    %120 = arith.maximumf %113, %116 : vector<1x1xf32>
    %121 = arith.maximumf %120, %119 : vector<1x1xf32>
    %122 = arith.subf %113, %121 : vector<1x1xf32>
    %123 = math.exp %122 : vector<1x1xf32>
    %124 = arith.subf %116, %121 : vector<1x1xf32>
    %125 = math.exp %124 : vector<1x1xf32>
    %126 = arith.subf %119, %121 : vector<1x1xf32>
    %127 = math.exp %126 : vector<1x1xf32>
    %128 = arith.addf %123, %125 : vector<1x1xf32>
    %129 = arith.addf %128, %127 : vector<1x1xf32>
    %130 = vector.broadcast %123 : vector<1x1xf32> to vector<1x32xf32>
    %131 = arith.mulf %130, %108 : vector<1x32xf32>
    %132 = vector.broadcast %125 : vector<1x1xf32> to vector<1x32xf32>
    %133 = arith.mulf %132, %109 : vector<1x32xf32>
    %134 = arith.addf %131, %133 : vector<1x32xf32>
    %135 = vector.broadcast %127 : vector<1x1xf32> to vector<1x32xf32>
    %136 = arith.mulf %135, %110 : vector<1x32xf32>
    %137 = arith.addf %134, %136 : vector<1x32xf32>
    %138 = vector.broadcast %129 : vector<1x1xf32> to vector<1x32xf32>
    %139 = arith.divf %137, %138 : vector<1x32xf32>
    %140 = arith.addf %106, %139 : vector<1x32xf32>
    %c2 = arith.constant 2 : index
    %c0_20 = arith.constant 0 : index
    %141 = vector.load %arg6[%c2, %c0_20] : memref<4x32xf32, #tpu.memory_space<vmem>>, vector<1x32xf32>
    tpu.vector_store %arg6[%c2, %c0_20], %140 {strides = array<i32>} : memref<4x32xf32, #tpu.memory_space<vmem>>, vector<1x32xf32>,
    %142 = vector.extract_strided_slice %22 {offsets = [12, 0], sizes = [1, 32], strides = [1, 1]} : vector<16x32xf32> to vector<1x32xf32>
    %143 = vector.extract_strided_slice %27 {offsets = [12, 0], sizes = [1, 1], strides = [1, 1]} : vector<16x1xf32> to vector<1x1xf32>
    %144 = vector.extract_strided_slice %22 {offsets = [13, 0], sizes = [1, 32], strides = [1, 1]} : vector<16x32xf32> to vector<1x32xf32>
    %145 = vector.extract_strided_slice %22 {offsets = [14, 0], sizes = [1, 32], strides = [1, 1]} : vector<16x32xf32> to vector<1x32xf32>
    %146 = vector.extract_strided_slice %22 {offsets = [15, 0], sizes = [1, 32], strides = [1, 1]} : vector<16x32xf32> to vector<1x32xf32>
    %147 = vector.extract_strided_slice %32 {offsets = [13, 0], sizes = [1, 1], strides = [1, 1]} : vector<16x1xf32> to vector<1x1xf32>
    %148 = arith.addf %147, %143 : vector<1x1xf32>
    %149 = arith.addf %148, %33 : vector<1x1xf32>
    %150 = vector.extract_strided_slice %32 {offsets = [14, 0], sizes = [1, 1], strides = [1, 1]} : vector<16x1xf32> to vector<1x1xf32>
    %151 = arith.addf %150, %143 : vector<1x1xf32>
    %152 = arith.addf %151, %33 : vector<1x1xf32>
    %153 = vector.extract_strided_slice %32 {offsets = [15, 0], sizes = [1, 1], strides = [1, 1]} : vector<16x1xf32> to vector<1x1xf32>
    %154 = arith.addf %153, %143 : vector<1x1xf32>
    %155 = arith.addf %154, %33 : vector<1x1xf32>
    %156 = arith.maximumf %149, %152 : vector<1x1xf32>
    %157 = arith.maximumf %156, %155 : vector<1x1xf32>
    %158 = arith.subf %149, %157 : vector<1x1xf32>
    %159 = math.exp %158 : vector<1x1xf32>
    %160 = arith.subf %152, %157 : vector<1x1xf32>
    %161 = math.exp %160 : vector<1x1xf32>
    %162 = arith.subf %155, %157 : vector<1x1xf32>
    %163 = math.exp %162 : vector<1x1xf32>
    %164 = arith.addf %159, %161 : vector<1x1xf32>
    %165 = arith.addf %164, %163 : vector<1x1xf32>
    %166 = vector.broadcast %159 : vector<1x1xf32> to vector<1x32xf32>
    %167 = arith.mulf %166, %144 : vector<1x32xf32>
    %168 = vector.broadcast %161 : vector<1x1xf32> to vector<1x32xf32>
    %169 = arith.mulf %168, %145 : vector<1x32xf32>
    %170 = arith.addf %167, %169 : vector<1x32xf32>
    %171 = vector.broadcast %163 : vector<1x1xf32> to vector<1x32xf32>
    %172 = arith.mulf %171, %146 : vector<1x32xf32>
    %173 = arith.addf %170, %172 : vector<1x32xf32>
    %174 = vector.broadcast %165 : vector<1x1xf32> to vector<1x32xf32>
    %175 = arith.divf %173, %174 : vector<1x32xf32>
    %176 = arith.addf %142, %175 : vector<1x32xf32>
    %c3 = arith.constant 3 : index
    %c0_21 = arith.constant 0 : index
    %177 = vector.load %arg6[%c3, %c0_21] : memref<4x32xf32, #tpu.memory_space<vmem>>, vector<1x32xf32>
    tpu.vector_store %arg6[%c3, %c0_21], %176 {strides = array<i32>} : memref<4x32xf32, #tpu.memory_space<vmem>>, vector<1x32xf32>,
    return
  }
}

module attributes {stable_mosaic.version = 11 : i64} {
  func.func @_fused_layer_kernel(%arg0: memref<16x32xf32, #tpu.memory_space<vmem>>, %arg1: memref<1x1xbf16, #tpu.memory_space<vmem>>, %arg2: memref<1x1xf32, #tpu.memory_space<vmem>>, %arg3: memref<16x16xf32, #tpu.memory_space<vmem>>, %arg4: memref<4x32xf32, #tpu.memory_space<vmem>>, %arg5: memref<1x32xf32, #tpu.memory_space<vmem>>, %arg6: memref<1x32xf32, #tpu.memory_space<vmem>>, %arg7: memref<32x32xbf16, #tpu.memory_space<vmem>>, %arg8: memref<1x32xf32, #tpu.memory_space<vmem>>, %arg9: memref<32x32xbf16, #tpu.memory_space<vmem>>, %arg10: memref<1x32xf32, #tpu.memory_space<vmem>>, %arg11: memref<32x32xbf16, #tpu.memory_space<vmem>>, %arg12: memref<1x32xf32, #tpu.memory_space<vmem>>, %arg13: memref<32x32xbf16, #tpu.memory_space<vmem>>, %arg14: memref<1x32xf32, #tpu.memory_space<vmem>>, %arg15: memref<1x32xf32, #tpu.memory_space<vmem>>, %arg16: memref<1x32xf32, #tpu.memory_space<vmem>>, %arg17: memref<32x64xbf16, #tpu.memory_space<vmem>>, %arg18: memref<1x64xf32, #tpu.memory_space<vmem>>, %arg19: memref<64x32xbf16, #tpu.memory_space<vmem>>, %arg20: memref<1x32xf32, #tpu.memory_space<vmem>>, %arg21: memref<1x1xf32, #tpu.memory_space<vmem>>, %arg22: memref<1x1xf32, #tpu.memory_space<vmem>>, %arg23: memref<16x32xf32, #tpu.memory_space<vmem>>) attributes {dimension_semantics = [], scalar_prefetch = 0 : i64, scratch_operands = 0 : i64, tpu.core_type = #tpu.core_type<tc>} {
    %c0 = arith.constant 0 : index
    %c0_0 = arith.constant 0 : index
    %0 = vector.load %arg0[%c0, %c0_0] : memref<16x32xf32, #tpu.memory_space<vmem>>, vector<16x32xf32>
    %c0_1 = arith.constant 0 : index
    %c0_2 = arith.constant 0 : index
    %1 = vector.load %arg5[%c0_1, %c0_2] : memref<1x32xf32, #tpu.memory_space<vmem>>, vector<1x32xf32>
    %c0_3 = arith.constant 0 : index
    %c0_4 = arith.constant 0 : index
    %2 = vector.load %arg6[%c0_3, %c0_4] : memref<1x32xf32, #tpu.memory_space<vmem>>, vector<1x32xf32>
    %cst = arith.constant dense<0.000000e+00> : vector<16xf32>
    %3 = vector.multi_reduction <add>, %0, %cst [1] : vector<16x32xf32> to vector<16xf32>
    %4 = vector.shape_cast %3 : vector<16xf32> to vector<16x1xf32>
    %cst_5 = arith.constant 3.200000e+01 : f32
    %5 = vector.broadcast %cst_5 : f32 to vector<16x1xf32>
    %6 = arith.divf %4, %5 : vector<16x1xf32>
    %7 = vector.broadcast %6 : vector<16x1xf32> to vector<16x32xf32>
    %8 = arith.subf %0, %7 : vector<16x32xf32>
    %9 = arith.mulf %8, %8 : vector<16x32xf32>
    %cst_6 = arith.constant dense<0.000000e+00> : vector<16xf32>
    %10 = vector.multi_reduction <add>, %9, %cst_6 [1] : vector<16x32xf32> to vector<16xf32>
    %11 = vector.shape_cast %10 : vector<16xf32> to vector<16x1xf32>
    %cst_7 = arith.constant 3.200000e+01 : f32
    %12 = vector.broadcast %cst_7 : f32 to vector<16x1xf32>
    %13 = arith.divf %11, %12 : vector<16x1xf32>
    %cst_8 = arith.constant 9.99999974E-6 : f32
    %14 = vector.broadcast %cst_8 : f32 to vector<16x1xf32>
    %15 = arith.addf %13, %14 : vector<16x1xf32>
    %16 = math.rsqrt %15 : vector<16x1xf32>
    %17 = vector.broadcast %16 : vector<16x1xf32> to vector<16x32xf32>
    %18 = arith.mulf %8, %17 : vector<16x32xf32>
    %19 = vector.broadcast %1 : vector<1x32xf32> to vector<16x32xf32>
    %20 = arith.mulf %18, %19 : vector<16x32xf32>
    %21 = vector.broadcast %2 : vector<1x32xf32> to vector<16x32xf32>
    %22 = arith.addf %20, %21 : vector<16x32xf32>
    %23 = arith.truncf %22 : vector<16x32xf32> to vector<16x32xbf16>
    %c0_9 = arith.constant 0 : index
    %c0_10 = arith.constant 0 : index
    %24 = vector.load %arg7[%c0_9, %c0_10] : memref<32x32xbf16, #tpu.memory_space<vmem>>, vector<32x32xbf16>
    %cst_11 = arith.constant dense<0.000000e+00> : vector<16x32xf32>
    %25 = tpu.matmul %23, %24, %cst_11 {dimension_numbers = #tpu.dot_dimension_numbers<[1], [0], [0], [1], [0, 0, 1, 1], [], []>} : vector<16x32xbf16>, vector<32x32xbf16>, vector<16x32xf32> -> vector<16x32xf32>
    %c0_12 = arith.constant 0 : index
    %c0_13 = arith.constant 0 : index
    %26 = vector.load %arg8[%c0_12, %c0_13] : memref<1x32xf32, #tpu.memory_space<vmem>>, vector<1x32xf32>
    %27 = vector.broadcast %26 : vector<1x32xf32> to vector<16x32xf32>
    %28 = arith.addf %25, %27 : vector<16x32xf32>
    %c0_14 = arith.constant 0 : index
    %c0_15 = arith.constant 0 : index
    %29 = vector.load %arg9[%c0_14, %c0_15] : memref<32x32xbf16, #tpu.memory_space<vmem>>, vector<32x32xbf16>
    %cst_16 = arith.constant dense<0.000000e+00> : vector<16x32xf32>
    %30 = tpu.matmul %23, %29, %cst_16 {dimension_numbers = #tpu.dot_dimension_numbers<[1], [0], [0], [1], [0, 0, 1, 1], [], []>} : vector<16x32xbf16>, vector<32x32xbf16>, vector<16x32xf32> -> vector<16x32xf32>
    %c0_17 = arith.constant 0 : index
    %c0_18 = arith.constant 0 : index
    %31 = vector.load %arg10[%c0_17, %c0_18] : memref<1x32xf32, #tpu.memory_space<vmem>>, vector<1x32xf32>
    %32 = vector.broadcast %31 : vector<1x32xf32> to vector<16x32xf32>
    %33 = arith.addf %30, %32 : vector<16x32xf32>
    %c0_19 = arith.constant 0 : index
    %c0_20 = arith.constant 0 : index
    %34 = vector.load %arg11[%c0_19, %c0_20] : memref<32x32xbf16, #tpu.memory_space<vmem>>, vector<32x32xbf16>
    %cst_21 = arith.constant dense<0.000000e+00> : vector<16x32xf32>
    %35 = tpu.matmul %23, %34, %cst_21 {dimension_numbers = #tpu.dot_dimension_numbers<[1], [0], [0], [1], [0, 0, 1, 1], [], []>} : vector<16x32xbf16>, vector<32x32xbf16>, vector<16x32xf32> -> vector<16x32xf32>
    %c0_22 = arith.constant 0 : index
    %c0_23 = arith.constant 0 : index
    %36 = vector.load %arg12[%c0_22, %c0_23] : memref<1x32xf32, #tpu.memory_space<vmem>>, vector<1x32xf32>
    %37 = vector.broadcast %36 : vector<1x32xf32> to vector<16x32xf32>
    %38 = arith.addf %35, %37 : vector<16x32xf32>
    %c0_24 = arith.constant 0 : index
    %c0_25 = arith.constant 0 : index
    %39 = vector.load %arg3[%c0_24, %c0_25] : memref<16x16xf32, #tpu.memory_space<vmem>>, vector<16x16xf32>
    %c0_26 = arith.constant 0 : index
    %c0_27 = arith.constant 0 : index
    %40 = vector.load %arg4[%c0_26, %c0_27] : memref<4x32xf32, #tpu.memory_space<vmem>>, vector<4x32xf32>
    %41 = arith.truncf %33 : vector<16x32xf32> to vector<16x32xbf16>
    %cst_28 = arith.constant 0.353553385 : f32
    %42 = vector.broadcast %cst_28 : f32 to vector<16x32xf32>
    %43 = arith.mulf %28, %42 : vector<16x32xf32>
    %cst_29 = arith.constant 0.000000e+00 : f32
    %44 = vector.broadcast %cst_29 : f32 to vector<16x32xf32>
    %45 = vector.extract_strided_slice %40 {offsets = [0, 0], sizes = [1, 32], strides = [1, 1]} : vector<4x32xf32> to vector<1x32xf32>
    %46 = vector.broadcast %45 : vector<1x32xf32> to vector<16x32xf32>
    %47 = arith.mulf %43, %46 : vector<16x32xf32>
    %48 = arith.truncf %47 : vector<16x32xf32> to vector<16x32xbf16>
    %cst_30 = arith.constant dense<0.000000e+00> : vector<16x16xf32>
    %49 = tpu.matmul %48, %41, %cst_30 {dimension_numbers = #tpu.dot_dimension_numbers<[1], [1], [0], [0], [0, 0, 1, 0], [], []>} : vector<16x32xbf16>, vector<16x32xbf16>, vector<16x16xf32> -> vector<16x16xf32>
    %50 = arith.addf %49, %39 : vector<16x16xf32>
    %cst_31 = arith.constant dense<0xFF800000> : vector<16xf32>
    %51 = vector.multi_reduction <maximumf>, %50, %cst_31 [1] : vector<16x16xf32> to vector<16xf32>
    %52 = vector.shape_cast %51 : vector<16xf32> to vector<16x1xf32>
    %53 = vector.broadcast %52 : vector<16x1xf32> to vector<16x16xf32>
    %54 = arith.subf %50, %53 : vector<16x16xf32>
    %55 = math.exp %54 : vector<16x16xf32>
    %cst_32 = arith.constant dense<0.000000e+00> : vector<16xf32>
    %56 = vector.multi_reduction <add>, %55, %cst_32 [1] : vector<16x16xf32> to vector<16xf32>
    %57 = vector.shape_cast %56 : vector<16xf32> to vector<16x1xf32>
    %58 = vector.broadcast %57 : vector<16x1xf32> to vector<16x16xf32>
    %59 = arith.divf %55, %58 : vector<16x16xf32>
    %60 = vector.broadcast %45 : vector<1x32xf32> to vector<16x32xf32>
    %61 = arith.mulf %38, %60 : vector<16x32xf32>
    %62 = arith.truncf %61 : vector<16x32xf32> to vector<16x32xbf16>
    %63 = arith.truncf %59 : vector<16x16xf32> to vector<16x16xbf16>
    %cst_33 = arith.constant dense<0.000000e+00> : vector<16x32xf32>
    %64 = tpu.matmul %63, %62, %cst_33 {dimension_numbers = #tpu.dot_dimension_numbers<[1], [0], [0], [1], [0, 0, 1, 1], [], []>} : vector<16x16xbf16>, vector<16x32xbf16>, vector<16x32xf32> -> vector<16x32xf32>
    %65 = arith.addf %44, %64 : vector<16x32xf32>
    %66 = vector.extract_strided_slice %40 {offsets = [1, 0], sizes = [1, 32], strides = [1, 1]} : vector<4x32xf32> to vector<1x32xf32>
    %67 = vector.broadcast %66 : vector<1x32xf32> to vector<16x32xf32>
    %68 = arith.mulf %43, %67 : vector<16x32xf32>
    %69 = arith.truncf %68 : vector<16x32xf32> to vector<16x32xbf16>
    %cst_34 = arith.constant dense<0.000000e+00> : vector<16x16xf32>
    %70 = tpu.matmul %69, %41, %cst_34 {dimension_numbers = #tpu.dot_dimension_numbers<[1], [1], [0], [0], [0, 0, 1, 0], [], []>} : vector<16x32xbf16>, vector<16x32xbf16>, vector<16x16xf32> -> vector<16x16xf32>
    %71 = arith.addf %70, %39 : vector<16x16xf32>
    %cst_35 = arith.constant dense<0xFF800000> : vector<16xf32>
    %72 = vector.multi_reduction <maximumf>, %71, %cst_35 [1] : vector<16x16xf32> to vector<16xf32>
    %73 = vector.shape_cast %72 : vector<16xf32> to vector<16x1xf32>
    %74 = vector.broadcast %73 : vector<16x1xf32> to vector<16x16xf32>
    %75 = arith.subf %71, %74 : vector<16x16xf32>
    %76 = math.exp %75 : vector<16x16xf32>
    %cst_36 = arith.constant dense<0.000000e+00> : vector<16xf32>
    %77 = vector.multi_reduction <add>, %76, %cst_36 [1] : vector<16x16xf32> to vector<16xf32>
    %78 = vector.shape_cast %77 : vector<16xf32> to vector<16x1xf32>
    %79 = vector.broadcast %78 : vector<16x1xf32> to vector<16x16xf32>
    %80 = arith.divf %76, %79 : vector<16x16xf32>
    %81 = vector.broadcast %66 : vector<1x32xf32> to vector<16x32xf32>
    %82 = arith.mulf %38, %81 : vector<16x32xf32>
    %83 = arith.truncf %82 : vector<16x32xf32> to vector<16x32xbf16>
    %84 = arith.truncf %80 : vector<16x16xf32> to vector<16x16xbf16>
    %cst_37 = arith.constant dense<0.000000e+00> : vector<16x32xf32>
    %85 = tpu.matmul %84, %83, %cst_37 {dimension_numbers = #tpu.dot_dimension_numbers<[1], [0], [0], [1], [0, 0, 1, 1], [], []>} : vector<16x16xbf16>, vector<16x32xbf16>, vector<16x32xf32> -> vector<16x32xf32>
    %86 = arith.addf %65, %85 : vector<16x32xf32>
    %87 = vector.extract_strided_slice %40 {offsets = [2, 0], sizes = [1, 32], strides = [1, 1]} : vector<4x32xf32> to vector<1x32xf32>
    %88 = vector.broadcast %87 : vector<1x32xf32> to vector<16x32xf32>
    %89 = arith.mulf %43, %88 : vector<16x32xf32>
    %90 = arith.truncf %89 : vector<16x32xf32> to vector<16x32xbf16>
    %cst_38 = arith.constant dense<0.000000e+00> : vector<16x16xf32>
    %91 = tpu.matmul %90, %41, %cst_38 {dimension_numbers = #tpu.dot_dimension_numbers<[1], [1], [0], [0], [0, 0, 1, 0], [], []>} : vector<16x32xbf16>, vector<16x32xbf16>, vector<16x16xf32> -> vector<16x16xf32>
    %92 = arith.addf %91, %39 : vector<16x16xf32>
    %cst_39 = arith.constant dense<0xFF800000> : vector<16xf32>
    %93 = vector.multi_reduction <maximumf>, %92, %cst_39 [1] : vector<16x16xf32> to vector<16xf32>
    %94 = vector.shape_cast %93 : vector<16xf32> to vector<16x1xf32>
    %95 = vector.broadcast %94 : vector<16x1xf32> to vector<16x16xf32>
    %96 = arith.subf %92, %95 : vector<16x16xf32>
    %97 = math.exp %96 : vector<16x16xf32>
    %cst_40 = arith.constant dense<0.000000e+00> : vector<16xf32>
    %98 = vector.multi_reduction <add>, %97, %cst_40 [1] : vector<16x16xf32> to vector<16xf32>
    %99 = vector.shape_cast %98 : vector<16xf32> to vector<16x1xf32>
    %100 = vector.broadcast %99 : vector<16x1xf32> to vector<16x16xf32>
    %101 = arith.divf %97, %100 : vector<16x16xf32>
    %102 = vector.broadcast %87 : vector<1x32xf32> to vector<16x32xf32>
    %103 = arith.mulf %38, %102 : vector<16x32xf32>
    %104 = arith.truncf %103 : vector<16x32xf32> to vector<16x32xbf16>
    %105 = arith.truncf %101 : vector<16x16xf32> to vector<16x16xbf16>
    %cst_41 = arith.constant dense<0.000000e+00> : vector<16x32xf32>
    %106 = tpu.matmul %105, %104, %cst_41 {dimension_numbers = #tpu.dot_dimension_numbers<[1], [0], [0], [1], [0, 0, 1, 1], [], []>} : vector<16x16xbf16>, vector<16x32xbf16>, vector<16x32xf32> -> vector<16x32xf32>
    %107 = arith.addf %86, %106 : vector<16x32xf32>
    %108 = vector.extract_strided_slice %40 {offsets = [3, 0], sizes = [1, 32], strides = [1, 1]} : vector<4x32xf32> to vector<1x32xf32>
    %109 = vector.broadcast %108 : vector<1x32xf32> to vector<16x32xf32>
    %110 = arith.mulf %43, %109 : vector<16x32xf32>
    %111 = arith.truncf %110 : vector<16x32xf32> to vector<16x32xbf16>
    %cst_42 = arith.constant dense<0.000000e+00> : vector<16x16xf32>
    %112 = tpu.matmul %111, %41, %cst_42 {dimension_numbers = #tpu.dot_dimension_numbers<[1], [1], [0], [0], [0, 0, 1, 0], [], []>} : vector<16x32xbf16>, vector<16x32xbf16>, vector<16x16xf32> -> vector<16x16xf32>
    %113 = arith.addf %112, %39 : vector<16x16xf32>
    %cst_43 = arith.constant dense<0xFF800000> : vector<16xf32>
    %114 = vector.multi_reduction <maximumf>, %113, %cst_43 [1] : vector<16x16xf32> to vector<16xf32>
    %115 = vector.shape_cast %114 : vector<16xf32> to vector<16x1xf32>
    %116 = vector.broadcast %115 : vector<16x1xf32> to vector<16x16xf32>
    %117 = arith.subf %113, %116 : vector<16x16xf32>
    %118 = math.exp %117 : vector<16x16xf32>
    %cst_44 = arith.constant dense<0.000000e+00> : vector<16xf32>
    %119 = vector.multi_reduction <add>, %118, %cst_44 [1] : vector<16x16xf32> to vector<16xf32>
    %120 = vector.shape_cast %119 : vector<16xf32> to vector<16x1xf32>
    %121 = vector.broadcast %120 : vector<16x1xf32> to vector<16x16xf32>
    %122 = arith.divf %118, %121 : vector<16x16xf32>
    %123 = vector.broadcast %108 : vector<1x32xf32> to vector<16x32xf32>
    %124 = arith.mulf %38, %123 : vector<16x32xf32>
    %125 = arith.truncf %124 : vector<16x32xf32> to vector<16x32xbf16>
    %126 = arith.truncf %122 : vector<16x16xf32> to vector<16x16xbf16>
    %cst_45 = arith.constant dense<0.000000e+00> : vector<16x32xf32>
    %127 = tpu.matmul %126, %125, %cst_45 {dimension_numbers = #tpu.dot_dimension_numbers<[1], [0], [0], [1], [0, 0, 1, 1], [], []>} : vector<16x16xbf16>, vector<16x32xbf16>, vector<16x32xf32> -> vector<16x32xf32>
    %128 = arith.addf %107, %127 : vector<16x32xf32>
    %129 = arith.truncf %128 : vector<16x32xf32> to vector<16x32xbf16>
    %c0_46 = arith.constant 0 : index
    %c0_47 = arith.constant 0 : index
    %130 = vector.load %arg13[%c0_46, %c0_47] : memref<32x32xbf16, #tpu.memory_space<vmem>>, vector<32x32xbf16>
    %cst_48 = arith.constant dense<0.000000e+00> : vector<16x32xf32>
    %131 = tpu.matmul %129, %130, %cst_48 {dimension_numbers = #tpu.dot_dimension_numbers<[1], [0], [0], [1], [0, 0, 1, 1], [], []>} : vector<16x32xbf16>, vector<32x32xbf16>, vector<16x32xf32> -> vector<16x32xf32>
    %132 = arith.addf %0, %131 : vector<16x32xf32>
    %c0_49 = arith.constant 0 : index
    %c0_50 = arith.constant 0 : index
    %133 = vector.load %arg14[%c0_49, %c0_50] : memref<1x32xf32, #tpu.memory_space<vmem>>, vector<1x32xf32>
    %134 = vector.broadcast %133 : vector<1x32xf32> to vector<16x32xf32>
    %135 = arith.addf %132, %134 : vector<16x32xf32>
    %c0_51 = arith.constant 0 : index
    %c0_52 = arith.constant 0 : index
    %136 = vector.load %arg15[%c0_51, %c0_52] : memref<1x32xf32, #tpu.memory_space<vmem>>, vector<1x32xf32>
    %c0_53 = arith.constant 0 : index
    %c0_54 = arith.constant 0 : index
    %137 = vector.load %arg16[%c0_53, %c0_54] : memref<1x32xf32, #tpu.memory_space<vmem>>, vector<1x32xf32>
    %cst_55 = arith.constant dense<0.000000e+00> : vector<16xf32>
    %138 = vector.multi_reduction <add>, %135, %cst_55 [1] : vector<16x32xf32> to vector<16xf32>
    %139 = vector.shape_cast %138 : vector<16xf32> to vector<16x1xf32>
    %cst_56 = arith.constant 3.200000e+01 : f32
    %140 = vector.broadcast %cst_56 : f32 to vector<16x1xf32>
    %141 = arith.divf %139, %140 : vector<16x1xf32>
    %142 = vector.broadcast %141 : vector<16x1xf32> to vector<16x32xf32>
    %143 = arith.subf %135, %142 : vector<16x32xf32>
    %144 = arith.mulf %143, %143 : vector<16x32xf32>
    %cst_57 = arith.constant dense<0.000000e+00> : vector<16xf32>
    %145 = vector.multi_reduction <add>, %144, %cst_57 [1] : vector<16x32xf32> to vector<16xf32>
    %146 = vector.shape_cast %145 : vector<16xf32> to vector<16x1xf32>
    %cst_58 = arith.constant 3.200000e+01 : f32
    %147 = vector.broadcast %cst_58 : f32 to vector<16x1xf32>
    %148 = arith.divf %146, %147 : vector<16x1xf32>
    %cst_59 = arith.constant 9.99999974E-6 : f32
    %149 = vector.broadcast %cst_59 : f32 to vector<16x1xf32>
    %150 = arith.addf %148, %149 : vector<16x1xf32>
    %151 = math.rsqrt %150 : vector<16x1xf32>
    %152 = vector.broadcast %151 : vector<16x1xf32> to vector<16x32xf32>
    %153 = arith.mulf %143, %152 : vector<16x32xf32>
    %154 = vector.broadcast %136 : vector<1x32xf32> to vector<16x32xf32>
    %155 = arith.mulf %153, %154 : vector<16x32xf32>
    %156 = vector.broadcast %137 : vector<1x32xf32> to vector<16x32xf32>
    %157 = arith.addf %155, %156 : vector<16x32xf32>
    %158 = arith.truncf %157 : vector<16x32xf32> to vector<16x32xbf16>
    %c0_60 = arith.constant 0 : index
    %c0_61 = arith.constant 0 : index
    %159 = vector.load %arg17[%c0_60, %c0_61] : memref<32x64xbf16, #tpu.memory_space<vmem>>, vector<32x64xbf16>
    %cst_62 = arith.constant dense<0.000000e+00> : vector<16x64xf32>
    %160 = tpu.matmul %158, %159, %cst_62 {dimension_numbers = #tpu.dot_dimension_numbers<[1], [0], [0], [1], [0, 0, 1, 1], [], []>} : vector<16x32xbf16>, vector<32x64xbf16>, vector<16x64xf32> -> vector<16x64xf32>
    %c0_63 = arith.constant 0 : index
    %c0_64 = arith.constant 0 : index
    %161 = vector.load %arg18[%c0_63, %c0_64] : memref<1x64xf32, #tpu.memory_space<vmem>>, vector<1x64xf32>
    %162 = vector.broadcast %161 : vector<1x64xf32> to vector<16x64xf32>
    %163 = arith.addf %160, %162 : vector<16x64xf32>
    %cst_65 = arith.constant 5.000000e-01 : f32
    %164 = vector.broadcast %cst_65 : f32 to vector<16x64xf32>
    %165 = arith.mulf %164, %163 : vector<16x64xf32>
    %cst_66 = arith.constant 0.707106769 : f32
    %166 = vector.broadcast %cst_66 : f32 to vector<16x64xf32>
    %167 = arith.mulf %163, %166 : vector<16x64xf32>
    %cst_67 = arith.constant 0.000000e+00 : f32
    %168 = vector.broadcast %cst_67 : f32 to vector<16x64xf32>
    %169 = arith.cmpf oge, %167, %168 : vector<16x64xf32>
    %cst_68 = arith.constant 1.000000e+00 : f32
    %cst_69 = arith.constant -1.000000e+00 : f32
    %170 = vector.broadcast %cst_68 : f32 to vector<16x64xf32>
    %171 = vector.broadcast %cst_69 : f32 to vector<16x64xf32>
    %172 = arith.select %169, %170, %171 : vector<16x64xi1>, vector<16x64xf32>
    %173 = math.absf %167 : vector<16x64xf32>
    %cst_70 = arith.constant 0.327591091 : f32
    %174 = vector.broadcast %cst_70 : f32 to vector<16x64xf32>
    %175 = arith.mulf %174, %173 : vector<16x64xf32>
    %cst_71 = arith.constant 1.000000e+00 : f32
    %176 = vector.broadcast %cst_71 : f32 to vector<16x64xf32>
    %177 = arith.addf %176, %175 : vector<16x64xf32>
    %cst_72 = arith.constant 1.000000e+00 : f32
    %178 = vector.broadcast %cst_72 : f32 to vector<16x64xf32>
    %179 = arith.divf %178, %177 : vector<16x64xf32>
    %cst_73 = arith.constant 1.06140542 : f32
    %180 = vector.broadcast %cst_73 : f32 to vector<16x64xf32>
    %181 = arith.mulf %180, %179 : vector<16x64xf32>
    %cst_74 = arith.constant -1.45315206 : f32
    %182 = vector.broadcast %cst_74 : f32 to vector<16x64xf32>
    %183 = arith.addf %181, %182 : vector<16x64xf32>
    %184 = arith.mulf %183, %179 : vector<16x64xf32>
    %cst_75 = arith.constant 1.42141378 : f32
    %185 = vector.broadcast %cst_75 : f32 to vector<16x64xf32>
    %186 = arith.addf %184, %185 : vector<16x64xf32>
    %187 = arith.mulf %186, %179 : vector<16x64xf32>
    %cst_76 = arith.constant -0.284496725 : f32
    %188 = vector.broadcast %cst_76 : f32 to vector<16x64xf32>
    %189 = arith.addf %187, %188 : vector<16x64xf32>
    %190 = arith.mulf %189, %179 : vector<16x64xf32>
    %cst_77 = arith.constant 0.254829586 : f32
    %191 = vector.broadcast %cst_77 : f32 to vector<16x64xf32>
    %192 = arith.addf %190, %191 : vector<16x64xf32>
    %193 = arith.mulf %192, %179 : vector<16x64xf32>
    %cst_78 = arith.constant 0.000000e+00 : f32
    %194 = vector.broadcast %cst_78 : f32 to vector<16x64xf32>
    %195 = arith.subf %194, %173 : vector<16x64xf32>
    %196 = arith.mulf %195, %173 : vector<16x64xf32>
    %197 = math.exp %196 : vector<16x64xf32>
    %198 = arith.mulf %193, %197 : vector<16x64xf32>
    %cst_79 = arith.constant 1.000000e+00 : f32
    %199 = vector.broadcast %cst_79 : f32 to vector<16x64xf32>
    %200 = arith.subf %199, %198 : vector<16x64xf32>
    %201 = arith.mulf %172, %200 : vector<16x64xf32>
    %cst_80 = arith.constant 1.000000e+00 : f32
    %202 = vector.broadcast %cst_80 : f32 to vector<16x64xf32>
    %203 = arith.addf %202, %201 : vector<16x64xf32>
    %204 = arith.mulf %165, %203 : vector<16x64xf32>
    %205 = arith.truncf %204 : vector<16x64xf32> to vector<16x64xbf16>
    %c0_81 = arith.constant 0 : index
    %c0_82 = arith.constant 0 : index
    %206 = vector.load %arg19[%c0_81, %c0_82] : memref<64x32xbf16, #tpu.memory_space<vmem>>, vector<64x32xbf16>
    %cst_83 = arith.constant dense<0.000000e+00> : vector<16x32xf32>
    %207 = tpu.matmul %205, %206, %cst_83 {dimension_numbers = #tpu.dot_dimension_numbers<[1], [0], [0], [1], [0, 0, 1, 1], [], []>} : vector<16x64xbf16>, vector<64x32xbf16>, vector<16x32xf32> -> vector<16x32xf32>
    %208 = arith.addf %135, %207 : vector<16x32xf32>
    %c0_84 = arith.constant 0 : index
    %c0_85 = arith.constant 0 : index
    %209 = vector.load %arg20[%c0_84, %c0_85] : memref<1x32xf32, #tpu.memory_space<vmem>>, vector<1x32xf32>
    %210 = vector.broadcast %209 : vector<1x32xf32> to vector<16x32xf32>
    %211 = arith.addf %208, %210 : vector<16x32xf32>
    %c0_86 = arith.constant 0 : index
    %c0_87 = arith.constant 0 : index
    %212 = vector.load %arg23[%c0_86, %c0_87] : memref<16x32xf32, #tpu.memory_space<vmem>>, vector<16x32xf32>
    tpu.vector_store %arg23[%c0_86, %c0_87], %211 {strides = array<i32>} : memref<16x32xf32, #tpu.memory_space<vmem>>, vector<16x32xf32>,
    return
  }
}

</mosaic_0001>

<llo_original>
// kernel: squeeze.1
$region0: #{squeeze.1}
  %s0 = inlined_call_operand.vmem [shape: f32[2,2,1,4,32], index: 0, kind: input, shape index: {}]
  %s1 = inlined_call_operand.vmem [shape: f32[4,128], index: 1, kind: output, shape index: {}]
  $region1: #{squeeze.1} parent=0
    #allocation0 [shape = 'u8[4096]{0}', space=vmem, size = 0x1000, scoped, tag = 'scoped mem for output reshape']
    #allocation1 [shape = 'u8[16384]{0}', space=vmem, size = 0x4000, scoped, tag = 'scoped mem for input reshape']
    %s3 = sshll.u32 1, 4
    %s4 = ssub.s32 %s3, 1
    %s5 = smul.addr 4, 3
    %s6 = scalar_lea.vmem %s0, %s5
    %v7 = vld [vmem:[%s6] sm:%s4]
    %s8 = scalar_lea.vmem [#allocation1], 24
    %9 = vst [vmem:[%s8] sm:%s4] %v7
    %s10 = smul.addr 4, 2
    %s11 = scalar_lea.vmem %s0, %s10
    %v12 = vld [vmem:[%s11] sm:%s4]
    %s13 = scalar_lea.vmem [#allocation1], 16
    %14 = vst [vmem:[%s13] sm:%s4] %v12
    %s15 = scalar_lea.vmem %s0, 4
    %v16 = vld [vmem:[%s15] sm:%s4]
    %s17 = scalar_lea.vmem [#allocation1], 8
    %18 = vst [vmem:[%s17] sm:%s4] %v16
    %v19 = vld [vmem:[%s0] sm:%s4]
    %20 = vst [vmem:[#allocation1] sm:%s4] %v19
    %v21 = vld [vmem:[#allocation1] ss:$8 sm:$0xf]
    %vm22 = vcmask 261120
    %23 = vst.msk [vmem:[#allocation0] sm:$0xf] %vm22, %v21
    %s24 = scalar_lea.vmem [#allocation1], 3
    %v25 = vld [vmem:[%s24] ss:$8 sm:$0xf]
    %26 = vrot.lane.b32.xlu0 %v25, 96
    %v27 = vpop.permute.xlu0 %26
    %vm28 = vcmask 1048320
    %29 = vst.msk [vmem:[#allocation0] sm:$0xf] %vm28, %v27
    %s30 = scalar_lea.vmem [#allocation1], 2
    %v31 = vld [vmem:[%s30] ss:$8 sm:$0xf]
    %32 = vrot.lane.b32.xlu0 %v31, 64
    %v33 = vpop.permute.xlu0 %32
    %vm34 = vcmask 785920
    %35 = vst.msk [vmem:[#allocation0] sm:$0xf] %vm34, %v33
    %s36 = scalar_lea.vmem [#allocation1], 1
    %v37 = vld [vmem:[%s36] ss:$8 sm:$0xf]
    %38 = vrot.lane.b32.xlu0 %v37, 32
    %v39 = vpop.permute.xlu0 %38
    %vm40 = vcmask 523520
    %41 = vst.msk [vmem:[#allocation0] sm:$0xf] %vm40, %v39
    %s43 = sshll.u32 1, 4
    %s44 = ssub.s32 %s43, 1
    %v46 = vld [vmem:[#allocation0] sm:%s44]
    %s47 = sshll.u32 1, 4
    %s48 = ssub.s32 %s47, 1
    %49 = vst [vmem:[%s1] sm:%s48] %v46

// kernel: hierarchical_transformer_forward.5
$region0: #{hierarchical_transformer_forward.5}
  #allocation0 [shape = 'u32[]', space=smem, size = 0x4, offset = 0x4, fixed_abs, tag = 'smem constant byte address 0x4 - core index']
  #allocation1 [shape = 'u32[144,128]{1,0:T(1,128)}', space=vmem, size = 0x12000, scoped, tag = 'internal scratch']
  %s0 = inlined_call_operand.vmem [shape: f32[4,128], index: 0, kind: input, shape index: {}]
  %s1 = inlined_call_operand.vmem [shape: f32[48,32], index: 1, kind: input, shape index: {}]
  %s2 = inlined_call_operand.vmem [shape: f32[12,4], index: 2, kind: input, shape index: {}]
  %s3 = inlined_call_operand.vmem [shape: f32[12,48], index: 3, kind: input, shape index: {}]
  %s4 = inlined_call_operand.vmem [shape: bf16[128,256], index: 4, kind: input, shape index: {}]
  %s5 = inlined_call_operand.vmem [shape: f32[1,256], index: 5, kind: input, shape index: {}]
  %s6 = inlined_call_operand.vmem [shape: bf16[256,32], index: 6, kind: input, shape index: {}]
  %s7 = inlined_call_operand.vmem [shape: f32[1,32], index: 7, kind: input, shape index: {}]
  %s8 = inlined_call_operand.vmem [shape: f32[4,32], index: 8, kind: output, shape index: {0}]
  %s9 = inlined_call_operand.vmem [shape: f32[12,32], index: 9, kind: output, shape index: {1}]
  %10 = xla_tuple %s8, %s9
  %s11 = sld [smem:[#allocation0]]
  $region50: #{hierarchical_transformer_forward.5} parent=0
    _
  %s13 = ssub.s32 1, %s11
  %s14 = scalar_select 0, %s13, %s11
  // Predicated region
  $region2: #{hierarchical_transformer_forward.5} parent=0 // pred_check
    _
  $region3: #{hierarchical_transformer_forward.5} parent=0 // pred_check_branch
    %16 = sbr.rel (0) target = $region5
  $region4: #{hierarchical_transformer_forward.5} parent=0 // pred_region
    _
  $region5: #{hierarchical_transformer_forward.5} parent=0 // pred_fallthru
    _
  // Predicated region
  $region6: #{hierarchical_transformer_forward.5} parent=0 // pred_check
    _
  $region7: #{hierarchical_transformer_forward.5} parent=0 // pred_check_branch
    %18 = sbr.rel (0) target = $region9
  $region8: #{hierarchical_transformer_forward.5} parent=0 // pred_region
    _
  $region9: #{hierarchical_transformer_forward.5} parent=0 // pred_fallthru
    _
  // Predicated region
  $region10: #{hierarchical_transformer_forward.5} parent=0 // pred_check
    _
  $region11: #{hierarchical_transformer_forward.5} parent=0 // pred_check_branch
    %20 = sbr.rel (0) target = $region13
  $region12: #{hierarchical_transformer_forward.5} parent=0 // pred_region
    _
  $region13: #{hierarchical_transformer_forward.5} parent=0 // pred_fallthru
    _
  // Predicated region
  $region14: #{hierarchical_transformer_forward.5} parent=0 // pred_check
    _
  $region15: #{hierarchical_transformer_forward.5} parent=0 // pred_check_branch
    %22 = sbr.rel (0) target = $region17
  $region16: #{hierarchical_transformer_forward.5} parent=0 // pred_region
    _
  $region17: #{hierarchical_transformer_forward.5} parent=0 // pred_fallthru
    _
  // Predicated region
  $region18: #{hierarchical_transformer_forward.5} parent=0 // pred_check
    _
  $region19: #{hierarchical_transformer_forward.5} parent=0 // pred_check_branch
    %24 = sbr.rel (0) target = $region21
  $region20: #{hierarchical_transformer_forward.5} parent=0 // pred_region
    _
  $region21: #{hierarchical_transformer_forward.5} parent=0 // pred_fallthru
    _
  // Predicated region
  $region22: #{hierarchical_transformer_forward.5} parent=0 // pred_check
    _
  $region23: #{hierarchical_transformer_forward.5} parent=0 // pred_check_branch
    %26 = sbr.rel (0) target = $region25
  $region24: #{hierarchical_transformer_forward.5} parent=0 // pred_region
    _
  $region25: #{hierarchical_transformer_forward.5} parent=0 // pred_fallthru
    _
  // Predicated region
  $region26: #{hierarchical_transformer_forward.5} parent=0 // pred_check
    _
  $region27: #{hierarchical_transformer_forward.5} parent=0 // pred_check_branch
    %28 = sbr.rel (0) target = $region29
  $region28: #{hierarchical_transformer_forward.5} parent=0 // pred_region
    _
  $region29: #{hierarchical_transformer_forward.5} parent=0 // pred_fallthru
    _
  // Predicated region
  $region30: #{hierarchical_transformer_forward.5} parent=0 // pred_check
    _
  $region31: #{hierarchical_transformer_forward.5} parent=0 // pred_check_branch
    %30 = sbr.rel (0) target = $region33
  $region32: #{hierarchical_transformer_forward.5} parent=0 // pred_region
    _
  $region33: #{hierarchical_transformer_forward.5} parent=0 // pred_fallthru
    _
  %v32 = vld [vmem:[%s0] sm:$0xf]
  %v33 = vpack.c.bf16 %v32, %v32
  %v34 = vld [vmem:[%s4] sm:$0xff]
  %v35 = vld [vmem:[%s4 + $0x8] sm:$0xff]
  %v36 = vld [vmem:[%s4 + $0x10] sm:$0xff]
  %v37 = vld [vmem:[%s4 + $0x18] sm:$0xff]
  %v38 = vld [vmem:[%s4 + $0x20] sm:$0xff]
  %v39 = vld [vmem:[%s4 + $0x28] sm:$0xff]
  %v40 = vld [vmem:[%s4 + $0x30] sm:$0xff]
  %v41 = vld [vmem:[%s4 + $0x38] sm:$0xff]
  %v42 = vld [vmem:[%s4 + $0x40] sm:$0xff]
  %v43 = vld [vmem:[%s4 + $0x48] sm:$0xff]
  %v44 = vld [vmem:[%s4 + $0x50] sm:$0xff]
  %v45 = vld [vmem:[%s4 + $0x58] sm:$0xff]
  %v46 = vld [vmem:[%s4 + $0x60] sm:$0xff]
  %v47 = vld [vmem:[%s4 + $0x68] sm:$0xff]
  %v48 = vld [vmem:[%s4 + $0x70] sm:$0xff]
  %v49 = vld [vmem:[%s4 + $0x78] sm:$0xff]
  %v50 = vld [vmem:[%s5] sm:$0x3]
  %v52 = vlaneseq
  %v53 = vshrl.u32 %v52, 7
  %v54 = vsub.s32 0, %v53
  %v55 = vrot.slane %v50, %v54
  %v56 = vlaneseq
  %v57 = vshrl.u32 %v56, 7
  %v58 = vsub.s32 1, %v57
  %v59 = vrot.slane %v50, %v58
  %v78 = vunpack.c.l.b16 %v34
  %v79 = vunpack.c.h.b16 %v34
  %v80 = vunpack.c.l.b16 %v35
  %v81 = vunpack.c.h.b16 %v35
  %v82 = vunpack.c.l.b16 %v36
  %v83 = vunpack.c.h.b16 %v36
  %v84 = vunpack.c.l.b16 %v37
  %v85 = vunpack.c.h.b16 %v37
  %v86 = vunpack.c.l.b16 %v38
  %v87 = vunpack.c.h.b16 %v38
  %v88 = vunpack.c.l.b16 %v39
  %v89 = vunpack.c.h.b16 %v39
  %v90 = vunpack.c.l.b16 %v40
  %v91 = vunpack.c.h.b16 %v40
  %v92 = vunpack.c.l.b16 %v41
  %v93 = vunpack.c.h.b16 %v41
  %v94 = vunpack.c.l.b16 %v42
  %v95 = vunpack.c.h.b16 %v42
  %v96 = vunpack.c.l.b16 %v43
  %v97 = vunpack.c.h.b16 %v43
  %v98 = vunpack.c.l.b16 %v44
  %v99 = vunpack.c.h.b16 %v44
  %v100 = vunpack.c.l.b16 %v45
  %v101 = vunpack.c.h.b16 %v45
  %v102 = vunpack.c.l.b16 %v46
  %v103 = vunpack.c.h.b16 %v46
  %v104 = vunpack.c.l.b16 %v47
  %v105 = vunpack.c.h.b16 %v47
  %v106 = vunpack.c.l.b16 %v48
  %v107 = vunpack.c.h.b16 %v48
  %v108 = vunpack.c.l.b16 %v49
  %v109 = vunpack.c.h.b16 %v49
  %v110 = vpack.c.b16 %v80, %v78
  %v111 = vpack.c.b16 %v81, %v79
  %v112 = vpack.c.b16 %v84, %v82
  %v113 = vpack.c.b16 %v85, %v83
  %v114 = vpack.c.b16 %v88, %v86
  %v115 = vpack.c.b16 %v89, %v87
  %v116 = vpack.c.b16 %v92, %v90
  %v117 = vpack.c.b16 %v93, %v91
  %v118 = vpack.c.b16 %v96, %v94
  %v119 = vpack.c.b16 %v97, %v95
  %v120 = vpack.c.b16 %v100, %v98
  %v121 = vpack.c.b16 %v101, %v99
  %v122 = vpack.c.b16 %v104, %v102
  %v123 = vpack.c.b16 %v105, %v103
  %v124 = vpack.c.b16 %v108, %v106
  %v125 = vpack.c.b16 %v109, %v107
  %142 = vmatprep.subr.bf16.mxu0 %v125
  %143 = vmatpush1.bf16.msra.mxu0 %v124
  %144 = vmatprep.subr.bf16.mxu0 %v123
  %145 = vmatpush1.bf16.msra.mxu0 %v122
  %146 = vmatprep.subr.bf16.mxu0 %v121
  %147 = vmatpush1.bf16.msra.mxu0 %v120
  %148 = vmatprep.subr.bf16.mxu0 %v119
  %149 = vmatpush1.bf16.msra.mxu0 %v118
  %150 = vmatprep.subr.bf16.mxu0 %v117
  %151 = vmatpush1.bf16.msra.mxu0 %v116
  %152 = vmatprep.subr.bf16.mxu0 %v115
  %153 = vmatpush1.bf16.msra.mxu0 %v114
  %154 = vmatprep.subr.bf16.mxu0 %v113
  %155 = vmatpush1.bf16.msra.mxu0 %v112
  %156 = vmatprep.subr.bf16.mxu0 %v111
  %157 = vmatpush1.bf16.msra.mxu0 %v110
  %158 = vmatprep.subr.bf16.mxu0 0
  %159 = vmatpush2.bf16.msra.mxu0 0
  %160 = vmatprep.subr.bf16.mxu0 0
  %161 = vmatpush2.bf16.msra.mxu0 0
  %162 = vmatprep.subr.bf16.mxu0 0
  %163 = vmatpush2.bf16.msra.mxu0 0
  %164 = vmatprep.subr.bf16.mxu0 0
  %165 = vmatpush2.bf16.msra.mxu0 0
  %166 = vmatprep.subr.bf16.mxu0 0
  %167 = vmatpush2.bf16.msra.mxu0 0
  %168 = vmatprep.subr.bf16.mxu0 0
  %169 = vmatpush2.bf16.msra.mxu0 0
  %170 = vmatprep.subr.bf16.mxu0 0
  %171 = vmatpush2.bf16.msra.mxu0 0
  %172 = vmatprep.subr.bf16.mxu0 0
  %173 = vmatpush2.bf16.msra.mxu0 0
  %174 = vmatprep.mubr.bf16.mxu0 0
  %175 = vmatmul.mubr.bf16.gmra.mxu0 %v33
  %v176 = vpop.f32.mrf.mxu0
  %v177 = vadd.f32 %v55, %v176
  %v178 = vpop.f32.mrf.mxu0
  %v179 = vadd.f32 %v59, %v178
  %v180 = vpop.f32.mrf.mxu0
  %v181 = vpop.f32.mrf.mxu0
  %182 = vdwg.mxu0
  %v183 = vmax.f32 %v177, 0.0
  %v184 = vmax.f32 %v179, 0.0
  %v185 = vpack.c.bf16 %v183, %v183
  %v186 = vpack.c.bf16 %v184, %v184
  %v187 = vld [vmem:[%s6] sm:$0xf]
  %v188 = vld [vmem:[%s6 + $0x4] sm:$0xf]
  %v189 = vld [vmem:[%s6 + $0x8] sm:$0xf]
  %v190 = vld [vmem:[%s6 + $0xc] sm:$0xf]
  %v191 = vld [vmem:[%s6 + $0x10] sm:$0xf]
  %v192 = vld [vmem:[%s6 + $0x14] sm:$0xf]
  %v193 = vld [vmem:[%s6 + $0x18] sm:$0xf]
  %v194 = vld [vmem:[%s6 + $0x1c] sm:$0xf]
  %v195 = vld [vmem:[%s6 + $0x20] sm:$0xf]
  %v196 = vld [vmem:[%s6 + $0x24] sm:$0xf]
  %v197 = vld [vmem:[%s6 + $0x28] sm:$0xf]
  %v198 = vld [vmem:[%s6 + $0x2c] sm:$0xf]
  %v199 = vld [vmem:[%s6 + $0x30] sm:$0xf]
  %v200 = vld [vmem:[%s6 + $0x34] sm:$0xf]
  %v201 = vld [vmem:[%s6 + $0x38] sm:$0xf]
  %v202 = vld [vmem:[%s6 + $0x3c] sm:$0xf]
  %v203 = vld [vmem:[%s6 + $0x40] sm:$0xf]
  %v204 = vld [vmem:[%s6 + $0x44] sm:$0xf]
  %v205 = vld [vmem:[%s6 + $0x48] sm:$0xf]
  %v206 = vld [vmem:[%s6 + $0x4c] sm:$0xf]
  %v207 = vld [vmem:[%s6 + $0x50] sm:$0xf]
  %v208 = vld [vmem:[%s6 + $0x54] sm:$0xf]
  %v209 = vld [vmem:[%s6 + $0x58] sm:$0xf]
  %v210 = vld [vmem:[%s6 + $0x5c] sm:$0xf]
  %v211 = vld [vmem:[%s6 + $0x60] sm:$0xf]
  %v212 = vld [vmem:[%s6 + $0x64] sm:$0xf]
  %v213 = vld [vmem:[%s6 + $0x68] sm:$0xf]
  %v214 = vld [vmem:[%s6 + $0x6c] sm:$0xf]
  %v215 = vld [vmem:[%s6 + $0x70] sm:$0xf]
  %v216 = vld [vmem:[%s6 + $0x74] sm:$0xf]
  %v217 = vld [vmem:[%s6 + $0x78] sm:$0xf]
  %v218 = vld [vmem:[%s6 + $0x7c] sm:$0xf]
  %v219 = vld [vmem:[%s7] sm:$0x1]
  %v221 = vlaneseq
  %v222 = vshrl.u32 %v221, 7
  %v223 = vsub.s32 0, %v222
  %v224 = vrot.slane %v219, %v223
  %v258 = vunpack.c.l.b16 %v187
  %v259 = vunpack.c.l.b16 %v188
  %v260 = vunpack.c.l.b16 %v189
  %v261 = vunpack.c.l.b16 %v190
  %v262 = vunpack.c.l.b16 %v191
  %v263 = vunpack.c.l.b16 %v192
  %v264 = vunpack.c.l.b16 %v193
  %v265 = vunpack.c.l.b16 %v194
  %v266 = vunpack.c.l.b16 %v195
  %v267 = vunpack.c.l.b16 %v196
  %v268 = vunpack.c.l.b16 %v197
  %v269 = vunpack.c.l.b16 %v198
  %v270 = vunpack.c.l.b16 %v199
  %v271 = vunpack.c.l.b16 %v200
  %v272 = vunpack.c.l.b16 %v201
  %v273 = vunpack.c.l.b16 %v202
  %v274 = vunpack.c.l.b16 %v203
  %v275 = vunpack.c.l.b16 %v204
  %v276 = vunpack.c.l.b16 %v205
  %v277 = vunpack.c.l.b16 %v206
  %v278 = vunpack.c.l.b16 %v207
  %v279 = vunpack.c.l.b16 %v208
  %v280 = vunpack.c.l.b16 %v209
  %v281 = vunpack.c.l.b16 %v210
  %v282 = vunpack.c.l.b16 %v211
  %v283 = vunpack.c.l.b16 %v212
  %v284 = vunpack.c.l.b16 %v213
  %v285 = vunpack.c.l.b16 %v214
  %v286 = vunpack.c.l.b16 %v215
  %v287 = vunpack.c.l.b16 %v216
  %v288 = vunpack.c.l.b16 %v217
  %v289 = vunpack.c.l.b16 %v218
  %v290 = vpack.c.b16 %v259, %v258
  %v291 = vpack.c.b16 %v261, %v260
  %v292 = vpack.c.b16 %v263, %v262
  %v293 = vpack.c.b16 %v265, %v264
  %v294 = vpack.c.b16 %v267, %v266
  %v295 = vpack.c.b16 %v269, %v268
  %v296 = vpack.c.b16 %v271, %v270
  %v297 = vpack.c.b16 %v273, %v272
  %v298 = vpack.c.b16 %v275, %v274
  %v299 = vpack.c.b16 %v277, %v276
  %v300 = vpack.c.b16 %v279, %v278
  %v301 = vpack.c.b16 %v281, %v280
  %v302 = vpack.c.b16 %v283, %v282
  %v303 = vpack.c.b16 %v285, %v284
  %v304 = vpack.c.b16 %v287, %v286
  %v305 = vpack.c.b16 %v289, %v288
  %322 = vmatprep.subr.bf16.mxu0 0
  %323 = vmatpush1.bf16.msra.mxu0 %v297
  %324 = vmatprep.subr.bf16.mxu0 0
  %325 = vmatpush1.bf16.msra.mxu0 %v296
  %326 = vmatprep.subr.bf16.mxu0 0
  %327 = vmatpush1.bf16.msra.mxu0 %v295
  %328 = vmatprep.subr.bf16.mxu0 0
  %329 = vmatpush1.bf16.msra.mxu0 %v294
  %330 = vmatprep.subr.bf16.mxu0 0
  %331 = vmatpush1.bf16.msra.mxu0 %v293
  %332 = vmatprep.subr.bf16.mxu0 0
  %333 = vmatpush1.bf16.msra.mxu0 %v292
  %334 = vmatprep.subr.bf16.mxu0 0
  %335 = vmatpush1.bf16.msra.mxu0 %v291
  %336 = vmatprep.subr.bf16.mxu0 0
  %337 = vmatpush1.bf16.msra.mxu0 %v290
  %338 = vmatprep.subr.bf16.mxu0 0
  %339 = vmatpush2.bf16.msra.mxu0 %v305
  %340 = vmatprep.subr.bf16.mxu0 0
  %341 = vmatpush2.bf16.msra.mxu0 %v304
  %342 = vmatprep.subr.bf16.mxu0 0
  %343 = vmatpush2.bf16.msra.mxu0 %v303
  %344 = vmatprep.subr.bf16.mxu0 0
  %345 = vmatpush2.bf16.msra.mxu0 %v302
  %346 = vmatprep.subr.bf16.mxu0 0
  %347 = vmatpush2.bf16.msra.mxu0 %v301
  %348 = vmatprep.subr.bf16.mxu0 0
  %349 = vmatpush2.bf16.msra.mxu0 %v300
  %350 = vmatprep.subr.bf16.mxu0 0
  %351 = vmatpush2.bf16.msra.mxu0 %v299
  %352 = vmatprep.subr.bf16.mxu0 0
  %353 = vmatpush2.bf16.msra.mxu0 %v298
  %354 = vmatprep.mubr.bf16.mxu0 %v186
  %355 = vmatmul.mubr.bf16.gmra.mxu0 %v185
  %v356 = vpop.f32.mrf.mxu0
  %v357 = vadd.f32 %v224, %v356
  %v358 = vpop.f32.mrf.mxu0
  %v359 = vpop.f32.mrf.mxu0
  %v360 = vpop.f32.mrf.mxu0
  %361 = vdwg.mxu0
  %vm362 = vcmask 257024
  %363 = vst.msk [vmem:[%s8] sm:$0xf] %vm362, %v357
  %v364 = vld [vmem:[%s1] sm:$0xff]
  %v365 = vld [vmem:[%s1 + $0x8] sm:$0xff]
  %v366 = vld [vmem:[%s1 + $0x10] sm:$0xff]
  %v367 = vld [vmem:[%s1 + $0x18] sm:$0xff]
  %v368 = vld [vmem:[%s1 + $0x20] sm:$0xff]
  %v369 = vld [vmem:[%s1 + $0x28] sm:$0xff]
  %v370 = vpack.c.bf16 %v365, %v364
  %v371 = vpack.c.bf16 %v367, %v366
  %v372 = vpack.c.bf16 %v369, %v368
  %v373 = vld [vmem:[%s2] sm:$0xff]
  %v374 = vld [vmem:[%s2 + $0x8] sm:$0xf]
  %vm375 = vcmask 31744
  %v377 = vsel %vm375, %v373, 0
  %v380 = vsel %vm375, %v374, 0
  %vm382 = vcmask 1043456
  %v384 = vsel %vm382, %v357, 0
  %386 = vmatprep.subr.mxu0 0.0
  %387 = vmatpush1.msra.mxu0 0.0
  %388 = vmatprep.subr.mxu0 0.0
  %389 = vmatpush1.msra.mxu0 0.0
  %390 = vmatprep.subr.mxu0 0.0
  %391 = vmatpush1.msra.mxu0 0.0
  %392 = vmatprep.subr.mxu0 0.0
  %393 = vmatpush1.msra.mxu0 0.0
  %394 = vmatprep.subr.mxu0 0.0
  %395 = vmatpush1.msra.mxu0 0.0
  %396 = vmatprep.subr.mxu0 0.0
  %397 = vmatpush1.msra.mxu0 0.0
  %398 = vmatprep.subr.mxu0 0.0
  %399 = vmatpush1.msra.mxu0 0.0
  %400 = vmatprep.subr.mxu0 0.0
  %401 = vmatpush1.msra.mxu0 0.0
  %402 = vmatprep.subr.mxu0 0.0
  %403 = vmatpush1.msra.mxu0 0.0
  %404 = vmatprep.subr.mxu0 0.0
  %405 = vmatpush1.msra.mxu0 0.0
  %406 = vmatprep.subr.mxu0 0.0
  %407 = vmatpush1.msra.mxu0 0.0
  %408 = vmatprep.subr.mxu0 0.0
  %409 = vmatpush1.msra.mxu0 0.0
  %410 = vmatprep.subr.mxu0 0.0
  %411 = vmatpush1.msra.mxu0 0.0
  %412 = vmatprep.subr.mxu0 0.0
  %413 = vmatpush1.msra.mxu0 0.0
  %414 = vmatprep.subr.mxu0 0.0
  %415 = vmatpush1.msra.mxu0 0.0
  %416 = vmatprep.subr.mxu0 0.0
  %417 = vmatpush1.msra.mxu0 %v384
  %418 = vmatprep.subr.mxu0 0.0
  %419 = vmatpush2.msra.mxu0 0.0
  %420 = vmatprep.subr.mxu0 0.0
  %421 = vmatpush2.msra.mxu0 0.0
  %422 = vmatprep.subr.mxu0 0.0
  %423 = vmatpush2.msra.mxu0 0.0
  %424 = vmatprep.subr.mxu0 0.0
  %425 = vmatpush2.msra.mxu0 0.0
  %426 = vmatprep.subr.mxu0 0.0
  %427 = vmatpush2.msra.mxu0 0.0
  %428 = vmatprep.subr.mxu0 0.0
  %429 = vmatpush2.msra.mxu0 0.0
  %430 = vmatprep.subr.mxu0 0.0
  %431 = vmatpush2.msra.mxu0 0.0
  %432 = vmatprep.subr.mxu0 0.0
  %433 = vmatpush2.msra.mxu0 0.0
  %434 = vmatprep.subr.mxu0 0.0
  %435 = vmatpush2.msra.mxu0 0.0
  %436 = vmatprep.subr.mxu0 0.0
  %437 = vmatpush2.msra.mxu0 0.0
  %438 = vmatprep.subr.mxu0 0.0
  %439 = vmatpush2.msra.mxu0 0.0
  %440 = vmatprep.subr.mxu0 0.0
  %441 = vmatpush2.msra.mxu0 0.0
  %442 = vmatprep.subr.mxu0 0.0
  %443 = vmatpush2.msra.mxu0 0.0
  %444 = vmatprep.subr.mxu0 0.0
  %445 = vmatpush2.msra.mxu0 0.0
  %446 = vmatprep.subr.mxu0 0.0
  %447 = vmatpush2.msra.mxu0 0.0
  %448 = vmatprep.subr.mxu0 0.0
  %449 = vmatpush2.msra.mxu0 0.0
  %450 = vmatprep.mubr.f32.mxu0 0.0
  %451 = vmatmul.mubr.f32.gmra.mxu0 %v377
  %v452 = vpop.f32.mrf.mxu0
  %v453 = vadd.f32 0.0, %v452
  %v454 = vpop.f32.mrf.mxu0
  %455 = vmatprep.mubr.f32.mxu0 0.0
  %456 = vmatmul.mubr.f32.gmra.mxu0 %v380
  %v457 = vpop.f32.mrf.mxu0
  %v458 = vadd.f32 0.0, %v457
  %v459 = vpop.f32.mrf.mxu0
  %460 = vdwg.mxu0
  %v461 = vpack.c.bf16 %v458, %v453
  %vm462 = vcmask 261120
  %v464 = vsel %vm462, %v461, 0
  %v467 = vsel %vm462, %v370, 0
  %v470 = vsel %vm462, %v371, 0
  %v473 = vsel %vm462, %v372, 0
  %475 = vmatprep.subr.bf16.mxu0 0
  %476 = vmatpush1.bf16.xpose.msra.mxu0 0
  %477 = vmatprep.subr.bf16.mxu0 0
  %478 = vmatpush1.bf16.xpose.msra.mxu0 0
  %479 = vmatprep.subr.bf16.mxu0 0
  %480 = vmatpush1.bf16.xpose.msra.mxu0 0
  %481 = vmatprep.subr.bf16.mxu0 0
  %482 = vmatpush1.bf16.xpose.msra.mxu0 0
  %483 = vmatprep.subr.bf16.mxu0 0
  %484 = vmatpush1.bf16.xpose.msra.mxu0 0
  %485 = vmatprep.subr.bf16.mxu0 0
  %486 = vmatpush1.bf16.xpose.msra.mxu0 %v473
  %487 = vmatprep.subr.bf16.mxu0 0
  %488 = vmatpush1.bf16.xpose.msra.mxu0 %v470
  %489 = vmatprep.subr.bf16.mxu0 0
  %490 = vmatpush1.bf16.xpose.msra.mxu0 %v467
  %491 = vmatprep.subr.bf16.mxu0 0
  %492 = vmatpush2.bf16.xpose.msra.mxu0 0
  %493 = vmatprep.subr.bf16.mxu0 0
  %494 = vmatpush2.bf16.xpose.msra.mxu0 0
  %495 = vmatprep.subr.bf16.mxu0 0
  %496 = vmatpush2.bf16.xpose.msra.mxu0 0
  %497 = vmatprep.subr.bf16.mxu0 0
  %498 = vmatpush2.bf16.xpose.msra.mxu0 0
  %499 = vmatprep.subr.bf16.mxu0 0
  %500 = vmatpush2.bf16.xpose.msra.mxu0 0
  %501 = vmatprep.subr.bf16.mxu0 0
  %502 = vmatpush2.bf16.xpose.msra.mxu0 0
  %503 = vmatprep.subr.bf16.mxu0 0
  %504 = vmatpush2.bf16.xpose.msra.mxu0 0
  %505 = vmatprep.subr.bf16.mxu0 0
  %506 = vmatpush2.bf16.xpose.msra.mxu0 0
  %507 = vmatprep.mubr.bf16.mxu0 0
  %508 = vmatmul.mubr.bf16.gmra.mxu0 %v464
  %v509 = vpop.f32.mrf.mxu0
  %v510 = vadd.f32 0.0, %v509
  %v511 = vpop.f32.mrf.mxu0
  %v512 = vpop.f32.mrf.mxu0
  %v513 = vadd.f32 0.0, %v512
  %v514 = vpop.f32.mrf.mxu0
  %515 = vdwg.mxu0
  %v516 = vld [vmem:[%s3] sm:$0xff]
  %v517 = vld [vmem:[%s3 + $0x8] sm:$0xf]
  %v518 = vmul.f32 %v510, %v516
  %v519 = vmul.f32 %v513, %v517
  %v520 = vpack.c.bf16 %v519, %v518
  %vm521 = vcmask 392192
  %v523 = vsel %vm521, %v520, 0
  %525 = vmatprep.subr.bf16.mxu0 0
  %526 = vmatpush1.bf16.msra.mxu0 0
  %527 = vmatprep.subr.bf16.mxu0 0
  %528 = vmatpush1.bf16.msra.mxu0 0
  %529 = vmatprep.subr.bf16.mxu0 0
  %530 = vmatpush1.bf16.msra.mxu0 0
  %531 = vmatprep.subr.bf16.mxu0 0
  %532 = vmatpush1.bf16.msra.mxu0 0
  %533 = vmatprep.subr.bf16.mxu0 0
  %534 = vmatpush1.bf16.msra.mxu0 0
  %535 = vmatprep.subr.bf16.mxu0 0
  %536 = vmatpush1.bf16.msra.mxu0 %v372
  %537 = vmatprep.subr.bf16.mxu0 0
  %538 = vmatpush1.bf16.msra.mxu0 %v371
  %539 = vmatprep.subr.bf16.mxu0 0
  %540 = vmatpush1.bf16.msra.mxu0 %v370
  %541 = vmatprep.subr.bf16.mxu0 0
  %542 = vmatpush2.bf16.msra.mxu0 0
  %543 = vmatprep.subr.bf16.mxu0 0
  %544 = vmatpush2.bf16.msra.mxu0 0
  %545 = vmatprep.subr.bf16.mxu0 0
  %546 = vmatpush2.bf16.msra.mxu0 0
  %547 = vmatprep.subr.bf16.mxu0 0
  %548 = vmatpush2.bf16.msra.mxu0 0
  %549 = vmatprep.subr.bf16.mxu0 0
  %550 = vmatpush2.bf16.msra.mxu0 0
  %551 = vmatprep.subr.bf16.mxu0 0
  %552 = vmatpush2.bf16.msra.mxu0 0
  %553 = vmatprep.subr.bf16.mxu0 0
  %554 = vmatpush2.bf16.msra.mxu0 0
  %555 = vmatprep.subr.bf16.mxu0 0
  %556 = vmatpush2.bf16.msra.mxu0 0
  %557 = vmatprep.mubr.bf16.mxu0 0
  %558 = vmatmul.mubr.bf16.gmra.mxu0 %v523
  %v559 = vpop.f32.mrf.mxu0
  %v560 = vadd.f32 0.0, %v559
  %v561 = vpop.f32.mrf.mxu0
  %v562 = vpop.f32.mrf.mxu0
  %v563 = vadd.f32 0.0, %v562
  %v564 = vpop.f32.mrf.mxu0
  %565 = vdwg.mxu0
  %566 = vst.msk [vmem:[%s9] sm:$0xff] %vm462, %v560
  %567 = vst.msk [vmem:[%s9 + $0x8] sm:$0xf] %vm362, %v563
  // Predicated region
  $region34: #{hierarchical_transformer_forward.5} parent=0 // pred_check
    _
  $region35: #{hierarchical_transformer_forward.5} parent=0 // pred_check_branch
    %569 = sbr.rel (0) target = $region37
  $region36: #{hierarchical_transformer_forward.5} parent=0 // pred_region
    _
  $region37: #{hierarchical_transformer_forward.5} parent=0 // pred_fallthru
    _
  // Predicated region
  $region38: #{hierarchical_transformer_forward.5} parent=0 // pred_check
    _
  $region39: #{hierarchical_transformer_forward.5} parent=0 // pred_check_branch
    %571 = sbr.rel (0) target = $region41
  $region40: #{hierarchical_transformer_forward.5} parent=0 // pred_region
    _
  $region41: #{hierarchical_transformer_forward.5} parent=0 // pred_fallthru
    _
  // Predicated region
  $region42: #{hierarchical_transformer_forward.5} parent=0 // pred_check
    _
  $region43: #{hierarchical_transformer_forward.5} parent=0 // pred_check_branch
    %573 = sbr.rel (0) target = $region45
  $region44: #{hierarchical_transformer_forward.5} parent=0 // pred_region
    _
  $region45: #{hierarchical_transformer_forward.5} parent=0 // pred_fallthru
    _
  // Predicated region
  $region46: #{hierarchical_transformer_forward.5} parent=0 // pred_check
    _
  $region47: #{hierarchical_transformer_forward.5} parent=0 // pred_check_branch
    %575 = sbr.rel (0) target = $region49
  $region48: #{hierarchical_transformer_forward.5} parent=0 // pred_region
    _
  $region49: #{hierarchical_transformer_forward.5} parent=0 // pred_fallthru
    _

// kernel: hierarchical_transformer_forward.7
$region0: #{hierarchical_transformer_forward.7}
  #allocation0 [shape = 'u32[]', space=smem, size = 0x4, offset = 0x4, fixed_abs, tag = 'smem constant byte address 0x4 - core index']
  #allocation1 [shape = 'u32[144,128]{1,0:T(1,128)}', space=vmem, size = 0x12000, scoped, tag = 'internal scratch']
  #allocation2 [shape = 'f32[1,1]{1,0:T(1,128)S(1)}', space=vmem, size = 0x200, scoped, tag = 'scoped memory for hierarchical_transformer_forward.7']
  %s0 = inlined_call_operand.vmem [shape: f32[16,32], index: 0, kind: input, shape index: {}]
  %s1 = inlined_call_operand.vmem [shape: f32[1,32], index: 1, kind: input, shape index: {}]
  %s2 = inlined_call_operand.vmem [shape: f32[1,32], index: 2, kind: input, shape index: {}]
  %s3 = inlined_call_operand.vmem [shape: f32[1,32], index: 3, kind: input, shape index: {}]
  %s4 = inlined_call_operand.vmem [shape: f32[1,32], index: 4, kind: input, shape index: {}]
  %s5 = inlined_call_operand.<no memory space> [shape: f32[1,1], index: 5, kind: input, shape index: {}]
  %s6 = inlined_call_operand.hbm [shape: f32[4,32], index: 6, kind: output, shape index: {}]
  %s7 = sld [smem:[#allocation0]]
  $region34: #{hierarchical_transformer_forward.7} parent=0
    _
  %s9 = ssub.s32 1, %s7
  %s10 = scalar_select 0, %s9, %s7
  %v11 = vstv %s5
  %12 = vst [vmem:[#allocation2] sm:$0x1] %v11
  $region1: #{hierarchical_transformer_forward.7} parent=0
    #allocation3 [shape = 'u8[2048]{0}', space=vmem, size = 0x800, scoped, tag = 'output window, operand 0, single buffered']
    #allocation4 [shape = 's32[1]{0}', space=sflag, size = 0x4, scoped, tag = 'scoped memory for hierarchical_transformer_forward.7']
    %13 = vsyncpa [#allocation4], 0
    // Predicated region
    $region2: #{hierarchical_transformer_forward.7} parent=1 // pred_check
      _
    $region3: #{hierarchical_transformer_forward.7} parent=1 // pred_check_branch
      %15 = sbr.rel (0) target = $region5
    $region4: #{hierarchical_transformer_forward.7} parent=1 // pred_region
      _
    $region5: #{hierarchical_transformer_forward.7} parent=1 // pred_fallthru
      _
    // Predicated region
    $region6: #{hierarchical_transformer_forward.7} parent=1 // pred_check
      _
    $region7: #{hierarchical_transformer_forward.7} parent=1 // pred_check_branch
      %17 = sbr.rel (0) target = $region9
    $region8: #{hierarchical_transformer_forward.7} parent=1 // pred_region
      _
    $region9: #{hierarchical_transformer_forward.7} parent=1 // pred_fallthru
      _
    // Predicated region
    $region10: #{hierarchical_transformer_forward.7} parent=1 // pred_check
      _
    $region11: #{hierarchical_transformer_forward.7} parent=1 // pred_check_branch
      %19 = sbr.rel (0) target = $region13
    $region12: #{hierarchical_transformer_forward.7} parent=1 // pred_region
      _
    $region13: #{hierarchical_transformer_forward.7} parent=1 // pred_fallthru
      _
    // Predicated region
    $region14: #{hierarchical_transformer_forward.7} parent=1 // pred_check
      _
    $region15: #{hierarchical_transformer_forward.7} parent=1 // pred_check_branch
      %21 = sbr.rel (0) target = $region17
    $region16: #{hierarchical_transformer_forward.7} parent=1 // pred_region
      _
    $region17: #{hierarchical_transformer_forward.7} parent=1 // pred_fallthru
      _
    // Predicated region
    $region18: #{hierarchical_transformer_forward.7} parent=1 // pred_check
      _
    $region19: #{hierarchical_transformer_forward.7} parent=1 // pred_check_branch
      %23 = sbr.rel (0) target = $region21
    $region20: #{hierarchical_transformer_forward.7} parent=1 // pred_region
      _
    $region21: #{hierarchical_transformer_forward.7} parent=1 // pred_fallthru
      _
    // Predicated region
    $region22: #{hierarchical_transformer_forward.7} parent=1 // pred_check
      _
    $region23: #{hierarchical_transformer_forward.7} parent=1 // pred_check_branch
      %25 = sbr.rel (0) target = $region25
    $region24: #{hierarchical_transformer_forward.7} parent=1 // pred_region
      _
    $region25: #{hierarchical_transformer_forward.7} parent=1 // pred_fallthru
      _
    %v26 = vld [vmem:[%s0] sm:$0xff]
    %v27 = vld [vmem:[%s0 + $0x8] sm:$0xff]
    %v28 = vld [vmem:[%s1] sm:$0x1]
    %v29 = vld [vmem:[%s2] sm:$0x1]
    %vm30 = vcmask 261120
    %v31 = vsel %vm30, %v26, 0.0
    %32 = vadd.xlane.f32.xlu0 %v31
    %v33 = vpop.xlane.xlu0 %32
    %v34 = vsel %vm30, %v27, 0.0
    %35 = vadd.xlane.f32.xlu0 %v34
    %v36 = vpop.xlane.xlu0 %35
    %v37 = vrcp.pop 32.0
    %v38 = vmul.f32 %v33, %v37
    %v39 = vmul.f32 %v36, %v37
    %v40 = vsub.f32 %v26, %v38
    %v41 = vsub.f32 %v27, %v39
    %v42 = vmul.f32 %v40, %v40
    %v43 = vmul.f32 %v41, %v41
    %v44 = vsel %vm30, %v42, 0.0
    %45 = vadd.xlane.f32.xlu0 %v44
    %v46 = vpop.xlane.xlu0 %45
    %v47 = vsel %vm30, %v43, 0.0
    %48 = vadd.xlane.f32.xlu0 %v47
    %v49 = vpop.xlane.xlu0 %48
    %v50 = vmul.f32 %v46, %v37
    %v51 = vmul.f32 %v49, %v37
    %v52 = vadd.f32 %v50, 1e-05
    %v53 = vadd.f32 %v51, 1e-05
    %v54 = vrsqrt.pop %v52
    %v55 = vrsqrt.pop %v53
    %v56 = vmul.f32 %v40, %v54
    %v57 = vmul.f32 %v41, %v55
    %v59 = vlaneseq
    %v60 = vshrl.u32 %v59, 7
    %v61 = vsub.s32 0, %v60
    %v62 = vrot.slane %v28, %v61
    %v64 = vmul.f32 %v56, %v62
    %v65 = vmul.f32 %v57, %v62
    %v67 = vlaneseq
    %v68 = vshrl.u32 %v67, 7
    %v69 = vsub.s32 0, %v68
    %v70 = vrot.slane %v29, %v69
    %v72 = vadd.f32 %v64, %v70
    %v73 = vadd.f32 %v65, %v70
    %v74 = vld [vmem:[%s3] sm:$0x1]
    %v76 = vlaneseq
    %v77 = vshrl.u32 %v76, 7
    %v78 = vsub.s32 0, %v77
    %v79 = vrot.slane %v74, %v78
    %v81 = vmul.f32 %v72, %v79
    %v82 = vmul.f32 %v73, %v79
    %v83 = vsel %vm30, %v81, 0.0
    %84 = vadd.xlane.f32.xlu0 %v83
    %v85 = vpop.xlane.xlu0 %84
    %v86 = vsel %vm30, %v82, 0.0
    %87 = vadd.xlane.f32.xlu0 %v86
    %v88 = vpop.xlane.xlu0 %87
    %v89 = vld [vmem:[%s4] sm:$0x1]
    %v91 = vlaneseq
    %v92 = vshrl.u32 %v91, 7
    %v93 = vsub.s32 0, %v92
    %v94 = vrot.slane %v89, %v93
    %v96 = vmul.f32 %v72, %v94
    %v97 = vmul.f32 %v73, %v94
    %v98 = vsel %vm30, %v96, 0.0
    %99 = vadd.xlane.f32.xlu0 %v98
    %v100 = vpop.xlane.xlu0 %99
    %v101 = vsel %vm30, %v97, 0.0
    %102 = vadd.xlane.f32.xlu0 %v101
    %v103 = vpop.xlane.xlu0 %102
    %v104 = vld [vmem:[#allocation2] sm:$0x1]
    %v106 = vrot.slane %v85, 7
    %v108 = vadd.f32 %v100, %v106
    %v110 = vlaneseq
    %v111 = vshrl.u32 %v110, 7
    %v112 = vsub.s32 0, %v111
    %v113 = vrot.slane %v104, %v112
    %v115 = vadd.f32 %v108, %v113
    %v116 = vrot.slane %v85, 6
    %v118 = vadd.f32 %v100, %v116
    %v119 = vadd.f32 %v118, %v113
    %v120 = vrot.slane %v85, 5
    %v122 = vadd.f32 %v100, %v120
    %v123 = vadd.f32 %v122, %v113
    %v125 = vrot.slane %v119, 1
    %v127 = vmax.f32 %v115, %v125
    %v129 = vrot.slane %v123, 2
    %v131 = vmax.f32 %v127, %v129
    %v132 = vsub.f32 %v115, %v131
    %v133 = vmul.f32 %v132, 1.442695
    %v134 = vpow.pop %v133
    %v136 = vrot.slane %v131, 7
    %v138 = vsub.f32 %v119, %v136
    %v139 = vmul.f32 %v138, 1.442695
    %v140 = vpow.pop %v139
    %v141 = vrot.slane %v131, 6
    %v143 = vsub.f32 %v123, %v141
    %v144 = vmul.f32 %v143, 1.442695
    %v145 = vpow.pop %v144
    %v147 = vrot.slane %v140, 1
    %v149 = vadd.f32 %v134, %v147
    %v151 = vrot.slane %v145, 2
    %v153 = vadd.f32 %v149, %v151
    %155 = vset.pattern.permute.xlu0 0
    %156 = vperm.xlu0 %155, %v134
    %v157 = vpop.permute.xlu0 %156
    %v159 = vmul.f32 %v157, %v72
    %160 = vset.pattern.permute.xlu0 0
    %161 = vperm.xlu0 %160, %v140
    %v162 = vpop.permute.xlu0 %161
    %v164 = vmul.f32 %v162, %v72
    %v166 = vrot.slane %v164, 1
    %v168 = vadd.f32 %v159, %v166
    %169 = vset.pattern.permute.xlu0 0
    %170 = vperm.xlu0 %169, %v145
    %v171 = vpop.permute.xlu0 %170
    %v173 = vmul.f32 %v171, %v72
    %v175 = vrot.slane %v173, 2
    %v177 = vadd.f32 %v168, %v175
    %179 = vset.pattern.permute.xlu0 0
    %180 = vperm.xlu0 %179, %v153
    %v181 = vpop.permute.xlu0 %180
    %v183 = vrcp.pop %v181
    %v184 = vmul.f32 %v177, %v183
    %v186 = vrot.slane %v184, 1
    %v188 = vadd.f32 %v72, %v186
    %vm189 = vcmask 253952
    %190 = vst.msk [vmem:[#allocation3] sm:$0x1] %vm189, %v188
    %vm191 = vcmask 258052
    %192 = vst.msk [vmem:[#allocation3 - $0x3] sm:$0x10] %vm191, %v188
    %v194 = vrot.slane %v88, 7
    %v196 = vadd.f32 %v103, %v194
    %v197 = vadd.f32 %v196, %v113
    %v198 = vrot.slane %v88, 6
    %v200 = vadd.f32 %v103, %v198
    %v201 = vadd.f32 %v200, %v113
    %v202 = vrot.slane %v88, 5
    %v204 = vadd.f32 %v103, %v202
    %v205 = vadd.f32 %v204, %v113
    %v207 = vrot.slane %v201, 1
    %v209 = vmax.f32 %v197, %v207
    %v211 = vrot.slane %v205, 2
    %v213 = vmax.f32 %v209, %v211
    %v214 = vsub.f32 %v197, %v213
    %v215 = vmul.f32 %v214, 1.442695
    %v216 = vpow.pop %v215
    %v218 = vrot.slane %v213, 7
    %v220 = vsub.f32 %v201, %v218
    %v221 = vmul.f32 %v220, 1.442695
    %v222 = vpow.pop %v221
    %v223 = vrot.slane %v213, 6
    %v225 = vsub.f32 %v205, %v223
    %v226 = vmul.f32 %v225, 1.442695
    %v227 = vpow.pop %v226
    %v229 = vrot.slane %v222, 1
    %v231 = vadd.f32 %v216, %v229
    %v233 = vrot.slane %v227, 2
    %v235 = vadd.f32 %v231, %v233
    %237 = vset.pattern.permute.xlu0 0
    %238 = vperm.xlu0 %237, %v216
    %v239 = vpop.permute.xlu0 %238
    %v241 = vmul.f32 %v239, %v73
    %242 = vset.pattern.permute.xlu0 0
    %243 = vperm.xlu0 %242, %v222
    %v244 = vpop.permute.xlu0 %243
    %v246 = vmul.f32 %v244, %v73
    %v248 = vrot.slane %v246, 1
    %v250 = vadd.f32 %v241, %v248
    %251 = vset.pattern.permute.xlu0 0
    %252 = vperm.xlu0 %251, %v227
    %v253 = vpop.permute.xlu0 %252
    %v255 = vmul.f32 %v253, %v73
    %v257 = vrot.slane %v255, 2
    %v259 = vadd.f32 %v250, %v257
    %261 = vset.pattern.permute.xlu0 0
    %262 = vperm.xlu0 %261, %v235
    %v263 = vpop.permute.xlu0 %262
    %v265 = vrcp.pop %v263
    %v266 = vmul.f32 %v259, %v265
    %v268 = vrot.slane %v266, 1
    %v270 = vadd.f32 %v73, %v268
    %271 = vst.msk [vmem:[#allocation3 + $0x2] sm:$0x1] %vm189, %v270
    %272 = vst.msk [vmem:[#allocation3 - $0x1] sm:$0x10] %vm191, %v270
    // Predicated region
    $region26: #{hierarchical_transformer_forward.7} parent=1 // pred_check
      _
    $region27: #{hierarchical_transformer_forward.7} parent=1 // pred_check_branch
      %274 = sbr.rel (0) target = $region29
    $region28: #{hierarchical_transformer_forward.7} parent=1 // pred_region
      %s276 = ssub.s32 64, 64
      %277 = vsyncadd [#allocation4], %s276
      %s279 = sshll.u32 [#allocation3], 4
      %s280 = int_to_ptr.vmem [resolvable:$true] %s279
      %282 = dma.vmem_to_hbm [thread:$0]  %s280, 64, %s6, [#allocation4]
    $region29: #{hierarchical_transformer_forward.7} parent=1 // pred_fallthru
      _
    // Predicated region
    $region30: #{hierarchical_transformer_forward.7} parent=1 // pred_check
      _
    $region31: #{hierarchical_transformer_forward.7} parent=1 // pred_check_branch
      %284 = sbr.rel (0) target = $region33
    $region32: #{hierarchical_transformer_forward.7} parent=1 // pred_region
      %285 = dma.done [#allocation4], 64
    $region33: #{hierarchical_transformer_forward.7} parent=1 // pred_fallthru
      _
    %286 = vsyncpa [#allocation4], 1

// kernel: hierarchical_transformer_forward.6
$region0: #{hierarchical_transformer_forward.6}
  #allocation0 [shape = 'u32[]', space=smem, size = 0x4, offset = 0x4, fixed_abs, tag = 'smem constant byte address 0x4 - core index']
  #allocation1 [shape = 'u32[144,128]{1,0:T(1,128)}', space=vmem, size = 0x12000, scoped, tag = 'internal scratch']
  #allocation2 [shape = 'bf16[1,1]{1,0:T(2,128)S(1)}', space=vmem, size = 0x200, scoped, tag = 'scoped memory for hierarchical_transformer_forward.6']
  #allocation3 [shape = 'f32[1,1]{1,0:T(1,128)S(1)}', space=vmem, size = 0x200, scoped, tag = 'scoped memory for hierarchical_transformer_forward.6']
  #allocation4 [shape = 'f32[1,1]{1,0:T(1,128)S(1)}', space=vmem, size = 0x200, scoped, tag = 'scoped memory for hierarchical_transformer_forward.6']
  #allocation5 [shape = 'f32[1,1]{1,0:T(1,128)S(1)}', space=vmem, size = 0x200, scoped, tag = 'scoped memory for hierarchical_transformer_forward.6']
  %s0 = inlined_call_operand.vmem [shape: f32[16,32], index: 0, kind: input, shape index: {}]
  %s1 = inlined_call_operand.<no memory space> [shape: bf16[1,1], index: 1, kind: input, shape index: {}]
  %s2 = inlined_call_operand.<no memory space> [shape: f32[1,1], index: 2, kind: input, shape index: {}, may-alias: {2,21,22}]
  %s3 = inlined_call_operand.vmem [shape: f32[16,16], index: 3, kind: input, shape index: {}]
  %s4 = inlined_call_operand.vmem [shape: f32[4,32], index: 4, kind: input, shape index: {}]
  %s5 = inlined_call_operand.vmem [shape: f32[1,32], index: 5, kind: input, shape index: {}]
  %s6 = inlined_call_operand.vmem [shape: f32[1,32], index: 6, kind: input, shape index: {}]
  %s7 = inlined_call_operand.vmem [shape: bf16[32,32], index: 7, kind: input, shape index: {}]
  %s8 = inlined_call_operand.vmem [shape: f32[1,32], index: 8, kind: input, shape index: {}]
  %s9 = inlined_call_operand.vmem [shape: bf16[32,32], index: 9, kind: input, shape index: {}]
  %s10 = inlined_call_operand.vmem [shape: f32[1,32], index: 10, kind: input, shape index: {}]
  %s11 = inlined_call_operand.vmem [shape: bf16[32,32], index: 11, kind: input, shape index: {}]
  %s12 = inlined_call_operand.vmem [shape: f32[1,32], index: 12, kind: input, shape index: {}]
  %s13 = inlined_call_operand.vmem [shape: bf16[32,32], index: 13, kind: input, shape index: {}]
  %s14 = inlined_call_operand.vmem [shape: f32[1,32], index: 14, kind: input, shape index: {}]
  %s15 = inlined_call_operand.vmem [shape: f32[1,32], index: 15, kind: input, shape index: {}]
  %s16 = inlined_call_operand.vmem [shape: f32[1,32], index: 16, kind: input, shape index: {}]
  %s17 = inlined_call_operand.vmem [shape: bf16[32,64], index: 17, kind: input, shape index: {}]
  %s18 = inlined_call_operand.vmem [shape: f32[1,64], index: 18, kind: input, shape index: {}]
  %s19 = inlined_call_operand.vmem [shape: bf16[64,32], index: 19, kind: input, shape index: {}]
  %s20 = inlined_call_operand.vmem [shape: f32[1,32], index: 20, kind: input, shape index: {}]
  %s21 = inlined_call_operand.<no memory space> [shape: f32[1,1], index: 21, kind: input, shape index: {}, may-alias: {2,21,22}]
  %s22 = inlined_call_operand.<no memory space> [shape: f32[1,1], index: 22, kind: input, shape index: {}, may-alias: {2,21,22}]
  %s23 = inlined_call_operand.vmem [shape: f32[16,32], index: 23, kind: output, shape index: {}]
  %s24 = sld [smem:[#allocation0]]
  $region102: #{hierarchical_transformer_forward.6} parent=0
    _
  %s26 = ssub.s32 1, %s24
  %s27 = scalar_select 0, %s26, %s24
  %v28 = vstv %s1
  %29 = vst [vmem:[#allocation2] sm:$0x1] %v28
  %v30 = vstv %s2
  %31 = vst [vmem:[#allocation3] sm:$0x1] %v30
  %v32 = vstv %s21
  %33 = vst [vmem:[#allocation4] sm:$0x1] %v32
  %v34 = vstv %s22
  %35 = vst [vmem:[#allocation5] sm:$0x1] %v34
  // Predicated region
  $region2: #{hierarchical_transformer_forward.6} parent=0 // pred_check
    _
  $region3: #{hierarchical_transformer_forward.6} parent=0 // pred_check_branch
    %37 = sbr.rel (0) target = $region5
  $region4: #{hierarchical_transformer_forward.6} parent=0 // pred_region
    _
  $region5: #{hierarchical_transformer_forward.6} parent=0 // pred_fallthru
    _
  // Predicated region
  $region6: #{hierarchical_transformer_forward.6} parent=0 // pred_check
    _
  $region7: #{hierarchical_transformer_forward.6} parent=0 // pred_check_branch
    %39 = sbr.rel (0) target = $region9
  $region8: #{hierarchical_transformer_forward.6} parent=0 // pred_region
    _
  $region9: #{hierarchical_transformer_forward.6} parent=0 // pred_fallthru
    _
  // Predicated region
  $region10: #{hierarchical_transformer_forward.6} parent=0 // pred_check
    _
  $region11: #{hierarchical_transformer_forward.6} parent=0 // pred_check_branch
    %41 = sbr.rel (0) target = $region13
  $region12: #{hierarchical_transformer_forward.6} parent=0 // pred_region
    _
  $region13: #{hierarchical_transformer_forward.6} parent=0 // pred_fallthru
    _
  // Predicated region
  $region14: #{hierarchical_transformer_forward.6} parent=0 // pred_check
    _
  $region15: #{hierarchical_transformer_forward.6} parent=0 // pred_check_branch
    %43 = sbr.rel (0) target = $region17
  $region16: #{hierarchical_transformer_forward.6} parent=0 // pred_region
    _
  $region17: #{hierarchical_transformer_forward.6} parent=0 // pred_fallthru
    _
  // Predicated region
  $region18: #{hierarchical_transformer_forward.6} parent=0 // pred_check
    _
  $region19: #{hierarchical_transformer_forward.6} parent=0 // pred_check_branch
    %45 = sbr.rel (0) target = $region21
  $region20: #{hierarchical_transformer_forward.6} parent=0 // pred_region
    _
  $region21: #{hierarchical_transformer_forward.6} parent=0 // pred_fallthru
    _
  // Predicated region
  $region22: #{hierarchical_transformer_forward.6} parent=0 // pred_check
    _
  $region23: #{hierarchical_transformer_forward.6} parent=0 // pred_check_branch
    %47 = sbr.rel (0) target = $region25
  $region24: #{hierarchical_transformer_forward.6} parent=0 // pred_region
    _
  $region25: #{hierarchical_transformer_forward.6} parent=0 // pred_fallthru
    _
  // Predicated region
  $region26: #{hierarchical_transformer_forward.6} parent=0 // pred_check
    _
  $region27: #{hierarchical_transformer_forward.6} parent=0 // pred_check_branch
    %49 = sbr.rel (0) target = $region29
  $region28: #{hierarchical_transformer_forward.6} parent=0 // pred_region
    _
  $region29: #{hierarchical_transformer_forward.6} parent=0 // pred_fallthru
    _
  // Predicated region
  $region30: #{hierarchical_transformer_forward.6} parent=0 // pred_check
    _
  $region31: #{hierarchical_transformer_forward.6} parent=0 // pred_check_branch
    %51 = sbr.rel (0) target = $region33
  $region32: #{hierarchical_transformer_forward.6} parent=0 // pred_region
    _
  $region33: #{hierarchical_transformer_forward.6} parent=0 // pred_fallthru
    _
  // Predicated region
  $region34: #{hierarchical_transformer_forward.6} parent=0 // pred_check
    _
  $region35: #{hierarchical_transformer_forward.6} parent=0 // pred_check_branch
    %53 = sbr.rel (0) target = $region37
  $region36: #{hierarchical_transformer_forward.6} parent=0 // pred_region
    _
  $region37: #{hierarchical_transformer_forward.6} parent=0 // pred_fallthru
    _
  // Predicated region
  $region38: #{hierarchical_transformer_forward.6} parent=0 // pred_check
    _
  $region39: #{hierarchical_transformer_forward.6} parent=0 // pred_check_branch
    %55 = sbr.rel (0) target = $region41
  $region40: #{hierarchical_transformer_forward.6} parent=0 // pred_region
    _
  $region41: #{hierarchical_transformer_forward.6} parent=0 // pred_fallthru
    _
  // Predicated region
  $region42: #{hierarchical_transformer_forward.6} parent=0 // pred_check
    _
  $region43: #{hierarchical_transformer_forward.6} parent=0 // pred_check_branch
    %57 = sbr.rel (0) target = $region45
  $region44: #{hierarchical_transformer_forward.6} parent=0 // pred_region
    _
  $region45: #{hierarchical_transformer_forward.6} parent=0 // pred_fallthru
    _
  // Predicated region
  $region46: #{hierarchical_transformer_forward.6} parent=0 // pred_check
    _
  $region47: #{hierarchical_transformer_forward.6} parent=0 // pred_check_branch
    %59 = sbr.rel (0) target = $region49
  $region48: #{hierarchical_transformer_forward.6} parent=0 // pred_region
    _
  $region49: #{hierarchical_transformer_forward.6} parent=0 // pred_fallthru
    _
  // Predicated region
  $region50: #{hierarchical_transformer_forward.6} parent=0 // pred_check
    _
  $region51: #{hierarchical_transformer_forward.6} parent=0 // pred_check_branch
    %61 = sbr.rel (0) target = $region53
  $region52: #{hierarchical_transformer_forward.6} parent=0 // pred_region
    _
  $region53: #{hierarchical_transformer_forward.6} parent=0 // pred_fallthru
    _
  // Predicated region
  $region54: #{hierarchical_transformer_forward.6} parent=0 // pred_check
    _
  $region55: #{hierarchical_transformer_forward.6} parent=0 // pred_check_branch
    %63 = sbr.rel (0) target = $region57
  $region56: #{hierarchical_transformer_forward.6} parent=0 // pred_region
    _
  $region57: #{hierarchical_transformer_forward.6} parent=0 // pred_fallthru
    _
  // Predicated region
  $region58: #{hierarchical_transformer_forward.6} parent=0 // pred_check
    _
  $region59: #{hierarchical_transformer_forward.6} parent=0 // pred_check_branch
    %65 = sbr.rel (0) target = $region61
  $region60: #{hierarchical_transformer_forward.6} parent=0 // pred_region
    _
  $region61: #{hierarchical_transformer_forward.6} parent=0 // pred_fallthru
    _
  // Predicated region
  $region62: #{hierarchical_transformer_forward.6} parent=0 // pred_check
    _
  $region63: #{hierarchical_transformer_forward.6} parent=0 // pred_check_branch
    %67 = sbr.rel (0) target = $region65
  $region64: #{hierarchical_transformer_forward.6} parent=0 // pred_region
    _
  $region65: #{hierarchical_transformer_forward.6} parent=0 // pred_fallthru
    _
  // Predicated region
  $region66: #{hierarchical_transformer_forward.6} parent=0 // pred_check
    _
  $region67: #{hierarchical_transformer_forward.6} parent=0 // pred_check_branch
    %69 = sbr.rel (0) target = $region69
  $region68: #{hierarchical_transformer_forward.6} parent=0 // pred_region
    _
  $region69: #{hierarchical_transformer_forward.6} parent=0 // pred_fallthru
    _
  // Predicated region
  $region70: #{hierarchical_transformer_forward.6} parent=0 // pred_check
    _
  $region71: #{hierarchical_transformer_forward.6} parent=0 // pred_check_branch
    %71 = sbr.rel (0) target = $region73
  $region72: #{hierarchical_transformer_forward.6} parent=0 // pred_region
    _
  $region73: #{hierarchical_transformer_forward.6} parent=0 // pred_fallthru
    _
  // Predicated region
  $region74: #{hierarchical_transformer_forward.6} parent=0 // pred_check
    _
  $region75: #{hierarchical_transformer_forward.6} parent=0 // pred_check_branch
    %73 = sbr.rel (0) target = $region77
  $region76: #{hierarchical_transformer_forward.6} parent=0 // pred_region
    _
  $region77: #{hierarchical_transformer_forward.6} parent=0 // pred_fallthru
    _
  // Predicated region
  $region78: #{hierarchical_transformer_forward.6} parent=0 // pred_check
    _
  $region79: #{hierarchical_transformer_forward.6} parent=0 // pred_check_branch
    %75 = sbr.rel (0) target = $region81
  $region80: #{hierarchical_transformer_forward.6} parent=0 // pred_region
    _
  $region81: #{hierarchical_transformer_forward.6} parent=0 // pred_fallthru
    _
  // Predicated region
  $region82: #{hierarchical_transformer_forward.6} parent=0 // pred_check
    _
  $region83: #{hierarchical_transformer_forward.6} parent=0 // pred_check_branch
    %77 = sbr.rel (0) target = $region85
  $region84: #{hierarchical_transformer_forward.6} parent=0 // pred_region
    _
  $region85: #{hierarchical_transformer_forward.6} parent=0 // pred_fallthru
    _
  // Predicated region
  $region86: #{hierarchical_transformer_forward.6} parent=0 // pred_check
    _
  $region87: #{hierarchical_transformer_forward.6} parent=0 // pred_check_branch
    %79 = sbr.rel (0) target = $region89
  $region88: #{hierarchical_transformer_forward.6} parent=0 // pred_region
    _
  $region89: #{hierarchical_transformer_forward.6} parent=0 // pred_fallthru
    _
  // Predicated region
  $region90: #{hierarchical_transformer_forward.6} parent=0 // pred_check
    _
  $region91: #{hierarchical_transformer_forward.6} parent=0 // pred_check_branch
    %81 = sbr.rel (0) target = $region93
  $region92: #{hierarchical_transformer_forward.6} parent=0 // pred_region
    _
  $region93: #{hierarchical_transformer_forward.6} parent=0 // pred_fallthru
    _
  %v83 = vld [vmem:[%s0] sm:$0xff]
  %v84 = vld [vmem:[%s0 + $0x8] sm:$0xff]
  %v85 = vld [vmem:[%s5] sm:$0x1]
  %v86 = vld [vmem:[%s6] sm:$0x1]
  %vm87 = vcmask 261120
  %v88 = vsel %vm87, %v83, 0.0
  %89 = vadd.xlane.f32.xlu0 %v88
  %v90 = vpop.xlane.xlu0 %89
  %v91 = vsel %vm87, %v84, 0.0
  %92 = vadd.xlane.f32.xlu0 %v91
  %v93 = vpop.xlane.xlu0 %92
  %v94 = vrcp.pop 32.0
  %v95 = vmul.f32 %v90, %v94
  %v96 = vmul.f32 %v93, %v94
  %v97 = vsub.f32 %v83, %v95
  %v98 = vsub.f32 %v84, %v96
  %v99 = vmul.f32 %v97, %v97
  %v100 = vmul.f32 %v98, %v98
  %v101 = vsel %vm87, %v99, 0.0
  %102 = vadd.xlane.f32.xlu0 %v101
  %v103 = vpop.xlane.xlu0 %102
  %v104 = vsel %vm87, %v100, 0.0
  %105 = vadd.xlane.f32.xlu0 %v104
  %v106 = vpop.xlane.xlu0 %105
  %v107 = vmul.f32 %v103, %v94
  %v108 = vmul.f32 %v106, %v94
  %v109 = vadd.f32 %v107, 1e-05
  %v110 = vadd.f32 %v108, 1e-05
  %v111 = vrsqrt.pop %v109
  %v112 = vrsqrt.pop %v110
  %v113 = vmul.f32 %v97, %v111
  %v114 = vmul.f32 %v98, %v112
  %v116 = vlaneseq
  %v117 = vshrl.u32 %v116, 7
  %v118 = vsub.s32 0, %v117
  %v119 = vrot.slane %v85, %v118
  %v121 = vmul.f32 %v113, %v119
  %v122 = vmul.f32 %v114, %v119
  %v124 = vlaneseq
  %v125 = vshrl.u32 %v124, 7
  %v126 = vsub.s32 0, %v125
  %v127 = vrot.slane %v86, %v126
  %v129 = vadd.f32 %v121, %v127
  %v130 = vadd.f32 %v122, %v127
  %v131 = vpack.c.bf16 %v130, %v129
  %v132 = vld [vmem:[%s7] sm:$0xf]
  %v133 = vld [vmem:[%s7 + $0x4] sm:$0xf]
  %v134 = vld [vmem:[%s7 + $0x8] sm:$0xf]
  %v135 = vld [vmem:[%s7 + $0xc] sm:$0xf]
  %v136 = vld [vmem:[%s8] sm:$0x1]
  %v138 = vlaneseq
  %v139 = vshrl.u32 %v138, 7
  %v140 = vsub.s32 0, %v139
  %v141 = vrot.slane %v136, %v140
  %v147 = vunpack.c.l.b16 %v132
  %v148 = vunpack.c.l.b16 %v133
  %v149 = vunpack.c.l.b16 %v134
  %v150 = vunpack.c.l.b16 %v135
  %v151 = vpack.c.b16 %v148, %v147
  %v152 = vpack.c.b16 %v150, %v149
  %v156 = vsel %vm87, %v131, 0
  %158 = vmatprep.subr.bf16.mxu0 0
  %159 = vmatpush1.bf16.msra.mxu0 0
  %160 = vmatprep.subr.bf16.mxu0 0
  %161 = vmatpush1.bf16.msra.mxu0 0
  %162 = vmatprep.subr.bf16.mxu0 0
  %163 = vmatpush1.bf16.msra.mxu0 0
  %164 = vmatprep.subr.bf16.mxu0 0
  %165 = vmatpush1.bf16.msra.mxu0 0
  %166 = vmatprep.subr.bf16.mxu0 0
  %167 = vmatpush1.bf16.msra.mxu0 0
  %168 = vmatprep.subr.bf16.mxu0 0
  %169 = vmatpush1.bf16.msra.mxu0 0
  %170 = vmatprep.subr.bf16.mxu0 0
  %171 = vmatpush1.bf16.msra.mxu0 %v152
  %172 = vmatprep.subr.bf16.mxu0 0
  %173 = vmatpush1.bf16.msra.mxu0 %v151
  %174 = vmatprep.subr.bf16.mxu0 0
  %175 = vmatpush2.bf16.msra.mxu0 0
  %176 = vmatprep.subr.bf16.mxu0 0
  %177 = vmatpush2.bf16.msra.mxu0 0
  %178 = vmatprep.subr.bf16.mxu0 0
  %179 = vmatpush2.bf16.msra.mxu0 0
  %180 = vmatprep.subr.bf16.mxu0 0
  %181 = vmatpush2.bf16.msra.mxu0 0
  %182 = vmatprep.subr.bf16.mxu0 0
  %183 = vmatpush2.bf16.msra.mxu0 0
  %184 = vmatprep.subr.bf16.mxu0 0
  %185 = vmatpush2.bf16.msra.mxu0 0
  %186 = vmatprep.subr.bf16.mxu0 0
  %187 = vmatpush2.bf16.msra.mxu0 0
  %188 = vmatprep.subr.bf16.mxu0 0
  %189 = vmatpush2.bf16.msra.mxu0 0
  %190 = vmatprep.mubr.bf16.mxu0 0
  %191 = vmatmul.mubr.bf16.gmra.mxu0 %v156
  %v192 = vpop.f32.mrf.mxu0
  %v193 = vadd.f32 %v141, %v192
  %v194 = vpop.f32.mrf.mxu0
  %v195 = vpop.f32.mrf.mxu0
  %v196 = vadd.f32 %v141, %v195
  %v197 = vpop.f32.mrf.mxu0
  %198 = vdwg.mxu0
  %v199 = vld [vmem:[%s9] sm:$0xf]
  %v200 = vld [vmem:[%s9 + $0x4] sm:$0xf]
  %v201 = vld [vmem:[%s9 + $0x8] sm:$0xf]
  %v202 = vld [vmem:[%s9 + $0xc] sm:$0xf]
  %v203 = vld [vmem:[%s10] sm:$0x1]
  %v205 = vlaneseq
  %v206 = vshrl.u32 %v205, 7
  %v207 = vsub.s32 0, %v206
  %v208 = vrot.slane %v203, %v207
  %v214 = vunpack.c.l.b16 %v199
  %v215 = vunpack.c.l.b16 %v200
  %v216 = vunpack.c.l.b16 %v201
  %v217 = vunpack.c.l.b16 %v202
  %v218 = vpack.c.b16 %v215, %v214
  %v219 = vpack.c.b16 %v217, %v216
  %222 = vmatprep.subr.bf16.mxu0 0
  %223 = vmatpush1.bf16.msra.mxu0 0
  %224 = vmatprep.subr.bf16.mxu0 0
  %225 = vmatpush1.bf16.msra.mxu0 0
  %226 = vmatprep.subr.bf16.mxu0 0
  %227 = vmatpush1.bf16.msra.mxu0 0
  %228 = vmatprep.subr.bf16.mxu0 0
  %229 = vmatpush1.bf16.msra.mxu0 0
  %230 = vmatprep.subr.bf16.mxu0 0
  %231 = vmatpush1.bf16.msra.mxu0 0
  %232 = vmatprep.subr.bf16.mxu0 0
  %233 = vmatpush1.bf16.msra.mxu0 0
  %234 = vmatprep.subr.bf16.mxu0 0
  %235 = vmatpush1.bf16.msra.mxu0 %v219
  %236 = vmatprep.subr.bf16.mxu0 0
  %237 = vmatpush1.bf16.msra.mxu0 %v218
  %238 = vmatprep.subr.bf16.mxu0 0
  %239 = vmatpush2.bf16.msra.mxu0 0
  %240 = vmatprep.subr.bf16.mxu0 0
  %241 = vmatpush2.bf16.msra.mxu0 0
  %242 = vmatprep.subr.bf16.mxu0 0
  %243 = vmatpush2.bf16.msra.mxu0 0
  %244 = vmatprep.subr.bf16.mxu0 0
  %245 = vmatpush2.bf16.msra.mxu0 0
  %246 = vmatprep.subr.bf16.mxu0 0
  %247 = vmatpush2.bf16.msra.mxu0 0
  %248 = vmatprep.subr.bf16.mxu0 0
  %249 = vmatpush2.bf16.msra.mxu0 0
  %250 = vmatprep.subr.bf16.mxu0 0
  %251 = vmatpush2.bf16.msra.mxu0 0
  %252 = vmatprep.subr.bf16.mxu0 0
  %253 = vmatpush2.bf16.msra.mxu0 0
  %254 = vmatprep.mubr.bf16.mxu0 0
  %255 = vmatmul.mubr.bf16.gmra.mxu0 %v156
  %v256 = vpop.f32.mrf.mxu0
  %v257 = vadd.f32 %v208, %v256
  %v258 = vpop.f32.mrf.mxu0
  %v259 = vpop.f32.mrf.mxu0
  %v260 = vadd.f32 %v208, %v259
  %v261 = vpop.f32.mrf.mxu0
  %262 = vdwg.mxu0
  %v263 = vld [vmem:[%s11] sm:$0xf]
  %v264 = vld [vmem:[%s11 + $0x4] sm:$0xf]
  %v265 = vld [vmem:[%s11 + $0x8] sm:$0xf]
  %v266 = vld [vmem:[%s11 + $0xc] sm:$0xf]
  %v267 = vld [vmem:[%s12] sm:$0x1]
  %v269 = vlaneseq
  %v270 = vshrl.u32 %v269, 7
  %v271 = vsub.s32 0, %v270
  %v272 = vrot.slane %v267, %v271
  %v278 = vunpack.c.l.b16 %v263
  %v279 = vunpack.c.l.b16 %v264
  %v280 = vunpack.c.l.b16 %v265
  %v281 = vunpack.c.l.b16 %v266
  %v282 = vpack.c.b16 %v279, %v278
  %v283 = vpack.c.b16 %v281, %v280
  %286 = vmatprep.subr.bf16.mxu0 0
  %287 = vmatpush1.bf16.msra.mxu0 0
  %288 = vmatprep.subr.bf16.mxu0 0
  %289 = vmatpush1.bf16.msra.mxu0 0
  %290 = vmatprep.subr.bf16.mxu0 0
  %291 = vmatpush1.bf16.msra.mxu0 0
  %292 = vmatprep.subr.bf16.mxu0 0
  %293 = vmatpush1.bf16.msra.mxu0 0
  %294 = vmatprep.subr.bf16.mxu0 0
  %295 = vmatpush1.bf16.msra.mxu0 0
  %296 = vmatprep.subr.bf16.mxu0 0
  %297 = vmatpush1.bf16.msra.mxu0 0
  %298 = vmatprep.subr.bf16.mxu0 0
  %299 = vmatpush1.bf16.msra.mxu0 %v283
  %300 = vmatprep.subr.bf16.mxu0 0
  %301 = vmatpush1.bf16.msra.mxu0 %v282
  %302 = vmatprep.subr.bf16.mxu0 0
  %303 = vmatpush2.bf16.msra.mxu0 0
  %304 = vmatprep.subr.bf16.mxu0 0
  %305 = vmatpush2.bf16.msra.mxu0 0
  %306 = vmatprep.subr.bf16.mxu0 0
  %307 = vmatpush2.bf16.msra.mxu0 0
  %308 = vmatprep.subr.bf16.mxu0 0
  %309 = vmatpush2.bf16.msra.mxu0 0
  %310 = vmatprep.subr.bf16.mxu0 0
  %311 = vmatpush2.bf16.msra.mxu0 0
  %312 = vmatprep.subr.bf16.mxu0 0
  %313 = vmatpush2.bf16.msra.mxu0 0
  %314 = vmatprep.subr.bf16.mxu0 0
  %315 = vmatpush2.bf16.msra.mxu0 0
  %316 = vmatprep.subr.bf16.mxu0 0
  %317 = vmatpush2.bf16.msra.mxu0 0
  %318 = vmatprep.mubr.bf16.mxu0 0
  %319 = vmatmul.mubr.bf16.gmra.mxu0 %v156
  %v320 = vpop.f32.mrf.mxu0
  %v321 = vadd.f32 %v272, %v320
  %v322 = vpop.f32.mrf.mxu0
  %v323 = vpop.f32.mrf.mxu0
  %v324 = vadd.f32 %v272, %v323
  %v325 = vpop.f32.mrf.mxu0
  %326 = vdwg.mxu0
  %v327 = vld [vmem:[%s3] sm:$0xff]
  %v328 = vld [vmem:[%s3 + $0x8] sm:$0xff]
  %v329 = vld [vmem:[%s4] sm:$0xf]
  %v330 = vpack.c.bf16 %v260, %v257
  %v331 = vmul.f32 %v193, 0.35355338
  %v332 = vmul.f32 %v196, 0.35355338
  %v333 = vlaneseq
  %v334 = vshrl.u32 %v333, 7
  %v335 = vsub.s32 0, %v334
  %v336 = vrot.slane %v329, %v335
  %v337 = vmul.f32 %v331, %v336
  %v338 = vmul.f32 %v332, %v336
  %v339 = vpack.c.bf16 %v338, %v337
  %v341 = vsel %vm87, %v339, 0
  %v344 = vsel %vm87, %v330, 0
  %346 = vmatprep.subr.bf16.mxu0 0
  %347 = vmatpush1.bf16.xpose.msra.mxu0 0
  %348 = vmatprep.subr.bf16.mxu0 0
  %349 = vmatpush1.bf16.xpose.msra.mxu0 0
  %350 = vmatprep.subr.bf16.mxu0 0
  %351 = vmatpush1.bf16.xpose.msra.mxu0 0
  %352 = vmatprep.subr.bf16.mxu0 0
  %353 = vmatpush1.bf16.xpose.msra.mxu0 0
  %354 = vmatprep.subr.bf16.mxu0 0
  %355 = vmatpush1.bf16.xpose.msra.mxu0 0
  %356 = vmatprep.subr.bf16.mxu0 0
  %357 = vmatpush1.bf16.xpose.msra.mxu0 0
  %358 = vmatprep.subr.bf16.mxu0 0
  %359 = vmatpush1.bf16.xpose.msra.mxu0 0
  %360 = vmatprep.subr.bf16.mxu0 0
  %361 = vmatpush1.bf16.xpose.msra.mxu0 %v344
  %362 = vmatprep.subr.bf16.mxu0 0
  %363 = vmatpush2.bf16.xpose.msra.mxu0 0
  %364 = vmatprep.subr.bf16.mxu0 0
  %365 = vmatpush2.bf16.xpose.msra.mxu0 0
  %366 = vmatprep.subr.bf16.mxu0 0
  %367 = vmatpush2.bf16.xpose.msra.mxu0 0
  %368 = vmatprep.subr.bf16.mxu0 0
  %369 = vmatpush2.bf16.xpose.msra.mxu0 0
  %370 = vmatprep.subr.bf16.mxu0 0
  %371 = vmatpush2.bf16.xpose.msra.mxu0 0
  %372 = vmatprep.subr.bf16.mxu0 0
  %373 = vmatpush2.bf16.xpose.msra.mxu0 0
  %374 = vmatprep.subr.bf16.mxu0 0
  %375 = vmatpush2.bf16.xpose.msra.mxu0 0
  %376 = vmatprep.subr.bf16.mxu0 0
  %377 = vmatpush2.bf16.xpose.msra.mxu0 0
  %378 = vmatprep.mubr.bf16.mxu0 0
  %379 = vmatmul.mubr.bf16.gmra.mxu0 %v341
  %v380 = vpop.f32.mrf.mxu0
  %v381 = vadd.f32 %v327, %v380
  %v382 = vpop.f32.mrf.mxu0
  %v383 = vpop.f32.mrf.mxu0
  %v384 = vadd.f32 %v328, %v383
  %v385 = vpop.f32.mrf.mxu0
  %386 = vdwg.mxu0
  %vm387 = vcmask 130048
  %v388 = vsel %vm387, %v381, -inf
  %389 = vmax.xlane.f32.xlu0 %v388
  %v390 = vpop.xlane.xlu0 %389
  %v391 = vsel %vm387, %v384, -inf
  %392 = vmax.xlane.f32.xlu0 %v391
  %v393 = vpop.xlane.xlu0 %392
  %v394 = vsub.f32 %v381, %v390
  %v395 = vsub.f32 %v384, %v393
  %v396 = vmul.f32 %v394, 1.442695
  %v397 = vpow.pop %v396
  %v398 = vmul.f32 %v395, 1.442695
  %v399 = vpow.pop %v398
  %v400 = vsel %vm387, %v397, 0.0
  %401 = vadd.xlane.f32.xlu0 %v400
  %v402 = vpop.xlane.xlu0 %401
  %v403 = vsel %vm387, %v399, 0.0
  %404 = vadd.xlane.f32.xlu0 %v403
  %v405 = vpop.xlane.xlu0 %404
  %v406 = vrcp.pop %v402
  %v407 = vmul.f32 %v397, %v406
  %v408 = vrcp.pop %v405
  %v409 = vmul.f32 %v399, %v408
  %v410 = vmul.f32 %v321, %v336
  %v411 = vmul.f32 %v324, %v336
  %v412 = vpack.c.bf16 %v411, %v410
  %v413 = vpack.c.bf16 %v409, %v407
  %v414 = vlaneseq
  %v415 = vshrl.u32 %v414, 7
  %v416 = vsub.s32 1, %v415
  %v417 = vrot.slane %v329, %v416
  %v418 = vmul.f32 %v331, %v417
  %v419 = vmul.f32 %v332, %v417
  %v420 = vpack.c.bf16 %v419, %v418
  %v422 = vsel %vm87, %v420, 0
  %424 = vmatprep.subr.bf16.mxu0 0
  %425 = vmatpush1.bf16.xpose.msra.mxu0 0
  %426 = vmatprep.subr.bf16.mxu0 0
  %427 = vmatpush1.bf16.xpose.msra.mxu0 0
  %428 = vmatprep.subr.bf16.mxu0 0
  %429 = vmatpush1.bf16.xpose.msra.mxu0 0
  %430 = vmatprep.subr.bf16.mxu0 0
  %431 = vmatpush1.bf16.xpose.msra.mxu0 0
  %432 = vmatprep.subr.bf16.mxu0 0
  %433 = vmatpush1.bf16.xpose.msra.mxu0 0
  %434 = vmatprep.subr.bf16.mxu0 0
  %435 = vmatpush1.bf16.xpose.msra.mxu0 0
  %436 = vmatprep.subr.bf16.mxu0 0
  %437 = vmatpush1.bf16.xpose.msra.mxu0 0
  %438 = vmatprep.subr.bf16.mxu0 0
  %439 = vmatpush1.bf16.xpose.msra.mxu0 %v344
  %440 = vmatprep.subr.bf16.mxu0 0
  %441 = vmatpush2.bf16.xpose.msra.mxu0 0
  %442 = vmatprep.subr.bf16.mxu0 0
  %443 = vmatpush2.bf16.xpose.msra.mxu0 0
  %444 = vmatprep.subr.bf16.mxu0 0
  %445 = vmatpush2.bf16.xpose.msra.mxu0 0
  %446 = vmatprep.subr.bf16.mxu0 0
  %447 = vmatpush2.bf16.xpose.msra.mxu0 0
  %448 = vmatprep.subr.bf16.mxu0 0
  %449 = vmatpush2.bf16.xpose.msra.mxu0 0
  %450 = vmatprep.subr.bf16.mxu0 0
  %451 = vmatpush2.bf16.xpose.msra.mxu0 0
  %452 = vmatprep.subr.bf16.mxu0 0
  %453 = vmatpush2.bf16.xpose.msra.mxu0 0
  %454 = vmatprep.subr.bf16.mxu0 0
  %455 = vmatpush2.bf16.xpose.msra.mxu0 0
  %456 = vmatprep.mubr.bf16.mxu0 0
  %457 = vmatmul.mubr.bf16.gmra.mxu0 %v422
  %v458 = vpop.f32.mrf.mxu0
  %v459 = vadd.f32 %v327, %v458
  %v460 = vpop.f32.mrf.mxu0
  %v461 = vpop.f32.mrf.mxu0
  %v462 = vadd.f32 %v328, %v461
  %v463 = vpop.f32.mrf.mxu0
  %464 = vdwg.mxu0
  %v465 = vsel %vm387, %v459, -inf
  %466 = vmax.xlane.f32.xlu0 %v465
  %v467 = vpop.xlane.xlu0 %466
  %v468 = vsel %vm387, %v462, -inf
  %469 = vmax.xlane.f32.xlu0 %v468
  %v470 = vpop.xlane.xlu0 %469
  %v471 = vsub.f32 %v459, %v467
  %v472 = vsub.f32 %v462, %v470
  %v473 = vmul.f32 %v471, 1.442695
  %v474 = vpow.pop %v473
  %v475 = vmul.f32 %v472, 1.442695
  %v476 = vpow.pop %v475
  %v477 = vsel %vm387, %v474, 0.0
  %478 = vadd.xlane.f32.xlu0 %v477
  %v479 = vpop.xlane.xlu0 %478
  %v480 = vsel %vm387, %v476, 0.0
  %481 = vadd.xlane.f32.xlu0 %v480
  %v482 = vpop.xlane.xlu0 %481
  %v483 = vrcp.pop %v479
  %v484 = vmul.f32 %v474, %v483
  %v485 = vrcp.pop %v482
  %v486 = vmul.f32 %v476, %v485
  %v487 = vmul.f32 %v321, %v417
  %v488 = vmul.f32 %v324, %v417
  %v489 = vpack.c.bf16 %v488, %v487
  %v490 = vpack.c.bf16 %v486, %v484
  %v492 = vsel %vm387, %v490, 0
  %494 = vmatprep.subr.bf16.mxu0 0
  %495 = vmatpush1.bf16.msra.mxu0 0
  %496 = vmatprep.subr.bf16.mxu0 0
  %497 = vmatpush1.bf16.msra.mxu0 0
  %498 = vmatprep.subr.bf16.mxu0 0
  %499 = vmatpush1.bf16.msra.mxu0 0
  %500 = vmatprep.subr.bf16.mxu0 0
  %501 = vmatpush1.bf16.msra.mxu0 0
  %502 = vmatprep.subr.bf16.mxu0 0
  %503 = vmatpush1.bf16.msra.mxu0 0
  %504 = vmatprep.subr.bf16.mxu0 0
  %505 = vmatpush1.bf16.msra.mxu0 0
  %506 = vmatprep.subr.bf16.mxu0 0
  %507 = vmatpush1.bf16.msra.mxu0 0
  %508 = vmatprep.subr.bf16.mxu0 0
  %509 = vmatpush1.bf16.msra.mxu0 %v489
  %510 = vmatprep.subr.bf16.mxu0 0
  %511 = vmatpush2.bf16.msra.mxu0 0
  %512 = vmatprep.subr.bf16.mxu0 0
  %513 = vmatpush2.bf16.msra.mxu0 0
  %514 = vmatprep.subr.bf16.mxu0 0
  %515 = vmatpush2.bf16.msra.mxu0 0
  %516 = vmatprep.subr.bf16.mxu0 0
  %517 = vmatpush2.bf16.msra.mxu0 0
  %518 = vmatprep.subr.bf16.mxu0 0
  %519 = vmatpush2.bf16.msra.mxu0 0
  %520 = vmatprep.subr.bf16.mxu0 0
  %521 = vmatpush2.bf16.msra.mxu0 0
  %522 = vmatprep.subr.bf16.mxu0 0
  %523 = vmatpush2.bf16.msra.mxu0 0
  %524 = vmatprep.subr.bf16.mxu0 0
  %525 = vmatpush2.bf16.msra.mxu0 0
  %526 = vmatprep.mubr.bf16.mxu0 0
  %527 = vmatmul.mubr.bf16.gmra.mxu0 %v492
  %v528 = vpop.f32.mrf.mxu0
  %v529 = vadd.f32 0.0, %v528
  %v530 = vpop.f32.mrf.mxu0
  %v531 = vpop.f32.mrf.mxu0
  %v532 = vadd.f32 0.0, %v531
  %v533 = vpop.f32.mrf.mxu0
  %534 = vdwg.mxu0
  %v536 = vsel %vm387, %v413, 0
  %538 = vmatprep.subr.bf16.mxu0 0
  %539 = vmatpush1.bf16.msra.mxu0 0
  %540 = vmatprep.subr.bf16.mxu0 0
  %541 = vmatpush1.bf16.msra.mxu0 0
  %542 = vmatprep.subr.bf16.mxu0 0
  %543 = vmatpush1.bf16.msra.mxu0 0
  %544 = vmatprep.subr.bf16.mxu0 0
  %545 = vmatpush1.bf16.msra.mxu0 0
  %546 = vmatprep.subr.bf16.mxu0 0
  %547 = vmatpush1.bf16.msra.mxu0 0
  %548 = vmatprep.subr.bf16.mxu0 0
  %549 = vmatpush1.bf16.msra.mxu0 0
  %550 = vmatprep.subr.bf16.mxu0 0
  %551 = vmatpush1.bf16.msra.mxu0 0
  %552 = vmatprep.subr.bf16.mxu0 0
  %553 = vmatpush1.bf16.msra.mxu0 %v412
  %554 = vmatprep.subr.bf16.mxu0 0
  %555 = vmatpush2.bf16.msra.mxu0 0
  %556 = vmatprep.subr.bf16.mxu0 0
  %557 = vmatpush2.bf16.msra.mxu0 0
  %558 = vmatprep.subr.bf16.mxu0 0
  %559 = vmatpush2.bf16.msra.mxu0 0
  %560 = vmatprep.subr.bf16.mxu0 0
  %561 = vmatpush2.bf16.msra.mxu0 0
  %562 = vmatprep.subr.bf16.mxu0 0
  %563 = vmatpush2.bf16.msra.mxu0 0
  %564 = vmatprep.subr.bf16.mxu0 0
  %565 = vmatpush2.bf16.msra.mxu0 0
  %566 = vmatprep.subr.bf16.mxu0 0
  %567 = vmatpush2.bf16.msra.mxu0 0
  %568 = vmatprep.subr.bf16.mxu0 0
  %569 = vmatpush2.bf16.msra.mxu0 0
  %570 = vmatprep.mubr.bf16.mxu0 0
  %571 = vmatmul.mubr.bf16.gmra.mxu0 %v536
  %v572 = vpop.f32.mrf.mxu0
  %v573 = vadd.f32 %v529, %v572
  %v574 = vpop.f32.mrf.mxu0
  %v575 = vpop.f32.mrf.mxu0
  %v576 = vadd.f32 %v532, %v575
  %v577 = vpop.f32.mrf.mxu0
  %578 = vdwg.mxu0
  %v579 = vlaneseq
  %v580 = vshrl.u32 %v579, 7
  %v581 = vsub.s32 2, %v580
  %v582 = vrot.slane %v329, %v581
  %v583 = vmul.f32 %v331, %v582
  %v584 = vmul.f32 %v332, %v582
  %v585 = vpack.c.bf16 %v584, %v583
  %v587 = vsel %vm87, %v585, 0
  %589 = vmatprep.subr.bf16.mxu0 0
  %590 = vmatpush1.bf16.xpose.msra.mxu0 0
  %591 = vmatprep.subr.bf16.mxu0 0
  %592 = vmatpush1.bf16.xpose.msra.mxu0 0
  %593 = vmatprep.subr.bf16.mxu0 0
  %594 = vmatpush1.bf16.xpose.msra.mxu0 0
  %595 = vmatprep.subr.bf16.mxu0 0
  %596 = vmatpush1.bf16.xpose.msra.mxu0 0
  %597 = vmatprep.subr.bf16.mxu0 0
  %598 = vmatpush1.bf16.xpose.msra.mxu0 0
  %599 = vmatprep.subr.bf16.mxu0 0
  %600 = vmatpush1.bf16.xpose.msra.mxu0 0
  %601 = vmatprep.subr.bf16.mxu0 0
  %602 = vmatpush1.bf16.xpose.msra.mxu0 0
  %603 = vmatprep.subr.bf16.mxu0 0
  %604 = vmatpush1.bf16.xpose.msra.mxu0 %v344
  %605 = vmatprep.subr.bf16.mxu0 0
  %606 = vmatpush2.bf16.xpose.msra.mxu0 0
  %607 = vmatprep.subr.bf16.mxu0 0
  %608 = vmatpush2.bf16.xpose.msra.mxu0 0
  %609 = vmatprep.subr.bf16.mxu0 0
  %610 = vmatpush2.bf16.xpose.msra.mxu0 0
  %611 = vmatprep.subr.bf16.mxu0 0
  %612 = vmatpush2.bf16.xpose.msra.mxu0 0
  %613 = vmatprep.subr.bf16.mxu0 0
  %614 = vmatpush2.bf16.xpose.msra.mxu0 0
  %615 = vmatprep.subr.bf16.mxu0 0
  %616 = vmatpush2.bf16.xpose.msra.mxu0 0
  %617 = vmatprep.subr.bf16.mxu0 0
  %618 = vmatpush2.bf16.xpose.msra.mxu0 0
  %619 = vmatprep.subr.bf16.mxu0 0
  %620 = vmatpush2.bf16.xpose.msra.mxu0 0
  %621 = vmatprep.mubr.bf16.mxu0 0
  %622 = vmatmul.mubr.bf16.gmra.mxu0 %v587
  %v623 = vpop.f32.mrf.mxu0
  %v624 = vadd.f32 %v327, %v623
  %v625 = vpop.f32.mrf.mxu0
  %v626 = vpop.f32.mrf.mxu0
  %v627 = vadd.f32 %v328, %v626
  %v628 = vpop.f32.mrf.mxu0
  %629 = vdwg.mxu0
  %v630 = vsel %vm387, %v624, -inf
  %631 = vmax.xlane.f32.xlu0 %v630
  %v632 = vpop.xlane.xlu0 %631
  %v633 = vsel %vm387, %v627, -inf
  %634 = vmax.xlane.f32.xlu0 %v633
  %v635 = vpop.xlane.xlu0 %634
  %v636 = vsub.f32 %v624, %v632
  %v637 = vsub.f32 %v627, %v635
  %v638 = vmul.f32 %v636, 1.442695
  %v639 = vpow.pop %v638
  %v640 = vmul.f32 %v637, 1.442695
  %v641 = vpow.pop %v640
  %v642 = vsel %vm387, %v639, 0.0
  %643 = vadd.xlane.f32.xlu0 %v642
  %v644 = vpop.xlane.xlu0 %643
  %v645 = vsel %vm387, %v641, 0.0
  %646 = vadd.xlane.f32.xlu0 %v645
  %v647 = vpop.xlane.xlu0 %646
  %v648 = vrcp.pop %v644
  %v649 = vmul.f32 %v639, %v648
  %v650 = vrcp.pop %v647
  %v651 = vmul.f32 %v641, %v650
  %v652 = vmul.f32 %v321, %v582
  %v653 = vmul.f32 %v324, %v582
  %v654 = vpack.c.bf16 %v653, %v652
  %v655 = vpack.c.bf16 %v651, %v649
  %v657 = vsel %vm387, %v655, 0
  %659 = vmatprep.subr.bf16.mxu0 0
  %660 = vmatpush1.bf16.msra.mxu0 0
  %661 = vmatprep.subr.bf16.mxu0 0
  %662 = vmatpush1.bf16.msra.mxu0 0
  %663 = vmatprep.subr.bf16.mxu0 0
  %664 = vmatpush1.bf16.msra.mxu0 0
  %665 = vmatprep.subr.bf16.mxu0 0
  %666 = vmatpush1.bf16.msra.mxu0 0
  %667 = vmatprep.subr.bf16.mxu0 0
  %668 = vmatpush1.bf16.msra.mxu0 0
  %669 = vmatprep.subr.bf16.mxu0 0
  %670 = vmatpush1.bf16.msra.mxu0 0
  %671 = vmatprep.subr.bf16.mxu0 0
  %672 = vmatpush1.bf16.msra.mxu0 0
  %673 = vmatprep.subr.bf16.mxu0 0
  %674 = vmatpush1.bf16.msra.mxu0 %v654
  %675 = vmatprep.subr.bf16.mxu0 0
  %676 = vmatpush2.bf16.msra.mxu0 0
  %677 = vmatprep.subr.bf16.mxu0 0
  %678 = vmatpush2.bf16.msra.mxu0 0
  %679 = vmatprep.subr.bf16.mxu0 0
  %680 = vmatpush2.bf16.msra.mxu0 0
  %681 = vmatprep.subr.bf16.mxu0 0
  %682 = vmatpush2.bf16.msra.mxu0 0
  %683 = vmatprep.subr.bf16.mxu0 0
  %684 = vmatpush2.bf16.msra.mxu0 0
  %685 = vmatprep.subr.bf16.mxu0 0
  %686 = vmatpush2.bf16.msra.mxu0 0
  %687 = vmatprep.subr.bf16.mxu0 0
  %688 = vmatpush2.bf16.msra.mxu0 0
  %689 = vmatprep.subr.bf16.mxu0 0
  %690 = vmatpush2.bf16.msra.mxu0 0
  %691 = vmatprep.mubr.bf16.mxu0 0
  %692 = vmatmul.mubr.bf16.gmra.mxu0 %v657
  %v693 = vpop.f32.mrf.mxu0
  %v694 = vadd.f32 0.0, %v693
  %v695 = vpop.f32.mrf.mxu0
  %v696 = vpop.f32.mrf.mxu0
  %v697 = vadd.f32 0.0, %v696
  %v698 = vpop.f32.mrf.mxu0
  %699 = vdwg.mxu0
  %v700 = vadd.f32 %v573, %v694
  %v701 = vadd.f32 %v576, %v697
  %v702 = vlaneseq
  %v703 = vshrl.u32 %v702, 7
  %v704 = vsub.s32 3, %v703
  %v705 = vrot.slane %v329, %v704
  %v706 = vmul.f32 %v331, %v705
  %v707 = vmul.f32 %v332, %v705
  %v708 = vpack.c.bf16 %v707, %v706
  %v710 = vsel %vm87, %v708, 0
  %712 = vmatprep.subr.bf16.mxu0 0
  %713 = vmatpush1.bf16.xpose.msra.mxu0 0
  %714 = vmatprep.subr.bf16.mxu0 0
  %715 = vmatpush1.bf16.xpose.msra.mxu0 0
  %716 = vmatprep.subr.bf16.mxu0 0
  %717 = vmatpush1.bf16.xpose.msra.mxu0 0
  %718 = vmatprep.subr.bf16.mxu0 0
  %719 = vmatpush1.bf16.xpose.msra.mxu0 0
  %720 = vmatprep.subr.bf16.mxu0 0
  %721 = vmatpush1.bf16.xpose.msra.mxu0 0
  %722 = vmatprep.subr.bf16.mxu0 0
  %723 = vmatpush1.bf16.xpose.msra.mxu0 0
  %724 = vmatprep.subr.bf16.mxu0 0
  %725 = vmatpush1.bf16.xpose.msra.mxu0 0
  %726 = vmatprep.subr.bf16.mxu0 0
  %727 = vmatpush1.bf16.xpose.msra.mxu0 %v344
  %728 = vmatprep.subr.bf16.mxu0 0
  %729 = vmatpush2.bf16.xpose.msra.mxu0 0
  %730 = vmatprep.subr.bf16.mxu0 0
  %731 = vmatpush2.bf16.xpose.msra.mxu0 0
  %732 = vmatprep.subr.bf16.mxu0 0
  %733 = vmatpush2.bf16.xpose.msra.mxu0 0
  %734 = vmatprep.subr.bf16.mxu0 0
  %735 = vmatpush2.bf16.xpose.msra.mxu0 0
  %736 = vmatprep.subr.bf16.mxu0 0
  %737 = vmatpush2.bf16.xpose.msra.mxu0 0
  %738 = vmatprep.subr.bf16.mxu0 0
  %739 = vmatpush2.bf16.xpose.msra.mxu0 0
  %740 = vmatprep.subr.bf16.mxu0 0
  %741 = vmatpush2.bf16.xpose.msra.mxu0 0
  %742 = vmatprep.subr.bf16.mxu0 0
  %743 = vmatpush2.bf16.xpose.msra.mxu0 0
  %744 = vmatprep.mubr.bf16.mxu0 0
  %745 = vmatmul.mubr.bf16.gmra.mxu0 %v710
  %v746 = vpop.f32.mrf.mxu0
  %v747 = vadd.f32 %v327, %v746
  %v748 = vpop.f32.mrf.mxu0
  %v749 = vpop.f32.mrf.mxu0
  %v750 = vadd.f32 %v328, %v749
  %v751 = vpop.f32.mrf.mxu0
  %752 = vdwg.mxu0
  %v753 = vsel %vm387, %v747, -inf
  %754 = vmax.xlane.f32.xlu0 %v753
  %v755 = vpop.xlane.xlu0 %754
  %v756 = vsel %vm387, %v750, -inf
  %757 = vmax.xlane.f32.xlu0 %v756
  %v758 = vpop.xlane.xlu0 %757
  %v759 = vsub.f32 %v747, %v755
  %v760 = vsub.f32 %v750, %v758
  %v761 = vmul.f32 %v759, 1.442695
  %v762 = vpow.pop %v761
  %v763 = vmul.f32 %v760, 1.442695
  %v764 = vpow.pop %v763
  %v765 = vsel %vm387, %v762, 0.0
  %766 = vadd.xlane.f32.xlu0 %v765
  %v767 = vpop.xlane.xlu0 %766
  %v768 = vsel %vm387, %v764, 0.0
  %769 = vadd.xlane.f32.xlu0 %v768
  %v770 = vpop.xlane.xlu0 %769
  %v771 = vrcp.pop %v767
  %v772 = vmul.f32 %v762, %v771
  %v773 = vrcp.pop %v770
  %v774 = vmul.f32 %v764, %v773
  %v775 = vmul.f32 %v321, %v705
  %v776 = vmul.f32 %v324, %v705
  %v777 = vpack.c.bf16 %v776, %v775
  %v778 = vpack.c.bf16 %v774, %v772
  %v780 = vsel %vm387, %v778, 0
  %782 = vmatprep.subr.bf16.mxu0 0
  %783 = vmatpush1.bf16.msra.mxu0 0
  %784 = vmatprep.subr.bf16.mxu0 0
  %785 = vmatpush1.bf16.msra.mxu0 0
  %786 = vmatprep.subr.bf16.mxu0 0
  %787 = vmatpush1.bf16.msra.mxu0 0
  %788 = vmatprep.subr.bf16.mxu0 0
  %789 = vmatpush1.bf16.msra.mxu0 0
  %790 = vmatprep.subr.bf16.mxu0 0
  %791 = vmatpush1.bf16.msra.mxu0 0
  %792 = vmatprep.subr.bf16.mxu0 0
  %793 = vmatpush1.bf16.msra.mxu0 0
  %794 = vmatprep.subr.bf16.mxu0 0
  %795 = vmatpush1.bf16.msra.mxu0 0
  %796 = vmatprep.subr.bf16.mxu0 0
  %797 = vmatpush1.bf16.msra.mxu0 %v777
  %798 = vmatprep.subr.bf16.mxu0 0
  %799 = vmatpush2.bf16.msra.mxu0 0
  %800 = vmatprep.subr.bf16.mxu0 0
  %801 = vmatpush2.bf16.msra.mxu0 0
  %802 = vmatprep.subr.bf16.mxu0 0
  %803 = vmatpush2.bf16.msra.mxu0 0
  %804 = vmatprep.subr.bf16.mxu0 0
  %805 = vmatpush2.bf16.msra.mxu0 0
  %806 = vmatprep.subr.bf16.mxu0 0
  %807 = vmatpush2.bf16.msra.mxu0 0
  %808 = vmatprep.subr.bf16.mxu0 0
  %809 = vmatpush2.bf16.msra.mxu0 0
  %810 = vmatprep.subr.bf16.mxu0 0
  %811 = vmatpush2.bf16.msra.mxu0 0
  %812 = vmatprep.subr.bf16.mxu0 0
  %813 = vmatpush2.bf16.msra.mxu0 0
  %814 = vmatprep.mubr.bf16.mxu0 0
  %815 = vmatmul.mubr.bf16.gmra.mxu0 %v780
  %v816 = vpop.f32.mrf.mxu0
  %v817 = vadd.f32 0.0, %v816
  %v818 = vpop.f32.mrf.mxu0
  %v819 = vpop.f32.mrf.mxu0
  %v820 = vadd.f32 0.0, %v819
  %v821 = vpop.f32.mrf.mxu0
  %822 = vdwg.mxu0
  %v823 = vadd.f32 %v700, %v817
  %v824 = vadd.f32 %v701, %v820
  %v825 = vpack.c.bf16 %v824, %v823
  %v826 = vld [vmem:[%s13] sm:$0xf]
  %v827 = vld [vmem:[%s13 + $0x4] sm:$0xf]
  %v828 = vld [vmem:[%s13 + $0x8] sm:$0xf]
  %v829 = vld [vmem:[%s13 + $0xc] sm:$0xf]
  %v834 = vunpack.c.l.b16 %v826
  %v835 = vunpack.c.l.b16 %v827
  %v836 = vunpack.c.l.b16 %v828
  %v837 = vunpack.c.l.b16 %v829
  %v838 = vpack.c.b16 %v835, %v834
  %v839 = vpack.c.b16 %v837, %v836
  %v843 = vsel %vm87, %v825, 0
  %845 = vmatprep.subr.bf16.mxu0 0
  %846 = vmatpush1.bf16.msra.mxu0 0
  %847 = vmatprep.subr.bf16.mxu0 0
  %848 = vmatpush1.bf16.msra.mxu0 0
  %849 = vmatprep.subr.bf16.mxu0 0
  %850 = vmatpush1.bf16.msra.mxu0 0
  %851 = vmatprep.subr.bf16.mxu0 0
  %852 = vmatpush1.bf16.msra.mxu0 0
  %853 = vmatprep.subr.bf16.mxu0 0
  %854 = vmatpush1.bf16.msra.mxu0 0
  %855 = vmatprep.subr.bf16.mxu0 0
  %856 = vmatpush1.bf16.msra.mxu0 0
  %857 = vmatprep.subr.bf16.mxu0 0
  %858 = vmatpush1.bf16.msra.mxu0 %v839
  %859 = vmatprep.subr.bf16.mxu0 0
  %860 = vmatpush1.bf16.msra.mxu0 %v838
  %861 = vmatprep.subr.bf16.mxu0 0
  %862 = vmatpush2.bf16.msra.mxu0 0
  %863 = vmatprep.subr.bf16.mxu0 0
  %864 = vmatpush2.bf16.msra.mxu0 0
  %865 = vmatprep.subr.bf16.mxu0 0
  %866 = vmatpush2.bf16.msra.mxu0 0
  %867 = vmatprep.subr.bf16.mxu0 0
  %868 = vmatpush2.bf16.msra.mxu0 0
  %869 = vmatprep.subr.bf16.mxu0 0
  %870 = vmatpush2.bf16.msra.mxu0 0
  %871 = vmatprep.subr.bf16.mxu0 0
  %872 = vmatpush2.bf16.msra.mxu0 0
  %873 = vmatprep.subr.bf16.mxu0 0
  %874 = vmatpush2.bf16.msra.mxu0 0
  %875 = vmatprep.subr.bf16.mxu0 0
  %876 = vmatpush2.bf16.msra.mxu0 0
  %877 = vmatprep.mubr.bf16.mxu0 0
  %878 = vmatmul.mubr.bf16.gmra.mxu0 %v843
  %v879 = vpop.f32.mrf.mxu0
  %v880 = vadd.f32 0.0, %v879
  %v881 = vpop.f32.mrf.mxu0
  %v882 = vpop.f32.mrf.mxu0
  %v883 = vadd.f32 0.0, %v882
  %v884 = vpop.f32.mrf.mxu0
  %885 = vdwg.mxu0
  %v886 = vadd.f32 %v83, %v880
  %v887 = vadd.f32 %v84, %v883
  %v888 = vld [vmem:[%s14] sm:$0x1]
  %v890 = vlaneseq
  %v891 = vshrl.u32 %v890, 7
  %v892 = vsub.s32 0, %v891
  %v893 = vrot.slane %v888, %v892
  %v895 = vadd.f32 %v886, %v893
  %v896 = vadd.f32 %v887, %v893
  %v897 = vld [vmem:[%s15] sm:$0x1]
  %v898 = vld [vmem:[%s16] sm:$0x1]
  %v899 = vsel %vm87, %v895, 0.0
  %900 = vadd.xlane.f32.xlu0 %v899
  %v901 = vpop.xlane.xlu0 %900
  %v902 = vsel %vm87, %v896, 0.0
  %903 = vadd.xlane.f32.xlu0 %v902
  %v904 = vpop.xlane.xlu0 %903
  %v905 = vmul.f32 %v901, %v94
  %v906 = vmul.f32 %v904, %v94
  %v907 = vsub.f32 %v895, %v905
  %v908 = vsub.f32 %v896, %v906
  %v909 = vmul.f32 %v907, %v907
  %v910 = vmul.f32 %v908, %v908
  %v911 = vsel %vm87, %v909, 0.0
  %912 = vadd.xlane.f32.xlu0 %v911
  %v913 = vpop.xlane.xlu0 %912
  %v914 = vsel %vm87, %v910, 0.0
  %915 = vadd.xlane.f32.xlu0 %v914
  %v916 = vpop.xlane.xlu0 %915
  %v917 = vmul.f32 %v913, %v94
  %v918 = vmul.f32 %v916, %v94
  %v919 = vadd.f32 %v917, 1e-05
  %v920 = vadd.f32 %v918, 1e-05
  %v921 = vrsqrt.pop %v919
  %v922 = vrsqrt.pop %v920
  %v923 = vmul.f32 %v907, %v921
  %v924 = vmul.f32 %v908, %v922
  %v926 = vlaneseq
  %v927 = vshrl.u32 %v926, 7
  %v928 = vsub.s32 0, %v927
  %v929 = vrot.slane %v897, %v928
  %v931 = vmul.f32 %v923, %v929
  %v932 = vmul.f32 %v924, %v929
  %v934 = vlaneseq
  %v935 = vshrl.u32 %v934, 7
  %v936 = vsub.s32 0, %v935
  %v937 = vrot.slane %v898, %v936
  %v939 = vadd.f32 %v931, %v937
  %v940 = vadd.f32 %v932, %v937
  %v941 = vpack.c.bf16 %v940, %v939
  %v942 = vld [vmem:[%s17] sm:$0xf]
  %v943 = vld [vmem:[%s17 + $0x4] sm:$0xf]
  %v944 = vld [vmem:[%s17 + $0x8] sm:$0xf]
  %v945 = vld [vmem:[%s17 + $0xc] sm:$0xf]
  %v946 = vld [vmem:[%s18] sm:$0x1]
  %v948 = vlaneseq
  %v949 = vshrl.u32 %v948, 7
  %v950 = vsub.s32 0, %v949
  %v951 = vrot.slane %v946, %v950
  %v957 = vunpack.c.l.b16 %v942
  %v958 = vunpack.c.l.b16 %v943
  %v959 = vunpack.c.l.b16 %v944
  %v960 = vunpack.c.l.b16 %v945
  %v961 = vpack.c.b16 %v958, %v957
  %v962 = vpack.c.b16 %v960, %v959
  %v966 = vsel %vm87, %v941, 0
  %968 = vmatprep.subr.bf16.mxu0 0
  %969 = vmatpush1.bf16.msra.mxu0 0
  %970 = vmatprep.subr.bf16.mxu0 0
  %971 = vmatpush1.bf16.msra.mxu0 0
  %972 = vmatprep.subr.bf16.mxu0 0
  %973 = vmatpush1.bf16.msra.mxu0 0
  %974 = vmatprep.subr.bf16.mxu0 0
  %975 = vmatpush1.bf16.msra.mxu0 0
  %976 = vmatprep.subr.bf16.mxu0 0
  %977 = vmatpush1.bf16.msra.mxu0 0
  %978 = vmatprep.subr.bf16.mxu0 0
  %979 = vmatpush1.bf16.msra.mxu0 0
  %980 = vmatprep.subr.bf16.mxu0 0
  %981 = vmatpush1.bf16.msra.mxu0 %v962
  %982 = vmatprep.subr.bf16.mxu0 0
  %983 = vmatpush1.bf16.msra.mxu0 %v961
  %984 = vmatprep.subr.bf16.mxu0 0
  %985 = vmatpush2.bf16.msra.mxu0 0
  %986 = vmatprep.subr.bf16.mxu0 0
  %987 = vmatpush2.bf16.msra.mxu0 0
  %988 = vmatprep.subr.bf16.mxu0 0
  %989 = vmatpush2.bf16.msra.mxu0 0
  %990 = vmatprep.subr.bf16.mxu0 0
  %991 = vmatpush2.bf16.msra.mxu0 0
  %992 = vmatprep.subr.bf16.mxu0 0
  %993 = vmatpush2.bf16.msra.mxu0 0
  %994 = vmatprep.subr.bf16.mxu0 0
  %995 = vmatpush2.bf16.msra.mxu0 0
  %996 = vmatprep.subr.bf16.mxu0 0
  %997 = vmatpush2.bf16.msra.mxu0 0
  %998 = vmatprep.subr.bf16.mxu0 0
  %999 = vmatpush2.bf16.msra.mxu0 0
  %1000 = vmatprep.mubr.bf16.mxu0 0
  %1001 = vmatmul.mubr.bf16.gmra.mxu0 %v966
  %v1002 = vpop.f32.mrf.mxu0
  %v1003 = vadd.f32 %v951, %v1002
  %v1004 = vpop.f32.mrf.mxu0
  %v1005 = vpop.f32.mrf.mxu0
  %v1006 = vadd.f32 %v951, %v1005
  %v1007 = vpop.f32.mrf.mxu0
  %1008 = vdwg.mxu0
  %v1009 = vmul.f32 %v1003, 0.5
  %v1010 = vmul.f32 %v1006, 0.5
  %v1011 = vmul.f32 %v1003, 0.70710677
  %v1012 = vmul.f32 %v1006, 0.70710677
  %vm1013 = vcmp.ge.f32.partialorder %v1011, 0.0
  %vm1014 = vcmp.ge.f32.partialorder %v1012, 0.0
  %v1015 = vsel %vm1013, 1.0, -1.0
  %v1016 = vsel %vm1014, 1.0, -1.0
  %v1017 = vand.u32 2147483647, %v1011
  %v1018 = vand.u32 2147483647, %v1012
  %v1019 = vmul.f32 %v1017, 0.3275911
  %v1020 = vmul.f32 %v1018, 0.3275911
  %v1021 = vadd.f32 %v1019, 1.0
  %v1022 = vadd.f32 %v1020, 1.0
  %v1023 = vrcp.pop %v1021
  %v1024 = vmul.f32 1.0, %v1023
  %v1025 = vrcp.pop %v1022
  %v1026 = vmul.f32 1.0, %v1025
  %v1027 = vmul.f32 %v1024, 1.0614054
  %v1028 = vmul.f32 %v1026, 1.0614054
  %v1029 = vadd.f32 %v1027, -1.4531521
  %v1030 = vadd.f32 %v1028, -1.4531521
  %v1031 = vmul.f32 %v1029, %v1024
  %v1032 = vmul.f32 %v1030, %v1026
  %v1033 = vadd.f32 %v1031, 1.4214138
  %v1034 = vadd.f32 %v1032, 1.4214138
  %v1035 = vmul.f32 %v1033, %v1024
  %v1036 = vmul.f32 %v1034, %v1026
  %v1037 = vadd.f32 %v1035, -0.28449672
  %v1038 = vadd.f32 %v1036, -0.28449672
  %v1039 = vmul.f32 %v1037, %v1024
  %v1040 = vmul.f32 %v1038, %v1026
  %v1041 = vadd.f32 %v1039, 0.2548296
  %v1042 = vadd.f32 %v1040, 0.2548296
  %v1043 = vmul.f32 %v1041, %v1024
  %v1044 = vmul.f32 %v1042, %v1026
  %v1045 = vsub.f32 0.0, %v1017
  %v1046 = vsub.f32 0.0, %v1018
  %v1047 = vmul.f32 %v1045, %v1017
  %v1048 = vmul.f32 %v1046, %v1018
  %v1049 = vmul.f32 %v1047, 1.442695
  %v1050 = vpow.pop %v1049
  %v1051 = vmul.f32 %v1048, 1.442695
  %v1052 = vpow.pop %v1051
  %v1053 = vmul.f32 %v1043, %v1050
  %v1054 = vmul.f32 %v1044, %v1052
  %v1055 = vsub.f32 1.0, %v1053
  %v1056 = vsub.f32 1.0, %v1054
  %v1057 = vmul.f32 %v1015, %v1055
  %v1058 = vmul.f32 %v1016, %v1056
  %v1059 = vadd.f32 %v1057, 1.0
  %v1060 = vadd.f32 %v1058, 1.0
  %v1061 = vmul.f32 %v1009, %v1059
  %v1062 = vmul.f32 %v1010, %v1060
  %v1063 = vpack.c.bf16 %v1062, %v1061
  %v1064 = vld [vmem:[%s19] sm:$0xf]
  %v1065 = vld [vmem:[%s19 + $0x4] sm:$0xf]
  %v1066 = vld [vmem:[%s19 + $0x8] sm:$0xf]
  %v1067 = vld [vmem:[%s19 + $0xc] sm:$0xf]
  %v1068 = vld [vmem:[%s19 + $0x10] sm:$0xf]
  %v1069 = vld [vmem:[%s19 + $0x14] sm:$0xf]
  %v1070 = vld [vmem:[%s19 + $0x18] sm:$0xf]
  %v1071 = vld [vmem:[%s19 + $0x1c] sm:$0xf]
  %v1080 = vunpack.c.l.b16 %v1064
  %v1081 = vunpack.c.l.b16 %v1065
  %v1082 = vunpack.c.l.b16 %v1066
  %v1083 = vunpack.c.l.b16 %v1067
  %v1084 = vunpack.c.l.b16 %v1068
  %v1085 = vunpack.c.l.b16 %v1069
  %v1086 = vunpack.c.l.b16 %v1070
  %v1087 = vunpack.c.l.b16 %v1071
  %v1088 = vpack.c.b16 %v1081, %v1080
  %v1089 = vpack.c.b16 %v1083, %v1082
  %v1090 = vpack.c.b16 %v1085, %v1084
  %v1091 = vpack.c.b16 %v1087, %v1086
  %vm1096 = vcmask 523264
  %v1098 = vsel %vm1096, %v1063, 0
  %1100 = vmatprep.subr.bf16.mxu0 0
  %1101 = vmatpush1.bf16.msra.mxu0 0
  %1102 = vmatprep.subr.bf16.mxu0 0
  %1103 = vmatpush1.bf16.msra.mxu0 0
  %1104 = vmatprep.subr.bf16.mxu0 0
  %1105 = vmatpush1.bf16.msra.mxu0 0
  %1106 = vmatprep.subr.bf16.mxu0 0
  %1107 = vmatpush1.bf16.msra.mxu0 0
  %1108 = vmatprep.subr.bf16.mxu0 0
  %1109 = vmatpush1.bf16.msra.mxu0 %v1091
  %1110 = vmatprep.subr.bf16.mxu0 0
  %1111 = vmatpush1.bf16.msra.mxu0 %v1090
  %1112 = vmatprep.subr.bf16.mxu0 0
  %1113 = vmatpush1.bf16.msra.mxu0 %v1089
  %1114 = vmatprep.subr.bf16.mxu0 0
  %1115 = vmatpush1.bf16.msra.mxu0 %v1088
  %1116 = vmatprep.subr.bf16.mxu0 0
  %1117 = vmatpush2.bf16.msra.mxu0 0
  %1118 = vmatprep.subr.bf16.mxu0 0
  %1119 = vmatpush2.bf16.msra.mxu0 0
  %1120 = vmatprep.subr.bf16.mxu0 0
  %1121 = vmatpush2.bf16.msra.mxu0 0
  %1122 = vmatprep.subr.bf16.mxu0 0
  %1123 = vmatpush2.bf16.msra.mxu0 0
  %1124 = vmatprep.subr.bf16.mxu0 0
  %1125 = vmatpush2.bf16.msra.mxu0 0
  %1126 = vmatprep.subr.bf16.mxu0 0
  %1127 = vmatpush2.bf16.msra.mxu0 0
  %1128 = vmatprep.subr.bf16.mxu0 0
  %1129 = vmatpush2.bf16.msra.mxu0 0
  %1130 = vmatprep.subr.bf16.mxu0 0
  %1131 = vmatpush2.bf16.msra.mxu0 0
  %1132 = vmatprep.mubr.bf16.mxu0 0
  %1133 = vmatmul.mubr.bf16.gmra.mxu0 %v1098
  %v1134 = vpop.f32.mrf.mxu0
  %v1135 = vadd.f32 0.0, %v1134
  %v1136 = vpop.f32.mrf.mxu0
  %v1137 = vpop.f32.mrf.mxu0
  %v1138 = vadd.f32 0.0, %v1137
  %v1139 = vpop.f32.mrf.mxu0
  %1140 = vdwg.mxu0
  %v1141 = vadd.f32 %v895, %v1135
  %v1142 = vadd.f32 %v896, %v1138
  %v1143 = vld [vmem:[%s20] sm:$0x1]
  %v1145 = vlaneseq
  %v1146 = vshrl.u32 %v1145, 7
  %v1147 = vsub.s32 0, %v1146
  %v1148 = vrot.slane %v1143, %v1147
  %v1150 = vadd.f32 %v1141, %v1148
  %v1151 = vadd.f32 %v1142, %v1148
  %1152 = vst.msk [vmem:[%s23] sm:$0xff] %vm87, %v1150
  %1153 = vst.msk [vmem:[%s23 + $0x8] sm:$0xff] %vm87, %v1151
  // Predicated region
  $region94: #{hierarchical_transformer_forward.6} parent=0 // pred_check
    _
  $region95: #{hierarchical_transformer_forward.6} parent=0 // pred_check_branch
    %1155 = sbr.rel (0) target = $region97
  $region96: #{hierarchical_transformer_forward.6} parent=0 // pred_region
    _
  $region97: #{hierarchical_transformer_forward.6} parent=0 // pred_fallthru
    _
  // Predicated region
  $region98: #{hierarchical_transformer_forward.6} parent=0 // pred_check
    _
  $region99: #{hierarchical_transformer_forward.6} parent=0 // pred_check_branch
    %1157 = sbr.rel (0) target = $region101
  $region100: #{hierarchical_transformer_forward.6} parent=0 // pred_region
    _
  $region101: #{hierarchical_transformer_forward.6} parent=0 // pred_fallthru
    _

// kernel: hierarchical_transformer_forward.4
$region0: #{hierarchical_transformer_forward.4}
  #allocation0 [shape = 'u32[]', space=smem, size = 0x4, offset = 0x4, fixed_abs, tag = 'smem constant byte address 0x4 - core index']
  #allocation1 [shape = 'u32[144,128]{1,0:T(1,128)}', space=vmem, size = 0x12000, scoped, tag = 'internal scratch']
  %s0 = inlined_call_operand.vmem [shape: f32[64,16], index: 0, kind: input, shape index: {}]
  %s1 = inlined_call_operand.vmem [shape: bf16[16,32], index: 1, kind: input, shape index: {}]
  %s2 = inlined_call_operand.vmem [shape: f32[1,32], index: 2, kind: input, shape index: {}]
  %s3 = inlined_call_operand.vmem [shape: f32[64,64], index: 3, kind: input, shape index: {}]
  %s4 = inlined_call_operand.vmem [shape: f32[4,32], index: 4, kind: input, shape index: {}]
  %s5 = inlined_call_operand.vmem [shape: f32[1,32], index: 5, kind: input, shape index: {}]
  %s6 = inlined_call_operand.vmem [shape: f32[1,32], index: 6, kind: input, shape index: {}]
  %s7 = inlined_call_operand.vmem [shape: bf16[32,32], index: 7, kind: input, shape index: {}]
  %s8 = inlined_call_operand.vmem [shape: f32[1,32], index: 8, kind: input, shape index: {}]
  %s9 = inlined_call_operand.vmem [shape: bf16[32,32], index: 9, kind: input, shape index: {}]
  %s10 = inlined_call_operand.vmem [shape: f32[1,32], index: 10, kind: input, shape index: {}]
  %s11 = inlined_call_operand.vmem [shape: bf16[32,32], index: 11, kind: input, shape index: {}]
  %s12 = inlined_call_operand.vmem [shape: f32[1,32], index: 12, kind: input, shape index: {}]
  %s13 = inlined_call_operand.vmem [shape: bf16[32,32], index: 13, kind: input, shape index: {}]
  %s14 = inlined_call_operand.vmem [shape: f32[1,32], index: 14, kind: input, shape index: {}]
  %s15 = inlined_call_operand.vmem [shape: f32[1,32], index: 15, kind: input, shape index: {}]
  %s16 = inlined_call_operand.vmem [shape: f32[1,32], index: 16, kind: input, shape index: {}]
  %s17 = inlined_call_operand.vmem [shape: bf16[32,64], index: 17, kind: input, shape index: {}]
  %s18 = inlined_call_operand.vmem [shape: f32[1,64], index: 18, kind: input, shape index: {}]
  %s19 = inlined_call_operand.vmem [shape: bf16[64,32], index: 19, kind: input, shape index: {}]
  %s20 = inlined_call_operand.vmem [shape: f32[1,32], index: 20, kind: input, shape index: {}]
  %s21 = inlined_call_operand.hbm [shape: f32[1,32], index: 21, kind: input, shape index: {}]
  %s22 = inlined_call_operand.hbm [shape: f32[1,32], index: 22, kind: input, shape index: {}]
  %s23 = inlined_call_operand.vmem [shape: f32[64,32], index: 23, kind: output, shape index: {}]
  %s24 = sld [smem:[#allocation0]]
  $region110: #{hierarchical_transformer_forward.4} parent=0
    _
  %s26 = ssub.s32 1, %s24
  %s27 = scalar_select 0, %s26, %s24
  $region1: #{hierarchical_transformer_forward.4} parent=0
    #allocation2 [shape = 'u8[512]{0}', space=vmem, size = 0x400, scoped, tag = 'input window, operand 21, single buffered']
    #allocation3 [shape = 's32[1]{0}', space=sflag, size = 0x4, scoped, tag = 'scoped memory for hierarchical_transformer_forward.4']
    #allocation4 [shape = 'u8[512]{0}', space=vmem, size = 0x400, scoped, tag = 'input window, operand 22, single buffered']
    #allocation5 [shape = 's32[1]{0}', space=sflag, size = 0x4, scoped, tag = 'scoped memory for hierarchical_transformer_forward.4']
    %28 = vsyncpa [#allocation3], 0
    %29 = vsyncpa [#allocation5], 0
    // Predicated region
    $region2: #{hierarchical_transformer_forward.4} parent=1 // pred_check
      _
    $region3: #{hierarchical_transformer_forward.4} parent=1 // pred_check_branch
      %31 = sbr.rel (0) target = $region5
    $region4: #{hierarchical_transformer_forward.4} parent=1 // pred_region
      _
    $region5: #{hierarchical_transformer_forward.4} parent=1 // pred_fallthru
      _
    // Predicated region
    $region6: #{hierarchical_transformer_forward.4} parent=1 // pred_check
      _
    $region7: #{hierarchical_transformer_forward.4} parent=1 // pred_check_branch
      %33 = sbr.rel (0) target = $region9
    $region8: #{hierarchical_transformer_forward.4} parent=1 // pred_region
      _
    $region9: #{hierarchical_transformer_forward.4} parent=1 // pred_fallthru
      _
    // Predicated region
    $region10: #{hierarchical_transformer_forward.4} parent=1 // pred_check
      _
    $region11: #{hierarchical_transformer_forward.4} parent=1 // pred_check_branch
      %35 = sbr.rel (0) target = $region13
    $region12: #{hierarchical_transformer_forward.4} parent=1 // pred_region
      _
    $region13: #{hierarchical_transformer_forward.4} parent=1 // pred_fallthru
      _
    // Predicated region
    $region14: #{hierarchical_transformer_forward.4} parent=1 // pred_check
      _
    $region15: #{hierarchical_transformer_forward.4} parent=1 // pred_check_branch
      %37 = sbr.rel (0) target = $region17
    $region16: #{hierarchical_transformer_forward.4} parent=1 // pred_region
      _
    $region17: #{hierarchical_transformer_forward.4} parent=1 // pred_fallthru
      _
    // Predicated region
    $region18: #{hierarchical_transformer_forward.4} parent=1 // pred_check
      _
    $region19: #{hierarchical_transformer_forward.4} parent=1 // pred_check_branch
      %39 = sbr.rel (0) target = $region21
    $region20: #{hierarchical_transformer_forward.4} parent=1 // pred_region
      _
    $region21: #{hierarchical_transformer_forward.4} parent=1 // pred_fallthru
      _
    // Predicated region
    $region22: #{hierarchical_transformer_forward.4} parent=1 // pred_check
      _
    $region23: #{hierarchical_transformer_forward.4} parent=1 // pred_check_branch
      %41 = sbr.rel (0) target = $region25
    $region24: #{hierarchical_transformer_forward.4} parent=1 // pred_region
      _
    $region25: #{hierarchical_transformer_forward.4} parent=1 // pred_fallthru
      _
    // Predicated region
    $region26: #{hierarchical_transformer_forward.4} parent=1 // pred_check
      _
    $region27: #{hierarchical_transformer_forward.4} parent=1 // pred_check_branch
      %43 = sbr.rel (0) target = $region29
    $region28: #{hierarchical_transformer_forward.4} parent=1 // pred_region
      _
    $region29: #{hierarchical_transformer_forward.4} parent=1 // pred_fallthru
      _
    // Predicated region
    $region30: #{hierarchical_transformer_forward.4} parent=1 // pred_check
      _
    $region31: #{hierarchical_transformer_forward.4} parent=1 // pred_check_branch
      %45 = sbr.rel (0) target = $region33
    $region32: #{hierarchical_transformer_forward.4} parent=1 // pred_region
      _
    $region33: #{hierarchical_transformer_forward.4} parent=1 // pred_fallthru
      _
    // Predicated region
    $region34: #{hierarchical_transformer_forward.4} parent=1 // pred_check
      _
    $region35: #{hierarchical_transformer_forward.4} parent=1 // pred_check_branch
      %47 = sbr.rel (0) target = $region37
    $region36: #{hierarchical_transformer_forward.4} parent=1 // pred_region
      _
    $region37: #{hierarchical_transformer_forward.4} parent=1 // pred_fallthru
      _
    // Predicated region
    $region38: #{hierarchical_transformer_forward.4} parent=1 // pred_check
      _
    $region39: #{hierarchical_transformer_forward.4} parent=1 // pred_check_branch
      %49 = sbr.rel (0) target = $region41
    $region40: #{hierarchical_transformer_forward.4} parent=1 // pred_region
      _
    $region41: #{hierarchical_transformer_forward.4} parent=1 // pred_fallthru
      _
    // Predicated region
    $region42: #{hierarchical_transformer_forward.4} parent=1 // pred_check
      _
    $region43: #{hierarchical_transformer_forward.4} parent=1 // pred_check_branch
      %51 = sbr.rel (0) target = $region45
    $region44: #{hierarchical_transformer_forward.4} parent=1 // pred_region
      _
    $region45: #{hierarchical_transformer_forward.4} parent=1 // pred_fallthru
      _
    // Predicated region
    $region46: #{hierarchical_transformer_forward.4} parent=1 // pred_check
      _
    $region47: #{hierarchical_transformer_forward.4} parent=1 // pred_check_branch
      %53 = sbr.rel (0) target = $region49
    $region48: #{hierarchical_transformer_forward.4} parent=1 // pred_region
      _
    $region49: #{hierarchical_transformer_forward.4} parent=1 // pred_fallthru
      _
    // Predicated region
    $region50: #{hierarchical_transformer_forward.4} parent=1 // pred_check
      _
    $region51: #{hierarchical_transformer_forward.4} parent=1 // pred_check_branch
      %55 = sbr.rel (0) target = $region53
    $region52: #{hierarchical_transformer_forward.4} parent=1 // pred_region
      _
    $region53: #{hierarchical_transformer_forward.4} parent=1 // pred_fallthru
      _
    // Predicated region
    $region54: #{hierarchical_transformer_forward.4} parent=1 // pred_check
      _
    $region55: #{hierarchical_transformer_forward.4} parent=1 // pred_check_branch
      %57 = sbr.rel (0) target = $region57
    $region56: #{hierarchical_transformer_forward.4} parent=1 // pred_region
      _
    $region57: #{hierarchical_transformer_forward.4} parent=1 // pred_fallthru
      _
    // Predicated region
    $region58: #{hierarchical_transformer_forward.4} parent=1 // pred_check
      _
    $region59: #{hierarchical_transformer_forward.4} parent=1 // pred_check_branch
      %59 = sbr.rel (0) target = $region61
    $region60: #{hierarchical_transformer_forward.4} parent=1 // pred_region
      _
    $region61: #{hierarchical_transformer_forward.4} parent=1 // pred_fallthru
      _
    // Predicated region
    $region62: #{hierarchical_transformer_forward.4} parent=1 // pred_check
      _
    $region63: #{hierarchical_transformer_forward.4} parent=1 // pred_check_branch
      %61 = sbr.rel (0) target = $region65
    $region64: #{hierarchical_transformer_forward.4} parent=1 // pred_region
      _
    $region65: #{hierarchical_transformer_forward.4} parent=1 // pred_fallthru
      _
    // Predicated region
    $region66: #{hierarchical_transformer_forward.4} parent=1 // pred_check
      _
    $region67: #{hierarchical_transformer_forward.4} parent=1 // pred_check_branch
      %63 = sbr.rel (0) target = $region69
    $region68: #{hierarchical_transformer_forward.4} parent=1 // pred_region
      _
    $region69: #{hierarchical_transformer_forward.4} parent=1 // pred_fallthru
      _
    // Predicated region
    $region70: #{hierarchical_transformer_forward.4} parent=1 // pred_check
      _
    $region71: #{hierarchical_transformer_forward.4} parent=1 // pred_check_branch
      %65 = sbr.rel (0) target = $region73
    $region72: #{hierarchical_transformer_forward.4} parent=1 // pred_region
      _
    $region73: #{hierarchical_transformer_forward.4} parent=1 // pred_fallthru
      _
    // Predicated region
    $region74: #{hierarchical_transformer_forward.4} parent=1 // pred_check
      _
    $region75: #{hierarchical_transformer_forward.4} parent=1 // pred_check_branch
      %67 = sbr.rel (0) target = $region77
    $region76: #{hierarchical_transformer_forward.4} parent=1 // pred_region
      _
    $region77: #{hierarchical_transformer_forward.4} parent=1 // pred_fallthru
      _
    // Predicated region
    $region78: #{hierarchical_transformer_forward.4} parent=1 // pred_check
      _
    $region79: #{hierarchical_transformer_forward.4} parent=1 // pred_check_branch
      %69 = sbr.rel (0) target = $region81
    $region80: #{hierarchical_transformer_forward.4} parent=1 // pred_region
      _
    $region81: #{hierarchical_transformer_forward.4} parent=1 // pred_fallthru
      _
    // Predicated region
    $region82: #{hierarchical_transformer_forward.4} parent=1 // pred_check
      _
    $region83: #{hierarchical_transformer_forward.4} parent=1 // pred_check_branch
      %71 = sbr.rel (0) target = $region85
    $region84: #{hierarchical_transformer_forward.4} parent=1 // pred_region
      _
    $region85: #{hierarchical_transformer_forward.4} parent=1 // pred_fallthru
      _
    // Predicated region
    $region86: #{hierarchical_transformer_forward.4} parent=1 // pred_check
      _
    $region87: #{hierarchical_transformer_forward.4} parent=1 // pred_check_branch
      %73 = sbr.rel (0) target = $region89
    $region88: #{hierarchical_transformer_forward.4} parent=1 // pred_region
      %s75 = ssub.s32 16, 16
      %76 = vsyncadd [#allocation3], %s75
      %s78 = sshll.u32 [#allocation2], 4
      %s79 = int_to_ptr.vmem [resolvable:$true] %s78
      %81 = dma.hbm_to_vmem [thread:$0]  %s21, 16, %s79, [#allocation3]
    $region89: #{hierarchical_transformer_forward.4} parent=1 // pred_fallthru
      _
    // Predicated region
    $region90: #{hierarchical_transformer_forward.4} parent=1 // pred_check
      _
    $region91: #{hierarchical_transformer_forward.4} parent=1 // pred_check_branch
      %83 = sbr.rel (0) target = $region93
    $region92: #{hierarchical_transformer_forward.4} parent=1 // pred_region
      %s85 = ssub.s32 16, 16
      %86 = vsyncadd [#allocation5], %s85
      %s88 = sshll.u32 [#allocation4], 4
      %s89 = int_to_ptr.vmem [resolvable:$true] %s88
      %91 = dma.hbm_to_vmem [thread:$0]  %s22, 16, %s89, [#allocation5]
    $region93: #{hierarchical_transformer_forward.4} parent=1 // pred_fallthru
      _
    // Predicated region
    $region94: #{hierarchical_transformer_forward.4} parent=1 // pred_check
      _
    $region95: #{hierarchical_transformer_forward.4} parent=1 // pred_check_branch
      %93 = sbr.rel (0) target = $region97
    $region96: #{hierarchical_transformer_forward.4} parent=1 // pred_region
      %94 = dma.done [#allocation3], 16
    $region97: #{hierarchical_transformer_forward.4} parent=1 // pred_fallthru
      _
    // Predicated region
    $region98: #{hierarchical_transformer_forward.4} parent=1 // pred_check
      _
    $region99: #{hierarchical_transformer_forward.4} parent=1 // pred_check_branch
      %96 = sbr.rel (0) target = $region101
    $region100: #{hierarchical_transformer_forward.4} parent=1 // pred_region
      %97 = dma.done [#allocation5], 16
    $region101: #{hierarchical_transformer_forward.4} parent=1 // pred_fallthru
      _
    %v99 = vld [vmem:[%s0] sm:$0xff]
    %v100 = vld [vmem:[%s0 + $0x8] sm:$0xff]
    %v101 = vld [vmem:[%s0 + $0x10] sm:$0xff]
    %v102 = vld [vmem:[%s0 + $0x18] sm:$0xff]
    %v103 = vld [vmem:[%s0 + $0x20] sm:$0xff]
    %v104 = vld [vmem:[%s0 + $0x28] sm:$0xff]
    %v105 = vld [vmem:[%s0 + $0x30] sm:$0xff]
    %v106 = vld [vmem:[%s0 + $0x38] sm:$0xff]
    %v107 = vpack.c.bf16 %v100, %v99
    %v108 = vpack.c.bf16 %v102, %v101
    %v109 = vpack.c.bf16 %v104, %v103
    %v110 = vpack.c.bf16 %v106, %v105
    %v111 = vld [vmem:[%s1] sm:$0xf]
    %v112 = vld [vmem:[%s1 + $0x4] sm:$0xf]
    %v113 = vld [vmem:[%s2] sm:$0x1]
    %v115 = vlaneseq
    %v116 = vshrl.u32 %v115, 7
    %v117 = vsub.s32 0, %v116
    %v118 = vrot.slane %v113, %v117
    %v122 = vunpack.c.l.b16 %v111
    %v123 = vunpack.c.l.b16 %v112
    %v124 = vpack.c.b16 %v123, %v122
    %vm126 = vcmask 130048
    %v128 = vsel %vm126, %v107, 0
    %v131 = vsel %vm126, %v108, 0
    %v134 = vsel %vm126, %v109, 0
    %v137 = vsel %vm126, %v110, 0
    %139 = vmatprep.subr.bf16.mxu0 0
    %140 = vmatpush1.bf16.msra.mxu0 0
    %141 = vmatprep.subr.bf16.mxu0 0
    %142 = vmatpush1.bf16.msra.mxu0 0
    %143 = vmatprep.subr.bf16.mxu0 0
    %144 = vmatpush1.bf16.msra.mxu0 0
    %145 = vmatprep.subr.bf16.mxu0 0
    %146 = vmatpush1.bf16.msra.mxu0 0
    %147 = vmatprep.subr.bf16.mxu0 0
    %148 = vmatpush1.bf16.msra.mxu0 0
    %149 = vmatprep.subr.bf16.mxu0 0
    %150 = vmatpush1.bf16.msra.mxu0 0
    %151 = vmatprep.subr.bf16.mxu0 0
    %152 = vmatpush1.bf16.msra.mxu0 0
    %153 = vmatprep.subr.bf16.mxu0 0
    %154 = vmatpush1.bf16.msra.mxu0 %v124
    %155 = vmatprep.subr.bf16.mxu0 0
    %156 = vmatpush2.bf16.msra.mxu0 0
    %157 = vmatprep.subr.bf16.mxu0 0
    %158 = vmatpush2.bf16.msra.mxu0 0
    %159 = vmatprep.subr.bf16.mxu0 0
    %160 = vmatpush2.bf16.msra.mxu0 0
    %161 = vmatprep.subr.bf16.mxu0 0
    %162 = vmatpush2.bf16.msra.mxu0 0
    %163 = vmatprep.subr.bf16.mxu0 0
    %164 = vmatpush2.bf16.msra.mxu0 0
    %165 = vmatprep.subr.bf16.mxu0 0
    %166 = vmatpush2.bf16.msra.mxu0 0
    %167 = vmatprep.subr.bf16.mxu0 0
    %168 = vmatpush2.bf16.msra.mxu0 0
    %169 = vmatprep.subr.bf16.mxu0 0
    %170 = vmatpush2.bf16.msra.mxu0 0
    %171 = vmatprep.mubr.bf16.mxu0 0
    %172 = vmatmul.mubr.bf16.gmra.mxu0 %v128
    %v173 = vpop.f32.mrf.mxu0
    %v174 = vadd.f32 %v118, %v173
    %v175 = vpop.f32.mrf.mxu0
    %v176 = vpop.f32.mrf.mxu0
    %v177 = vadd.f32 %v118, %v176
    %v178 = vpop.f32.mrf.mxu0
    %179 = vmatprep.mubr.bf16.mxu0 0
    %180 = vmatmul.mubr.bf16.gmra.mxu0 %v131
    %v181 = vpop.f32.mrf.mxu0
    %v182 = vadd.f32 %v118, %v181
    %v183 = vpop.f32.mrf.mxu0
    %v184 = vpop.f32.mrf.mxu0
    %v185 = vadd.f32 %v118, %v184
    %v186 = vpop.f32.mrf.mxu0
    %187 = vmatprep.mubr.bf16.mxu0 0
    %188 = vmatmul.mubr.bf16.gmra.mxu0 %v134
    %v189 = vpop.f32.mrf.mxu0
    %v190 = vadd.f32 %v118, %v189
    %v191 = vpop.f32.mrf.mxu0
    %v192 = vpop.f32.mrf.mxu0
    %v193 = vadd.f32 %v118, %v192
    %v194 = vpop.f32.mrf.mxu0
    %195 = vmatprep.mubr.bf16.mxu0 0
    %196 = vmatmul.mubr.bf16.gmra.mxu0 %v137
    %v197 = vpop.f32.mrf.mxu0
    %v198 = vadd.f32 %v118, %v197
    %v199 = vpop.f32.mrf.mxu0
    %v200 = vpop.f32.mrf.mxu0
    %v201 = vadd.f32 %v118, %v200
    %v202 = vpop.f32.mrf.mxu0
    %203 = vdwg.mxu0
    %v204 = vld [vmem:[%s5] sm:$0x1]
    %v205 = vld [vmem:[%s6] sm:$0x1]
    %vm206 = vcmask 261120
    %v207 = vsel %vm206, %v174, 0.0
    %208 = vadd.xlane.f32.xlu0 %v207
    %v209 = vpop.xlane.xlu0 %208
    %v210 = vsel %vm206, %v177, 0.0
    %211 = vadd.xlane.f32.xlu0 %v210
    %v212 = vpop.xlane.xlu0 %211
    %v213 = vsel %vm206, %v182, 0.0
    %214 = vadd.xlane.f32.xlu0 %v213
    %v215 = vpop.xlane.xlu0 %214
    %v216 = vsel %vm206, %v185, 0.0
    %217 = vadd.xlane.f32.xlu0 %v216
    %v218 = vpop.xlane.xlu0 %217
    %v219 = vsel %vm206, %v190, 0.0
    %220 = vadd.xlane.f32.xlu0 %v219
    %v221 = vpop.xlane.xlu0 %220
    %v222 = vsel %vm206, %v193, 0.0
    %223 = vadd.xlane.f32.xlu0 %v222
    %v224 = vpop.xlane.xlu0 %223
    %v225 = vsel %vm206, %v198, 0.0
    %226 = vadd.xlane.f32.xlu0 %v225
    %v227 = vpop.xlane.xlu0 %226
    %v228 = vsel %vm206, %v201, 0.0
    %229 = vadd.xlane.f32.xlu0 %v228
    %v230 = vpop.xlane.xlu0 %229
    %v231 = vrcp.pop 32.0
    %v232 = vmul.f32 %v209, %v231
    %v233 = vmul.f32 %v212, %v231
    %v234 = vmul.f32 %v215, %v231
    %v235 = vmul.f32 %v218, %v231
    %v236 = vmul.f32 %v221, %v231
    %v237 = vmul.f32 %v224, %v231
    %v238 = vmul.f32 %v227, %v231
    %v239 = vmul.f32 %v230, %v231
    %v240 = vsub.f32 %v174, %v232
    %v241 = vsub.f32 %v177, %v233
    %v242 = vsub.f32 %v182, %v234
    %v243 = vsub.f32 %v185, %v235
    %v244 = vsub.f32 %v190, %v236
    %v245 = vsub.f32 %v193, %v237
    %v246 = vsub.f32 %v198, %v238
    %v247 = vsub.f32 %v201, %v239
    %v248 = vmul.f32 %v240, %v240
    %v249 = vmul.f32 %v241, %v241
    %v250 = vmul.f32 %v242, %v242
    %v251 = vmul.f32 %v243, %v243
    %v252 = vmul.f32 %v244, %v244
    %v253 = vmul.f32 %v245, %v245
    %v254 = vmul.f32 %v246, %v246
    %v255 = vmul.f32 %v247, %v247
    %v256 = vsel %vm206, %v248, 0.0
    %257 = vadd.xlane.f32.xlu0 %v256
    %v258 = vpop.xlane.xlu0 %257
    %v259 = vsel %vm206, %v249, 0.0
    %260 = vadd.xlane.f32.xlu0 %v259
    %v261 = vpop.xlane.xlu0 %260
    %v262 = vsel %vm206, %v250, 0.0
    %263 = vadd.xlane.f32.xlu0 %v262
    %v264 = vpop.xlane.xlu0 %263
    %v265 = vsel %vm206, %v251, 0.0
    %266 = vadd.xlane.f32.xlu0 %v265
    %v267 = vpop.xlane.xlu0 %266
    %v268 = vsel %vm206, %v252, 0.0
    %269 = vadd.xlane.f32.xlu0 %v268
    %v270 = vpop.xlane.xlu0 %269
    %v271 = vsel %vm206, %v253, 0.0
    %272 = vadd.xlane.f32.xlu0 %v271
    %v273 = vpop.xlane.xlu0 %272
    %v274 = vsel %vm206, %v254, 0.0
    %275 = vadd.xlane.f32.xlu0 %v274
    %v276 = vpop.xlane.xlu0 %275
    %v277 = vsel %vm206, %v255, 0.0
    %278 = vadd.xlane.f32.xlu0 %v277
    %v279 = vpop.xlane.xlu0 %278
    %v280 = vmul.f32 %v258, %v231
    %v281 = vmul.f32 %v261, %v231
    %v282 = vmul.f32 %v264, %v231
    %v283 = vmul.f32 %v267, %v231
    %v284 = vmul.f32 %v270, %v231
    %v285 = vmul.f32 %v273, %v231
    %v286 = vmul.f32 %v276, %v231
    %v287 = vmul.f32 %v279, %v231
    %v288 = vadd.f32 %v280, 1e-05
    %v289 = vadd.f32 %v281, 1e-05
    %v290 = vadd.f32 %v282, 1e-05
    %v291 = vadd.f32 %v283, 1e-05
    %v292 = vadd.f32 %v284, 1e-05
    %v293 = vadd.f32 %v285, 1e-05
    %v294 = vadd.f32 %v286, 1e-05
    %v295 = vadd.f32 %v287, 1e-05
    %v296 = vrsqrt.pop %v288
    %v297 = vrsqrt.pop %v289
    %v298 = vrsqrt.pop %v290
    %v299 = vrsqrt.pop %v291
    %v300 = vrsqrt.pop %v292
    %v301 = vrsqrt.pop %v293
    %v302 = vrsqrt.pop %v294
    %v303 = vrsqrt.pop %v295
    %v304 = vmul.f32 %v240, %v296
    %v305 = vmul.f32 %v241, %v297
    %v306 = vmul.f32 %v242, %v298
    %v307 = vmul.f32 %v243, %v299
    %v308 = vmul.f32 %v244, %v300
    %v309 = vmul.f32 %v245, %v301
    %v310 = vmul.f32 %v246, %v302
    %v311 = vmul.f32 %v247, %v303
    %v313 = vlaneseq
    %v314 = vshrl.u32 %v313, 7
    %v315 = vsub.s32 0, %v314
    %v316 = vrot.slane %v204, %v315
    %v318 = vmul.f32 %v304, %v316
    %v319 = vmul.f32 %v305, %v316
    %v320 = vmul.f32 %v306, %v316
    %v321 = vmul.f32 %v307, %v316
    %v322 = vmul.f32 %v308, %v316
    %v323 = vmul.f32 %v309, %v316
    %v324 = vmul.f32 %v310, %v316
    %v325 = vmul.f32 %v311, %v316
    %v327 = vlaneseq
    %v328 = vshrl.u32 %v327, 7
    %v329 = vsub.s32 0, %v328
    %v330 = vrot.slane %v205, %v329
    %v332 = vadd.f32 %v318, %v330
    %v333 = vadd.f32 %v319, %v330
    %v334 = vadd.f32 %v320, %v330
    %v335 = vadd.f32 %v321, %v330
    %v336 = vadd.f32 %v322, %v330
    %v337 = vadd.f32 %v323, %v330
    %v338 = vadd.f32 %v324, %v330
    %v339 = vadd.f32 %v325, %v330
    %v340 = vpack.c.bf16 %v333, %v332
    %v341 = vpack.c.bf16 %v335, %v334
    %v342 = vpack.c.bf16 %v337, %v336
    %v343 = vpack.c.bf16 %v339, %v338
    %v344 = vld [vmem:[%s7] sm:$0xf]
    %v345 = vld [vmem:[%s7 + $0x4] sm:$0xf]
    %v346 = vld [vmem:[%s7 + $0x8] sm:$0xf]
    %v347 = vld [vmem:[%s7 + $0xc] sm:$0xf]
    %v348 = vld [vmem:[%s8] sm:$0x1]
    %v350 = vlaneseq
    %v351 = vshrl.u32 %v350, 7
    %v352 = vsub.s32 0, %v351
    %v353 = vrot.slane %v348, %v352
    %v359 = vunpack.c.l.b16 %v344
    %v360 = vunpack.c.l.b16 %v345
    %v361 = vunpack.c.l.b16 %v346
    %v362 = vunpack.c.l.b16 %v347
    %v363 = vpack.c.b16 %v360, %v359
    %v364 = vpack.c.b16 %v362, %v361
    %v368 = vsel %vm206, %v340, 0
    %v371 = vsel %vm206, %v341, 0
    %v374 = vsel %vm206, %v342, 0
    %v377 = vsel %vm206, %v343, 0
    %379 = vmatprep.subr.bf16.mxu0 0
    %380 = vmatpush1.bf16.msra.mxu0 0
    %381 = vmatprep.subr.bf16.mxu0 0
    %382 = vmatpush1.bf16.msra.mxu0 0
    %383 = vmatprep.subr.bf16.mxu0 0
    %384 = vmatpush1.bf16.msra.mxu0 0
    %385 = vmatprep.subr.bf16.mxu0 0
    %386 = vmatpush1.bf16.msra.mxu0 0
    %387 = vmatprep.subr.bf16.mxu0 0
    %388 = vmatpush1.bf16.msra.mxu0 0
    %389 = vmatprep.subr.bf16.mxu0 0
    %390 = vmatpush1.bf16.msra.mxu0 0
    %391 = vmatprep.subr.bf16.mxu0 0
    %392 = vmatpush1.bf16.msra.mxu0 %v364
    %393 = vmatprep.subr.bf16.mxu0 0
    %394 = vmatpush1.bf16.msra.mxu0 %v363
    %395 = vmatprep.subr.bf16.mxu0 0
    %396 = vmatpush2.bf16.msra.mxu0 0
    %397 = vmatprep.subr.bf16.mxu0 0
    %398 = vmatpush2.bf16.msra.mxu0 0
    %399 = vmatprep.subr.bf16.mxu0 0
    %400 = vmatpush2.bf16.msra.mxu0 0
    %401 = vmatprep.subr.bf16.mxu0 0
    %402 = vmatpush2.bf16.msra.mxu0 0
    %403 = vmatprep.subr.bf16.mxu0 0
    %404 = vmatpush2.bf16.msra.mxu0 0
    %405 = vmatprep.subr.bf16.mxu0 0
    %406 = vmatpush2.bf16.msra.mxu0 0
    %407 = vmatprep.subr.bf16.mxu0 0
    %408 = vmatpush2.bf16.msra.mxu0 0
    %409 = vmatprep.subr.bf16.mxu0 0
    %410 = vmatpush2.bf16.msra.mxu0 0
    %411 = vmatprep.mubr.bf16.mxu0 0
    %412 = vmatmul.mubr.bf16.gmra.mxu0 %v368
    %v413 = vpop.f32.mrf.mxu0
    %v414 = vadd.f32 %v353, %v413
    %v415 = vpop.f32.mrf.mxu0
    %v416 = vpop.f32.mrf.mxu0
    %v417 = vadd.f32 %v353, %v416
    %v418 = vpop.f32.mrf.mxu0
    %419 = vmatprep.mubr.bf16.mxu0 0
    %420 = vmatmul.mubr.bf16.gmra.mxu0 %v371
    %v421 = vpop.f32.mrf.mxu0
    %v422 = vadd.f32 %v353, %v421
    %v423 = vpop.f32.mrf.mxu0
    %v424 = vpop.f32.mrf.mxu0
    %v425 = vadd.f32 %v353, %v424
    %v426 = vpop.f32.mrf.mxu0
    %427 = vmatprep.mubr.bf16.mxu0 0
    %428 = vmatmul.mubr.bf16.gmra.mxu0 %v374
    %v429 = vpop.f32.mrf.mxu0
    %v430 = vadd.f32 %v353, %v429
    %v431 = vpop.f32.mrf.mxu0
    %v432 = vpop.f32.mrf.mxu0
    %v433 = vadd.f32 %v353, %v432
    %v434 = vpop.f32.mrf.mxu0
    %435 = vmatprep.mubr.bf16.mxu0 0
    %436 = vmatmul.mubr.bf16.gmra.mxu0 %v377
    %v437 = vpop.f32.mrf.mxu0
    %v438 = vadd.f32 %v353, %v437
    %v439 = vpop.f32.mrf.mxu0
    %v440 = vpop.f32.mrf.mxu0
    %v441 = vadd.f32 %v353, %v440
    %v442 = vpop.f32.mrf.mxu0
    %443 = vdwg.mxu0
    %v444 = vld [vmem:[%s9] sm:$0xf]
    %v445 = vld [vmem:[%s9 + $0x4] sm:$0xf]
    %v446 = vld [vmem:[%s9 + $0x8] sm:$0xf]
    %v447 = vld [vmem:[%s9 + $0xc] sm:$0xf]
    %v448 = vld [vmem:[%s10] sm:$0x1]
    %v450 = vlaneseq
    %v451 = vshrl.u32 %v450, 7
    %v452 = vsub.s32 0, %v451
    %v453 = vrot.slane %v448, %v452
    %v459 = vunpack.c.l.b16 %v444
    %v460 = vunpack.c.l.b16 %v445
    %v461 = vunpack.c.l.b16 %v446
    %v462 = vunpack.c.l.b16 %v447
    %v463 = vpack.c.b16 %v460, %v459
    %v464 = vpack.c.b16 %v462, %v461
    %467 = vmatprep.subr.bf16.mxu0 0
    %468 = vmatpush1.bf16.msra.mxu0 0
    %469 = vmatprep.subr.bf16.mxu0 0
    %470 = vmatpush1.bf16.msra.mxu0 0
    %471 = vmatprep.subr.bf16.mxu0 0
    %472 = vmatpush1.bf16.msra.mxu0 0
    %473 = vmatprep.subr.bf16.mxu0 0
    %474 = vmatpush1.bf16.msra.mxu0 0
    %475 = vmatprep.subr.bf16.mxu0 0
    %476 = vmatpush1.bf16.msra.mxu0 0
    %477 = vmatprep.subr.bf16.mxu0 0
    %478 = vmatpush1.bf16.msra.mxu0 0
    %479 = vmatprep.subr.bf16.mxu0 0
    %480 = vmatpush1.bf16.msra.mxu0 %v464
    %481 = vmatprep.subr.bf16.mxu0 0
    %482 = vmatpush1.bf16.msra.mxu0 %v463
    %483 = vmatprep.subr.bf16.mxu0 0
    %484 = vmatpush2.bf16.msra.mxu0 0
    %485 = vmatprep.subr.bf16.mxu0 0
    %486 = vmatpush2.bf16.msra.mxu0 0
    %487 = vmatprep.subr.bf16.mxu0 0
    %488 = vmatpush2.bf16.msra.mxu0 0
    %489 = vmatprep.subr.bf16.mxu0 0
    %490 = vmatpush2.bf16.msra.mxu0 0
    %491 = vmatprep.subr.bf16.mxu0 0
    %492 = vmatpush2.bf16.msra.mxu0 0
    %493 = vmatprep.subr.bf16.mxu0 0
    %494 = vmatpush2.bf16.msra.mxu0 0
    %495 = vmatprep.subr.bf16.mxu0 0
    %496 = vmatpush2.bf16.msra.mxu0 0
    %497 = vmatprep.subr.bf16.mxu0 0
    %498 = vmatpush2.bf16.msra.mxu0 0
    %499 = vmatprep.mubr.bf16.mxu0 0
    %500 = vmatmul.mubr.bf16.gmra.mxu0 %v368
    %v501 = vpop.f32.mrf.mxu0
    %v502 = vadd.f32 %v453, %v501
    %v503 = vpop.f32.mrf.mxu0
    %v504 = vpop.f32.mrf.mxu0
    %v505 = vadd.f32 %v453, %v504
    %v506 = vpop.f32.mrf.mxu0
    %507 = vmatprep.mubr.bf16.mxu0 0
    %508 = vmatmul.mubr.bf16.gmra.mxu0 %v371
    %v509 = vpop.f32.mrf.mxu0
    %v510 = vadd.f32 %v453, %v509
    %v511 = vpop.f32.mrf.mxu0
    %v512 = vpop.f32.mrf.mxu0
    %v513 = vadd.f32 %v453, %v512
    %v514 = vpop.f32.mrf.mxu0
    %515 = vmatprep.mubr.bf16.mxu0 0
    %516 = vmatmul.mubr.bf16.gmra.mxu0 %v374
    %v517 = vpop.f32.mrf.mxu0
    %v518 = vadd.f32 %v453, %v517
    %v519 = vpop.f32.mrf.mxu0
    %v520 = vpop.f32.mrf.mxu0
    %v521 = vadd.f32 %v453, %v520
    %v522 = vpop.f32.mrf.mxu0
    %523 = vmatprep.mubr.bf16.mxu0 0
    %524 = vmatmul.mubr.bf16.gmra.mxu0 %v377
    %v525 = vpop.f32.mrf.mxu0
    %v526 = vadd.f32 %v453, %v525
    %v527 = vpop.f32.mrf.mxu0
    %v528 = vpop.f32.mrf.mxu0
    %v529 = vadd.f32 %v453, %v528
    %v530 = vpop.f32.mrf.mxu0
    %531 = vdwg.mxu0
    %v532 = vld [vmem:[%s11] sm:$0xf]
    %v533 = vld [vmem:[%s11 + $0x4] sm:$0xf]
    %v534 = vld [vmem:[%s11 + $0x8] sm:$0xf]
    %v535 = vld [vmem:[%s11 + $0xc] sm:$0xf]
    %v536 = vld [vmem:[%s12] sm:$0x1]
    %v538 = vlaneseq
    %v539 = vshrl.u32 %v538, 7
    %v540 = vsub.s32 0, %v539
    %v541 = vrot.slane %v536, %v540
    %v547 = vunpack.c.l.b16 %v532
    %v548 = vunpack.c.l.b16 %v533
    %v549 = vunpack.c.l.b16 %v534
    %v550 = vunpack.c.l.b16 %v535
    %v551 = vpack.c.b16 %v548, %v547
    %v552 = vpack.c.b16 %v550, %v549
    %555 = vmatprep.subr.bf16.mxu0 0
    %556 = vmatpush1.bf16.msra.mxu0 0
    %557 = vmatprep.subr.bf16.mxu0 0
    %558 = vmatpush1.bf16.msra.mxu0 0
    %559 = vmatprep.subr.bf16.mxu0 0
    %560 = vmatpush1.bf16.msra.mxu0 0
    %561 = vmatprep.subr.bf16.mxu0 0
    %562 = vmatpush1.bf16.msra.mxu0 0
    %563 = vmatprep.subr.bf16.mxu0 0
    %564 = vmatpush1.bf16.msra.mxu0 0
    %565 = vmatprep.subr.bf16.mxu0 0
    %566 = vmatpush1.bf16.msra.mxu0 0
    %567 = vmatprep.subr.bf16.mxu0 0
    %568 = vmatpush1.bf16.msra.mxu0 %v552
    %569 = vmatprep.subr.bf16.mxu0 0
    %570 = vmatpush1.bf16.msra.mxu0 %v551
    %571 = vmatprep.subr.bf16.mxu0 0
    %572 = vmatpush2.bf16.msra.mxu0 0
    %573 = vmatprep.subr.bf16.mxu0 0
    %574 = vmatpush2.bf16.msra.mxu0 0
    %575 = vmatprep.subr.bf16.mxu0 0
    %576 = vmatpush2.bf16.msra.mxu0 0
    %577 = vmatprep.subr.bf16.mxu0 0
    %578 = vmatpush2.bf16.msra.mxu0 0
    %579 = vmatprep.subr.bf16.mxu0 0
    %580 = vmatpush2.bf16.msra.mxu0 0
    %581 = vmatprep.subr.bf16.mxu0 0
    %582 = vmatpush2.bf16.msra.mxu0 0
    %583 = vmatprep.subr.bf16.mxu0 0
    %584 = vmatpush2.bf16.msra.mxu0 0
    %585 = vmatprep.subr.bf16.mxu0 0
    %586 = vmatpush2.bf16.msra.mxu0 0
    %587 = vmatprep.mubr.bf16.mxu0 0
    %588 = vmatmul.mubr.bf16.gmra.mxu0 %v368
    %v589 = vpop.f32.mrf.mxu0
    %v590 = vadd.f32 %v541, %v589
    %v591 = vpop.f32.mrf.mxu0
    %v592 = vpop.f32.mrf.mxu0
    %v593 = vadd.f32 %v541, %v592
    %v594 = vpop.f32.mrf.mxu0
    %595 = vmatprep.mubr.bf16.mxu0 0
    %596 = vmatmul.mubr.bf16.gmra.mxu0 %v371
    %v597 = vpop.f32.mrf.mxu0
    %v598 = vadd.f32 %v541, %v597
    %v599 = vpop.f32.mrf.mxu0
    %v600 = vpop.f32.mrf.mxu0
    %v601 = vadd.f32 %v541, %v600
    %v602 = vpop.f32.mrf.mxu0
    %603 = vmatprep.mubr.bf16.mxu0 0
    %604 = vmatmul.mubr.bf16.gmra.mxu0 %v374
    %v605 = vpop.f32.mrf.mxu0
    %v606 = vadd.f32 %v541, %v605
    %v607 = vpop.f32.mrf.mxu0
    %v608 = vpop.f32.mrf.mxu0
    %v609 = vadd.f32 %v541, %v608
    %v610 = vpop.f32.mrf.mxu0
    %611 = vmatprep.mubr.bf16.mxu0 0
    %612 = vmatmul.mubr.bf16.gmra.mxu0 %v377
    %v613 = vpop.f32.mrf.mxu0
    %v614 = vadd.f32 %v541, %v613
    %v615 = vpop.f32.mrf.mxu0
    %v616 = vpop.f32.mrf.mxu0
    %v617 = vadd.f32 %v541, %v616
    %v618 = vpop.f32.mrf.mxu0
    %619 = vdwg.mxu0
    %v620 = vld [vmem:[%s3] sm:$0xff]
    %v621 = vld [vmem:[%s3 + $0x8] sm:$0xff]
    %v622 = vld [vmem:[%s3 + $0x10] sm:$0xff]
    %v623 = vld [vmem:[%s3 + $0x18] sm:$0xff]
    %v624 = vld [vmem:[%s3 + $0x20] sm:$0xff]
    %v625 = vld [vmem:[%s3 + $0x28] sm:$0xff]
    %v626 = vld [vmem:[%s3 + $0x30] sm:$0xff]
    %v627 = vld [vmem:[%s3 + $0x38] sm:$0xff]
    %v628 = vld [vmem:[%s4] sm:$0xf]
    %v629 = vpack.c.bf16 %v505, %v502
    %v630 = vpack.c.bf16 %v513, %v510
    %v631 = vpack.c.bf16 %v521, %v518
    %v632 = vpack.c.bf16 %v529, %v526
    %v633 = vmul.f32 %v414, 0.35355338
    %v634 = vmul.f32 %v417, 0.35355338
    %v635 = vmul.f32 %v422, 0.35355338
    %v636 = vmul.f32 %v425, 0.35355338
    %v637 = vmul.f32 %v430, 0.35355338
    %v638 = vmul.f32 %v433, 0.35355338
    %v639 = vmul.f32 %v438, 0.35355338
    %v640 = vmul.f32 %v441, 0.35355338
    %v641 = vlaneseq
    %v642 = vshrl.u32 %v641, 7
    %v643 = vsub.s32 0, %v642
    %v644 = vrot.slane %v628, %v643
    %v645 = vmul.f32 %v633, %v644
    %v646 = vmul.f32 %v634, %v644
    %v647 = vmul.f32 %v635, %v644
    %v648 = vmul.f32 %v636, %v644
    %v649 = vmul.f32 %v637, %v644
    %v650 = vmul.f32 %v638, %v644
    %v651 = vmul.f32 %v639, %v644
    %v652 = vmul.f32 %v640, %v644
    %v653 = vpack.c.bf16 %v646, %v645
    %v654 = vpack.c.bf16 %v648, %v647
    %v655 = vpack.c.bf16 %v650, %v649
    %v656 = vpack.c.bf16 %v652, %v651
    %v658 = vsel %vm206, %v653, 0
    %v661 = vsel %vm206, %v654, 0
    %v664 = vsel %vm206, %v655, 0
    %v667 = vsel %vm206, %v656, 0
    %v670 = vsel %vm206, %v629, 0
    %v673 = vsel %vm206, %v630, 0
    %v676 = vsel %vm206, %v631, 0
    %v679 = vsel %vm206, %v632, 0
    %681 = vmatprep.subr.bf16.mxu0 0
    %682 = vmatpush1.bf16.xpose.msra.mxu0 0
    %683 = vmatprep.subr.bf16.mxu0 0
    %684 = vmatpush1.bf16.xpose.msra.mxu0 0
    %685 = vmatprep.subr.bf16.mxu0 0
    %686 = vmatpush1.bf16.xpose.msra.mxu0 0
    %687 = vmatprep.subr.bf16.mxu0 0
    %688 = vmatpush1.bf16.xpose.msra.mxu0 0
    %689 = vmatprep.subr.bf16.mxu0 0
    %690 = vmatpush1.bf16.xpose.msra.mxu0 %v679
    %691 = vmatprep.subr.bf16.mxu0 0
    %692 = vmatpush1.bf16.xpose.msra.mxu0 %v676
    %693 = vmatprep.subr.bf16.mxu0 0
    %694 = vmatpush1.bf16.xpose.msra.mxu0 %v673
    %695 = vmatprep.subr.bf16.mxu0 0
    %696 = vmatpush1.bf16.xpose.msra.mxu0 %v670
    %697 = vmatprep.subr.bf16.mxu0 0
    %698 = vmatpush2.bf16.xpose.msra.mxu0 0
    %699 = vmatprep.subr.bf16.mxu0 0
    %700 = vmatpush2.bf16.xpose.msra.mxu0 0
    %701 = vmatprep.subr.bf16.mxu0 0
    %702 = vmatpush2.bf16.xpose.msra.mxu0 0
    %703 = vmatprep.subr.bf16.mxu0 0
    %704 = vmatpush2.bf16.xpose.msra.mxu0 0
    %705 = vmatprep.subr.bf16.mxu0 0
    %706 = vmatpush2.bf16.xpose.msra.mxu0 0
    %707 = vmatprep.subr.bf16.mxu0 0
    %708 = vmatpush2.bf16.xpose.msra.mxu0 0
    %709 = vmatprep.subr.bf16.mxu0 0
    %710 = vmatpush2.bf16.xpose.msra.mxu0 0
    %711 = vmatprep.subr.bf16.mxu0 0
    %712 = vmatpush2.bf16.xpose.msra.mxu0 0
    %713 = vmatprep.mubr.bf16.mxu0 0
    %714 = vmatmul.mubr.bf16.gmra.mxu0 %v658
    %v715 = vpop.f32.mrf.mxu0
    %v716 = vadd.f32 %v620, %v715
    %v717 = vpop.f32.mrf.mxu0
    %v718 = vpop.f32.mrf.mxu0
    %v719 = vadd.f32 %v621, %v718
    %v720 = vpop.f32.mrf.mxu0
    %721 = vmatprep.mubr.bf16.mxu0 0
    %722 = vmatmul.mubr.bf16.gmra.mxu0 %v661
    %v723 = vpop.f32.mrf.mxu0
    %v724 = vadd.f32 %v622, %v723
    %v725 = vpop.f32.mrf.mxu0
    %v726 = vpop.f32.mrf.mxu0
    %v727 = vadd.f32 %v623, %v726
    %v728 = vpop.f32.mrf.mxu0
    %729 = vmatprep.mubr.bf16.mxu0 0
    %730 = vmatmul.mubr.bf16.gmra.mxu0 %v664
    %v731 = vpop.f32.mrf.mxu0
    %v732 = vadd.f32 %v624, %v731
    %v733 = vpop.f32.mrf.mxu0
    %v734 = vpop.f32.mrf.mxu0
    %v735 = vadd.f32 %v625, %v734
    %v736 = vpop.f32.mrf.mxu0
    %737 = vmatprep.mubr.bf16.mxu0 0
    %738 = vmatmul.mubr.bf16.gmra.mxu0 %v667
    %v739 = vpop.f32.mrf.mxu0
    %v740 = vadd.f32 %v626, %v739
    %v741 = vpop.f32.mrf.mxu0
    %v742 = vpop.f32.mrf.mxu0
    %v743 = vadd.f32 %v627, %v742
    %v744 = vpop.f32.mrf.mxu0
    %745 = vdwg.mxu0
    %vm746 = vcmask 523264
    %v747 = vsel %vm746, %v716, -inf
    %748 = vmax.xlane.f32.xlu0 %v747
    %v749 = vpop.xlane.xlu0 %748
    %v750 = vsel %vm746, %v719, -inf
    %751 = vmax.xlane.f32.xlu0 %v750
    %v752 = vpop.xlane.xlu0 %751
    %v753 = vsel %vm746, %v724, -inf
    %754 = vmax.xlane.f32.xlu0 %v753
    %v755 = vpop.xlane.xlu0 %754
    %v756 = vsel %vm746, %v727, -inf
    %757 = vmax.xlane.f32.xlu0 %v756
    %v758 = vpop.xlane.xlu0 %757
    %v759 = vsel %vm746, %v732, -inf
    %760 = vmax.xlane.f32.xlu0 %v759
    %v761 = vpop.xlane.xlu0 %760
    %v762 = vsel %vm746, %v735, -inf
    %763 = vmax.xlane.f32.xlu0 %v762
    %v764 = vpop.xlane.xlu0 %763
    %v765 = vsel %vm746, %v740, -inf
    %766 = vmax.xlane.f32.xlu0 %v765
    %v767 = vpop.xlane.xlu0 %766
    %v768 = vsel %vm746, %v743, -inf
    %769 = vmax.xlane.f32.xlu0 %v768
    %v770 = vpop.xlane.xlu0 %769
    %v771 = vsub.f32 %v716, %v749
    %v772 = vsub.f32 %v719, %v752
    %v773 = vsub.f32 %v724, %v755
    %v774 = vsub.f32 %v727, %v758
    %v775 = vsub.f32 %v732, %v761
    %v776 = vsub.f32 %v735, %v764
    %v777 = vsub.f32 %v740, %v767
    %v778 = vsub.f32 %v743, %v770
    %v779 = vmul.f32 %v771, 1.442695
    %v780 = vpow.pop %v779
    %v781 = vmul.f32 %v772, 1.442695
    %v782 = vpow.pop %v781
    %v783 = vmul.f32 %v773, 1.442695
    %v784 = vpow.pop %v783
    %v785 = vmul.f32 %v774, 1.442695
    %v786 = vpow.pop %v785
    %v787 = vmul.f32 %v775, 1.442695
    %v788 = vpow.pop %v787
    %v789 = vmul.f32 %v776, 1.442695
    %v790 = vpow.pop %v789
    %v791 = vmul.f32 %v777, 1.442695
    %v792 = vpow.pop %v791
    %v793 = vmul.f32 %v778, 1.442695
    %v794 = vpow.pop %v793
    %v795 = vsel %vm746, %v780, 0.0
    %796 = vadd.xlane.f32.xlu0 %v795
    %v797 = vpop.xlane.xlu0 %796
    %v798 = vsel %vm746, %v782, 0.0
    %799 = vadd.xlane.f32.xlu0 %v798
    %v800 = vpop.xlane.xlu0 %799
    %v801 = vsel %vm746, %v784, 0.0
    %802 = vadd.xlane.f32.xlu0 %v801
    %v803 = vpop.xlane.xlu0 %802
    %v804 = vsel %vm746, %v786, 0.0
    %805 = vadd.xlane.f32.xlu0 %v804
    %v806 = vpop.xlane.xlu0 %805
    %v807 = vsel %vm746, %v788, 0.0
    %808 = vadd.xlane.f32.xlu0 %v807
    %v809 = vpop.xlane.xlu0 %808
    %v810 = vsel %vm746, %v790, 0.0
    %811 = vadd.xlane.f32.xlu0 %v810
    %v812 = vpop.xlane.xlu0 %811
    %v813 = vsel %vm746, %v792, 0.0
    %814 = vadd.xlane.f32.xlu0 %v813
    %v815 = vpop.xlane.xlu0 %814
    %v816 = vsel %vm746, %v794, 0.0
    %817 = vadd.xlane.f32.xlu0 %v816
    %v818 = vpop.xlane.xlu0 %817
    %v819 = vrcp.pop %v797
    %v820 = vmul.f32 %v780, %v819
    %v821 = vrcp.pop %v800
    %v822 = vmul.f32 %v782, %v821
    %v823 = vrcp.pop %v803
    %v824 = vmul.f32 %v784, %v823
    %v825 = vrcp.pop %v806
    %v826 = vmul.f32 %v786, %v825
    %v827 = vrcp.pop %v809
    %v828 = vmul.f32 %v788, %v827
    %v829 = vrcp.pop %v812
    %v830 = vmul.f32 %v790, %v829
    %v831 = vrcp.pop %v815
    %v832 = vmul.f32 %v792, %v831
    %v833 = vrcp.pop %v818
    %v834 = vmul.f32 %v794, %v833
    %v835 = vmul.f32 %v590, %v644
    %v836 = vmul.f32 %v593, %v644
    %v837 = vmul.f32 %v598, %v644
    %v838 = vmul.f32 %v601, %v644
    %v839 = vmul.f32 %v606, %v644
    %v840 = vmul.f32 %v609, %v644
    %v841 = vmul.f32 %v614, %v644
    %v842 = vmul.f32 %v617, %v644
    %v843 = vpack.c.bf16 %v836, %v835
    %v844 = vpack.c.bf16 %v838, %v837
    %v845 = vpack.c.bf16 %v840, %v839
    %v846 = vpack.c.bf16 %v842, %v841
    %v847 = vpack.c.bf16 %v822, %v820
    %v848 = vpack.c.bf16 %v826, %v824
    %v849 = vpack.c.bf16 %v830, %v828
    %v850 = vpack.c.bf16 %v834, %v832
    %v851 = vlaneseq
    %v852 = vshrl.u32 %v851, 7
    %v853 = vsub.s32 1, %v852
    %v854 = vrot.slane %v628, %v853
    %v855 = vmul.f32 %v633, %v854
    %v856 = vmul.f32 %v634, %v854
    %v857 = vmul.f32 %v635, %v854
    %v858 = vmul.f32 %v636, %v854
    %v859 = vmul.f32 %v637, %v854
    %v860 = vmul.f32 %v638, %v854
    %v861 = vmul.f32 %v639, %v854
    %v862 = vmul.f32 %v640, %v854
    %v863 = vpack.c.bf16 %v856, %v855
    %v864 = vpack.c.bf16 %v858, %v857
    %v865 = vpack.c.bf16 %v860, %v859
    %v866 = vpack.c.bf16 %v862, %v861
    %v868 = vsel %vm206, %v863, 0
    %v871 = vsel %vm206, %v864, 0
    %v874 = vsel %vm206, %v865, 0
    %v877 = vsel %vm206, %v866, 0
    %879 = vmatprep.subr.bf16.mxu0 0
    %880 = vmatpush1.bf16.xpose.msra.mxu0 0
    %881 = vmatprep.subr.bf16.mxu0 0
    %882 = vmatpush1.bf16.xpose.msra.mxu0 0
    %883 = vmatprep.subr.bf16.mxu0 0
    %884 = vmatpush1.bf16.xpose.msra.mxu0 0
    %885 = vmatprep.subr.bf16.mxu0 0
    %886 = vmatpush1.bf16.xpose.msra.mxu0 0
    %887 = vmatprep.subr.bf16.mxu0 0
    %888 = vmatpush1.bf16.xpose.msra.mxu0 %v679
    %889 = vmatprep.subr.bf16.mxu0 0
    %890 = vmatpush1.bf16.xpose.msra.mxu0 %v676
    %891 = vmatprep.subr.bf16.mxu0 0
    %892 = vmatpush1.bf16.xpose.msra.mxu0 %v673
    %893 = vmatprep.subr.bf16.mxu0 0
    %894 = vmatpush1.bf16.xpose.msra.mxu0 %v670
    %895 = vmatprep.subr.bf16.mxu0 0
    %896 = vmatpush2.bf16.xpose.msra.mxu0 0
    %897 = vmatprep.subr.bf16.mxu0 0
    %898 = vmatpush2.bf16.xpose.msra.mxu0 0
    %899 = vmatprep.subr.bf16.mxu0 0
    %900 = vmatpush2.bf16.xpose.msra.mxu0 0
    %901 = vmatprep.subr.bf16.mxu0 0
    %902 = vmatpush2.bf16.xpose.msra.mxu0 0
    %903 = vmatprep.subr.bf16.mxu0 0
    %904 = vmatpush2.bf16.xpose.msra.mxu0 0
    %905 = vmatprep.subr.bf16.mxu0 0
    %906 = vmatpush2.bf16.xpose.msra.mxu0 0
    %907 = vmatprep.subr.bf16.mxu0 0
    %908 = vmatpush2.bf16.xpose.msra.mxu0 0
    %909 = vmatprep.subr.bf16.mxu0 0
    %910 = vmatpush2.bf16.xpose.msra.mxu0 0
    %911 = vmatprep.mubr.bf16.mxu0 0
    %912 = vmatmul.mubr.bf16.gmra.mxu0 %v868
    %v913 = vpop.f32.mrf.mxu0
    %v914 = vadd.f32 %v620, %v913
    %v915 = vpop.f32.mrf.mxu0
    %v916 = vpop.f32.mrf.mxu0
    %v917 = vadd.f32 %v621, %v916
    %v918 = vpop.f32.mrf.mxu0
    %919 = vmatprep.mubr.bf16.mxu0 0
    %920 = vmatmul.mubr.bf16.gmra.mxu0 %v871
    %v921 = vpop.f32.mrf.mxu0
    %v922 = vadd.f32 %v622, %v921
    %v923 = vpop.f32.mrf.mxu0
    %v924 = vpop.f32.mrf.mxu0
    %v925 = vadd.f32 %v623, %v924
    %v926 = vpop.f32.mrf.mxu0
    %927 = vmatprep.mubr.bf16.mxu0 0
    %928 = vmatmul.mubr.bf16.gmra.mxu0 %v874
    %v929 = vpop.f32.mrf.mxu0
    %v930 = vadd.f32 %v624, %v929
    %v931 = vpop.f32.mrf.mxu0
    %v932 = vpop.f32.mrf.mxu0
    %v933 = vadd.f32 %v625, %v932
    %v934 = vpop.f32.mrf.mxu0
    %935 = vmatprep.mubr.bf16.mxu0 0
    %936 = vmatmul.mubr.bf16.gmra.mxu0 %v877
    %v937 = vpop.f32.mrf.mxu0
    %v938 = vadd.f32 %v626, %v937
    %v939 = vpop.f32.mrf.mxu0
    %v940 = vpop.f32.mrf.mxu0
    %v941 = vadd.f32 %v627, %v940
    %v942 = vpop.f32.mrf.mxu0
    %943 = vdwg.mxu0
    %v944 = vsel %vm746, %v914, -inf
    %945 = vmax.xlane.f32.xlu0 %v944
    %v946 = vpop.xlane.xlu0 %945
    %v947 = vsel %vm746, %v917, -inf
    %948 = vmax.xlane.f32.xlu0 %v947
    %v949 = vpop.xlane.xlu0 %948
    %v950 = vsel %vm746, %v922, -inf
    %951 = vmax.xlane.f32.xlu0 %v950
    %v952 = vpop.xlane.xlu0 %951
    %v953 = vsel %vm746, %v925, -inf
    %954 = vmax.xlane.f32.xlu0 %v953
    %v955 = vpop.xlane.xlu0 %954
    %v956 = vsel %vm746, %v930, -inf
    %957 = vmax.xlane.f32.xlu0 %v956
    %v958 = vpop.xlane.xlu0 %957
    %v959 = vsel %vm746, %v933, -inf
    %960 = vmax.xlane.f32.xlu0 %v959
    %v961 = vpop.xlane.xlu0 %960
    %v962 = vsel %vm746, %v938, -inf
    %963 = vmax.xlane.f32.xlu0 %v962
    %v964 = vpop.xlane.xlu0 %963
    %v965 = vsel %vm746, %v941, -inf
    %966 = vmax.xlane.f32.xlu0 %v965
    %v967 = vpop.xlane.xlu0 %966
    %v968 = vsub.f32 %v914, %v946
    %v969 = vsub.f32 %v917, %v949
    %v970 = vsub.f32 %v922, %v952
    %v971 = vsub.f32 %v925, %v955
    %v972 = vsub.f32 %v930, %v958
    %v973 = vsub.f32 %v933, %v961
    %v974 = vsub.f32 %v938, %v964
    %v975 = vsub.f32 %v941, %v967
    %v976 = vmul.f32 %v968, 1.442695
    %v977 = vpow.pop %v976
    %v978 = vmul.f32 %v969, 1.442695
    %v979 = vpow.pop %v978
    %v980 = vmul.f32 %v970, 1.442695
    %v981 = vpow.pop %v980
    %v982 = vmul.f32 %v971, 1.442695
    %v983 = vpow.pop %v982
    %v984 = vmul.f32 %v972, 1.442695
    %v985 = vpow.pop %v984
    %v986 = vmul.f32 %v973, 1.442695
    %v987 = vpow.pop %v986
    %v988 = vmul.f32 %v974, 1.442695
    %v989 = vpow.pop %v988
    %v990 = vmul.f32 %v975, 1.442695
    %v991 = vpow.pop %v990
    %v992 = vsel %vm746, %v977, 0.0
    %993 = vadd.xlane.f32.xlu0 %v992
    %v994 = vpop.xlane.xlu0 %993
    %v995 = vsel %vm746, %v979, 0.0
    %996 = vadd.xlane.f32.xlu0 %v995
    %v997 = vpop.xlane.xlu0 %996
    %v998 = vsel %vm746, %v981, 0.0
    %999 = vadd.xlane.f32.xlu0 %v998
    %v1000 = vpop.xlane.xlu0 %999
    %v1001 = vsel %vm746, %v983, 0.0
    %1002 = vadd.xlane.f32.xlu0 %v1001
    %v1003 = vpop.xlane.xlu0 %1002
    %v1004 = vsel %vm746, %v985, 0.0
    %1005 = vadd.xlane.f32.xlu0 %v1004
    %v1006 = vpop.xlane.xlu0 %1005
    %v1007 = vsel %vm746, %v987, 0.0
    %1008 = vadd.xlane.f32.xlu0 %v1007
    %v1009 = vpop.xlane.xlu0 %1008
    %v1010 = vsel %vm746, %v989, 0.0
    %1011 = vadd.xlane.f32.xlu0 %v1010
    %v1012 = vpop.xlane.xlu0 %1011
    %v1013 = vsel %vm746, %v991, 0.0
    %1014 = vadd.xlane.f32.xlu0 %v1013
    %v1015 = vpop.xlane.xlu0 %1014
    %v1016 = vrcp.pop %v994
    %v1017 = vmul.f32 %v977, %v1016
    %v1018 = vrcp.pop %v997
    %v1019 = vmul.f32 %v979, %v1018
    %v1020 = vrcp.pop %v1000
    %v1021 = vmul.f32 %v981, %v1020
    %v1022 = vrcp.pop %v1003
    %v1023 = vmul.f32 %v983, %v1022
    %v1024 = vrcp.pop %v1006
    %v1025 = vmul.f32 %v985, %v1024
    %v1026 = vrcp.pop %v1009
    %v1027 = vmul.f32 %v987, %v1026
    %v1028 = vrcp.pop %v1012
    %v1029 = vmul.f32 %v989, %v1028
    %v1030 = vrcp.pop %v1015
    %v1031 = vmul.f32 %v991, %v1030
    %v1032 = vmul.f32 %v590, %v854
    %v1033 = vmul.f32 %v593, %v854
    %v1034 = vmul.f32 %v598, %v854
    %v1035 = vmul.f32 %v601, %v854
    %v1036 = vmul.f32 %v606, %v854
    %v1037 = vmul.f32 %v609, %v854
    %v1038 = vmul.f32 %v614, %v854
    %v1039 = vmul.f32 %v617, %v854
    %v1040 = vpack.c.bf16 %v1033, %v1032
    %v1041 = vpack.c.bf16 %v1035, %v1034
    %v1042 = vpack.c.bf16 %v1037, %v1036
    %v1043 = vpack.c.bf16 %v1039, %v1038
    %v1044 = vpack.c.bf16 %v1019, %v1017
    %v1045 = vpack.c.bf16 %v1023, %v1021
    %v1046 = vpack.c.bf16 %v1027, %v1025
    %v1047 = vpack.c.bf16 %v1031, %v1029
    %v1049 = vsel %vm746, %v1044, 0
    %v1052 = vsel %vm746, %v1045, 0
    %v1055 = vsel %vm746, %v1046, 0
    %v1058 = vsel %vm746, %v1047, 0
    %1060 = vmatprep.subr.bf16.mxu0 0
    %1061 = vmatpush1.bf16.msra.mxu0 0
    %1062 = vmatprep.subr.bf16.mxu0 0
    %1063 = vmatpush1.bf16.msra.mxu0 0
    %1064 = vmatprep.subr.bf16.mxu0 0
    %1065 = vmatpush1.bf16.msra.mxu0 0
    %1066 = vmatprep.subr.bf16.mxu0 0
    %1067 = vmatpush1.bf16.msra.mxu0 0
    %1068 = vmatprep.subr.bf16.mxu0 0
    %1069 = vmatpush1.bf16.msra.mxu0 %v1043
    %1070 = vmatprep.subr.bf16.mxu0 0
    %1071 = vmatpush1.bf16.msra.mxu0 %v1042
    %1072 = vmatprep.subr.bf16.mxu0 0
    %1073 = vmatpush1.bf16.msra.mxu0 %v1041
    %1074 = vmatprep.subr.bf16.mxu0 0
    %1075 = vmatpush1.bf16.msra.mxu0 %v1040
    %1076 = vmatprep.subr.bf16.mxu0 0
    %1077 = vmatpush2.bf16.msra.mxu0 0
    %1078 = vmatprep.subr.bf16.mxu0 0
    %1079 = vmatpush2.bf16.msra.mxu0 0
    %1080 = vmatprep.subr.bf16.mxu0 0
    %1081 = vmatpush2.bf16.msra.mxu0 0
    %1082 = vmatprep.subr.bf16.mxu0 0
    %1083 = vmatpush2.bf16.msra.mxu0 0
    %1084 = vmatprep.subr.bf16.mxu0 0
    %1085 = vmatpush2.bf16.msra.mxu0 0
    %1086 = vmatprep.subr.bf16.mxu0 0
    %1087 = vmatpush2.bf16.msra.mxu0 0
    %1088 = vmatprep.subr.bf16.mxu0 0
    %1089 = vmatpush2.bf16.msra.mxu0 0
    %1090 = vmatprep.subr.bf16.mxu0 0
    %1091 = vmatpush2.bf16.msra.mxu0 0
    %1092 = vmatprep.mubr.bf16.mxu0 0
    %1093 = vmatmul.mubr.bf16.gmra.mxu0 %v1049
    %v1094 = vpop.f32.mrf.mxu0
    %v1095 = vadd.f32 0.0, %v1094
    %v1096 = vpop.f32.mrf.mxu0
    %v1097 = vpop.f32.mrf.mxu0
    %v1098 = vadd.f32 0.0, %v1097
    %v1099 = vpop.f32.mrf.mxu0
    %1100 = vmatprep.mubr.bf16.mxu0 0
    %1101 = vmatmul.mubr.bf16.gmra.mxu0 %v1052
    %v1102 = vpop.f32.mrf.mxu0
    %v1103 = vadd.f32 0.0, %v1102
    %v1104 = vpop.f32.mrf.mxu0
    %v1105 = vpop.f32.mrf.mxu0
    %v1106 = vadd.f32 0.0, %v1105
    %v1107 = vpop.f32.mrf.mxu0
    %1108 = vmatprep.mubr.bf16.mxu0 0
    %1109 = vmatmul.mubr.bf16.gmra.mxu0 %v1055
    %v1110 = vpop.f32.mrf.mxu0
    %v1111 = vadd.f32 0.0, %v1110
    %v1112 = vpop.f32.mrf.mxu0
    %v1113 = vpop.f32.mrf.mxu0
    %v1114 = vadd.f32 0.0, %v1113
    %v1115 = vpop.f32.mrf.mxu0
    %1116 = vmatprep.mubr.bf16.mxu0 0
    %1117 = vmatmul.mubr.bf16.gmra.mxu0 %v1058
    %v1118 = vpop.f32.mrf.mxu0
    %v1119 = vadd.f32 0.0, %v1118
    %v1120 = vpop.f32.mrf.mxu0
    %v1121 = vpop.f32.mrf.mxu0
    %v1122 = vadd.f32 0.0, %v1121
    %v1123 = vpop.f32.mrf.mxu0
    %1124 = vdwg.mxu0
    %v1126 = vsel %vm746, %v847, 0
    %v1129 = vsel %vm746, %v848, 0
    %v1132 = vsel %vm746, %v849, 0
    %v1135 = vsel %vm746, %v850, 0
    %1137 = vmatprep.subr.bf16.mxu0 0
    %1138 = vmatpush1.bf16.msra.mxu0 0
    %1139 = vmatprep.subr.bf16.mxu0 0
    %1140 = vmatpush1.bf16.msra.mxu0 0
    %1141 = vmatprep.subr.bf16.mxu0 0
    %1142 = vmatpush1.bf16.msra.mxu0 0
    %1143 = vmatprep.subr.bf16.mxu0 0
    %1144 = vmatpush1.bf16.msra.mxu0 0
    %1145 = vmatprep.subr.bf16.mxu0 0
    %1146 = vmatpush1.bf16.msra.mxu0 %v846
    %1147 = vmatprep.subr.bf16.mxu0 0
    %1148 = vmatpush1.bf16.msra.mxu0 %v845
    %1149 = vmatprep.subr.bf16.mxu0 0
    %1150 = vmatpush1.bf16.msra.mxu0 %v844
    %1151 = vmatprep.subr.bf16.mxu0 0
    %1152 = vmatpush1.bf16.msra.mxu0 %v843
    %1153 = vmatprep.subr.bf16.mxu0 0
    %1154 = vmatpush2.bf16.msra.mxu0 0
    %1155 = vmatprep.subr.bf16.mxu0 0
    %1156 = vmatpush2.bf16.msra.mxu0 0
    %1157 = vmatprep.subr.bf16.mxu0 0
    %1158 = vmatpush2.bf16.msra.mxu0 0
    %1159 = vmatprep.subr.bf16.mxu0 0
    %1160 = vmatpush2.bf16.msra.mxu0 0
    %1161 = vmatprep.subr.bf16.mxu0 0
    %1162 = vmatpush2.bf16.msra.mxu0 0
    %1163 = vmatprep.subr.bf16.mxu0 0
    %1164 = vmatpush2.bf16.msra.mxu0 0
    %1165 = vmatprep.subr.bf16.mxu0 0
    %1166 = vmatpush2.bf16.msra.mxu0 0
    %1167 = vmatprep.subr.bf16.mxu0 0
    %1168 = vmatpush2.bf16.msra.mxu0 0
    %1169 = vmatprep.mubr.bf16.mxu0 0
    %1170 = vmatmul.mubr.bf16.gmra.mxu0 %v1126
    %v1171 = vpop.f32.mrf.mxu0
    %v1172 = vadd.f32 %v1095, %v1171
    %v1173 = vpop.f32.mrf.mxu0
    %v1174 = vpop.f32.mrf.mxu0
    %v1175 = vadd.f32 %v1098, %v1174
    %v1176 = vpop.f32.mrf.mxu0
    %1177 = vmatprep.mubr.bf16.mxu0 0
    %1178 = vmatmul.mubr.bf16.gmra.mxu0 %v1129
    %v1179 = vpop.f32.mrf.mxu0
    %v1180 = vadd.f32 %v1103, %v1179
    %v1181 = vpop.f32.mrf.mxu0
    %v1182 = vpop.f32.mrf.mxu0
    %v1183 = vadd.f32 %v1106, %v1182
    %v1184 = vpop.f32.mrf.mxu0
    %1185 = vmatprep.mubr.bf16.mxu0 0
    %1186 = vmatmul.mubr.bf16.gmra.mxu0 %v1132
    %v1187 = vpop.f32.mrf.mxu0
    %v1188 = vadd.f32 %v1111, %v1187
    %v1189 = vpop.f32.mrf.mxu0
    %v1190 = vpop.f32.mrf.mxu0
    %v1191 = vadd.f32 %v1114, %v1190
    %v1192 = vpop.f32.mrf.mxu0
    %1193 = vmatprep.mubr.bf16.mxu0 0
    %1194 = vmatmul.mubr.bf16.gmra.mxu0 %v1135
    %v1195 = vpop.f32.mrf.mxu0
    %v1196 = vadd.f32 %v1119, %v1195
    %v1197 = vpop.f32.mrf.mxu0
    %v1198 = vpop.f32.mrf.mxu0
    %v1199 = vadd.f32 %v1122, %v1198
    %v1200 = vpop.f32.mrf.mxu0
    %1201 = vdwg.mxu0
    %v1202 = vlaneseq
    %v1203 = vshrl.u32 %v1202, 7
    %v1204 = vsub.s32 2, %v1203
    %v1205 = vrot.slane %v628, %v1204
    %v1206 = vmul.f32 %v633, %v1205
    %v1207 = vmul.f32 %v634, %v1205
    %v1208 = vmul.f32 %v635, %v1205
    %v1209 = vmul.f32 %v636, %v1205
    %v1210 = vmul.f32 %v637, %v1205
    %v1211 = vmul.f32 %v638, %v1205
    %v1212 = vmul.f32 %v639, %v1205
    %v1213 = vmul.f32 %v640, %v1205
    %v1214 = vpack.c.bf16 %v1207, %v1206
    %v1215 = vpack.c.bf16 %v1209, %v1208
    %v1216 = vpack.c.bf16 %v1211, %v1210
    %v1217 = vpack.c.bf16 %v1213, %v1212
    %v1219 = vsel %vm206, %v1214, 0
    %v1222 = vsel %vm206, %v1215, 0
    %v1225 = vsel %vm206, %v1216, 0
    %v1228 = vsel %vm206, %v1217, 0
    %1230 = vmatprep.subr.bf16.mxu0 0
    %1231 = vmatpush1.bf16.xpose.msra.mxu0 0
    %1232 = vmatprep.subr.bf16.mxu0 0
    %1233 = vmatpush1.bf16.xpose.msra.mxu0 0
    %1234 = vmatprep.subr.bf16.mxu0 0
    %1235 = vmatpush1.bf16.xpose.msra.mxu0 0
    %1236 = vmatprep.subr.bf16.mxu0 0
    %1237 = vmatpush1.bf16.xpose.msra.mxu0 0
    %1238 = vmatprep.subr.bf16.mxu0 0
    %1239 = vmatpush1.bf16.xpose.msra.mxu0 %v679
    %1240 = vmatprep.subr.bf16.mxu0 0
    %1241 = vmatpush1.bf16.xpose.msra.mxu0 %v676
    %1242 = vmatprep.subr.bf16.mxu0 0
    %1243 = vmatpush1.bf16.xpose.msra.mxu0 %v673
    %1244 = vmatprep.subr.bf16.mxu0 0
    %1245 = vmatpush1.bf16.xpose.msra.mxu0 %v670
    %1246 = vmatprep.subr.bf16.mxu0 0
    %1247 = vmatpush2.bf16.xpose.msra.mxu0 0
    %1248 = vmatprep.subr.bf16.mxu0 0
    %1249 = vmatpush2.bf16.xpose.msra.mxu0 0
    %1250 = vmatprep.subr.bf16.mxu0 0
    %1251 = vmatpush2.bf16.xpose.msra.mxu0 0
    %1252 = vmatprep.subr.bf16.mxu0 0
    %1253 = vmatpush2.bf16.xpose.msra.mxu0 0
    %1254 = vmatprep.subr.bf16.mxu0 0
    %1255 = vmatpush2.bf16.xpose.msra.mxu0 0
    %1256 = vmatprep.subr.bf16.mxu0 0
    %1257 = vmatpush2.bf16.xpose.msra.mxu0 0
    %1258 = vmatprep.subr.bf16.mxu0 0
    %1259 = vmatpush2.bf16.xpose.msra.mxu0 0
    %1260 = vmatprep.subr.bf16.mxu0 0
    %1261 = vmatpush2.bf16.xpose.msra.mxu0 0
    %1262 = vmatprep.mubr.bf16.mxu0 0
    %1263 = vmatmul.mubr.bf16.gmra.mxu0 %v1219
    %v1264 = vpop.f32.mrf.mxu0
    %v1265 = vadd.f32 %v620, %v1264
    %v1266 = vpop.f32.mrf.mxu0
    %v1267 = vpop.f32.mrf.mxu0
    %v1268 = vadd.f32 %v621, %v1267
    %v1269 = vpop.f32.mrf.mxu0
    %1270 = vmatprep.mubr.bf16.mxu0 0
    %1271 = vmatmul.mubr.bf16.gmra.mxu0 %v1222
    %v1272 = vpop.f32.mrf.mxu0
    %v1273 = vadd.f32 %v622, %v1272
    %v1274 = vpop.f32.mrf.mxu0
    %v1275 = vpop.f32.mrf.mxu0
    %v1276 = vadd.f32 %v623, %v1275
    %v1277 = vpop.f32.mrf.mxu0
    %1278 = vmatprep.mubr.bf16.mxu0 0
    %1279 = vmatmul.mubr.bf16.gmra.mxu0 %v1225
    %v1280 = vpop.f32.mrf.mxu0
    %v1281 = vadd.f32 %v624, %v1280
    %v1282 = vpop.f32.mrf.mxu0
    %v1283 = vpop.f32.mrf.mxu0
    %v1284 = vadd.f32 %v625, %v1283
    %v1285 = vpop.f32.mrf.mxu0
    %1286 = vmatprep.mubr.bf16.mxu0 0
    %1287 = vmatmul.mubr.bf16.gmra.mxu0 %v1228
    %v1288 = vpop.f32.mrf.mxu0
    %v1289 = vadd.f32 %v626, %v1288
    %v1290 = vpop.f32.mrf.mxu0
    %v1291 = vpop.f32.mrf.mxu0
    %v1292 = vadd.f32 %v627, %v1291
    %v1293 = vpop.f32.mrf.mxu0
    %1294 = vdwg.mxu0
    %v1295 = vsel %vm746, %v1265, -inf
    %1296 = vmax.xlane.f32.xlu0 %v1295
    %v1297 = vpop.xlane.xlu0 %1296
    %v1298 = vsel %vm746, %v1268, -inf
    %1299 = vmax.xlane.f32.xlu0 %v1298
    %v1300 = vpop.xlane.xlu0 %1299
    %v1301 = vsel %vm746, %v1273, -inf
    %1302 = vmax.xlane.f32.xlu0 %v1301
    %v1303 = vpop.xlane.xlu0 %1302
    %v1304 = vsel %vm746, %v1276, -inf
    %1305 = vmax.xlane.f32.xlu0 %v1304
    %v1306 = vpop.xlane.xlu0 %1305
    %v1307 = vsel %vm746, %v1281, -inf
    %1308 = vmax.xlane.f32.xlu0 %v1307
    %v1309 = vpop.xlane.xlu0 %1308
    %v1310 = vsel %vm746, %v1284, -inf
    %1311 = vmax.xlane.f32.xlu0 %v1310
    %v1312 = vpop.xlane.xlu0 %1311
    %v1313 = vsel %vm746, %v1289, -inf
    %1314 = vmax.xlane.f32.xlu0 %v1313
    %v1315 = vpop.xlane.xlu0 %1314
    %v1316 = vsel %vm746, %v1292, -inf
    %1317 = vmax.xlane.f32.xlu0 %v1316
    %v1318 = vpop.xlane.xlu0 %1317
    %v1319 = vsub.f32 %v1265, %v1297
    %v1320 = vsub.f32 %v1268, %v1300
    %v1321 = vsub.f32 %v1273, %v1303
    %v1322 = vsub.f32 %v1276, %v1306
    %v1323 = vsub.f32 %v1281, %v1309
    %v1324 = vsub.f32 %v1284, %v1312
    %v1325 = vsub.f32 %v1289, %v1315
    %v1326 = vsub.f32 %v1292, %v1318
    %v1327 = vmul.f32 %v1319, 1.442695
    %v1328 = vpow.pop %v1327
    %v1329 = vmul.f32 %v1320, 1.442695
    %v1330 = vpow.pop %v1329
    %v1331 = vmul.f32 %v1321, 1.442695
    %v1332 = vpow.pop %v1331
    %v1333 = vmul.f32 %v1322, 1.442695
    %v1334 = vpow.pop %v1333
    %v1335 = vmul.f32 %v1323, 1.442695
    %v1336 = vpow.pop %v1335
    %v1337 = vmul.f32 %v1324, 1.442695
    %v1338 = vpow.pop %v1337
    %v1339 = vmul.f32 %v1325, 1.442695
    %v1340 = vpow.pop %v1339
    %v1341 = vmul.f32 %v1326, 1.442695
    %v1342 = vpow.pop %v1341
    %v1343 = vsel %vm746, %v1328, 0.0
    %1344 = vadd.xlane.f32.xlu0 %v1343
    %v1345 = vpop.xlane.xlu0 %1344
    %v1346 = vsel %vm746, %v1330, 0.0
    %1347 = vadd.xlane.f32.xlu0 %v1346
    %v1348 = vpop.xlane.xlu0 %1347
    %v1349 = vsel %vm746, %v1332, 0.0
    %1350 = vadd.xlane.f32.xlu0 %v1349
    %v1351 = vpop.xlane.xlu0 %1350
    %v1352 = vsel %vm746, %v1334, 0.0
    %1353 = vadd.xlane.f32.xlu0 %v1352
    %v1354 = vpop.xlane.xlu0 %1353
    %v1355 = vsel %vm746, %v1336, 0.0
    %1356 = vadd.xlane.f32.xlu0 %v1355
    %v1357 = vpop.xlane.xlu0 %1356
    %v1358 = vsel %vm746, %v1338, 0.0
    %1359 = vadd.xlane.f32.xlu0 %v1358
    %v1360 = vpop.xlane.xlu0 %1359
    %v1361 = vsel %vm746, %v1340, 0.0
    %1362 = vadd.xlane.f32.xlu0 %v1361
    %v1363 = vpop.xlane.xlu0 %1362
    %v1364 = vsel %vm746, %v1342, 0.0
    %1365 = vadd.xlane.f32.xlu0 %v1364
    %v1366 = vpop.xlane.xlu0 %1365
    %v1367 = vrcp.pop %v1345
    %v1368 = vmul.f32 %v1328, %v1367
    %v1369 = vrcp.pop %v1348
    %v1370 = vmul.f32 %v1330, %v1369
    %v1371 = vrcp.pop %v1351
    %v1372 = vmul.f32 %v1332, %v1371
    %v1373 = vrcp.pop %v1354
    %v1374 = vmul.f32 %v1334, %v1373
    %v1375 = vrcp.pop %v1357
    %v1376 = vmul.f32 %v1336, %v1375
    %v1377 = vrcp.pop %v1360
    %v1378 = vmul.f32 %v1338, %v1377
    %v1379 = vrcp.pop %v1363
    %v1380 = vmul.f32 %v1340, %v1379
    %v1381 = vrcp.pop %v1366
    %v1382 = vmul.f32 %v1342, %v1381
    %v1383 = vmul.f32 %v590, %v1205
    %v1384 = vmul.f32 %v593, %v1205
    %v1385 = vmul.f32 %v598, %v1205
    %v1386 = vmul.f32 %v601, %v1205
    %v1387 = vmul.f32 %v606, %v1205
    %v1388 = vmul.f32 %v609, %v1205
    %v1389 = vmul.f32 %v614, %v1205
    %v1390 = vmul.f32 %v617, %v1205
    %v1391 = vpack.c.bf16 %v1384, %v1383
    %v1392 = vpack.c.bf16 %v1386, %v1385
    %v1393 = vpack.c.bf16 %v1388, %v1387
    %v1394 = vpack.c.bf16 %v1390, %v1389
    %v1395 = vpack.c.bf16 %v1370, %v1368
    %v1396 = vpack.c.bf16 %v1374, %v1372
    %v1397 = vpack.c.bf16 %v1378, %v1376
    %v1398 = vpack.c.bf16 %v1382, %v1380
    %v1400 = vsel %vm746, %v1395, 0
    %v1403 = vsel %vm746, %v1396, 0
    %v1406 = vsel %vm746, %v1397, 0
    %v1409 = vsel %vm746, %v1398, 0
    %1411 = vmatprep.subr.bf16.mxu0 0
    %1412 = vmatpush1.bf16.msra.mxu0 0
    %1413 = vmatprep.subr.bf16.mxu0 0
    %1414 = vmatpush1.bf16.msra.mxu0 0
    %1415 = vmatprep.subr.bf16.mxu0 0
    %1416 = vmatpush1.bf16.msra.mxu0 0
    %1417 = vmatprep.subr.bf16.mxu0 0
    %1418 = vmatpush1.bf16.msra.mxu0 0
    %1419 = vmatprep.subr.bf16.mxu0 0
    %1420 = vmatpush1.bf16.msra.mxu0 %v1394
    %1421 = vmatprep.subr.bf16.mxu0 0
    %1422 = vmatpush1.bf16.msra.mxu0 %v1393
    %1423 = vmatprep.subr.bf16.mxu0 0
    %1424 = vmatpush1.bf16.msra.mxu0 %v1392
    %1425 = vmatprep.subr.bf16.mxu0 0
    %1426 = vmatpush1.bf16.msra.mxu0 %v1391
    %1427 = vmatprep.subr.bf16.mxu0 0
    %1428 = vmatpush2.bf16.msra.mxu0 0
    %1429 = vmatprep.subr.bf16.mxu0 0
    %1430 = vmatpush2.bf16.msra.mxu0 0
    %1431 = vmatprep.subr.bf16.mxu0 0
    %1432 = vmatpush2.bf16.msra.mxu0 0
    %1433 = vmatprep.subr.bf16.mxu0 0
    %1434 = vmatpush2.bf16.msra.mxu0 0
    %1435 = vmatprep.subr.bf16.mxu0 0
    %1436 = vmatpush2.bf16.msra.mxu0 0
    %1437 = vmatprep.subr.bf16.mxu0 0
    %1438 = vmatpush2.bf16.msra.mxu0 0
    %1439 = vmatprep.subr.bf16.mxu0 0
    %1440 = vmatpush2.bf16.msra.mxu0 0
    %1441 = vmatprep.subr.bf16.mxu0 0
    %1442 = vmatpush2.bf16.msra.mxu0 0
    %1443 = vmatprep.mubr.bf16.mxu0 0
    %1444 = vmatmul.mubr.bf16.gmra.mxu0 %v1400
    %v1445 = vpop.f32.mrf.mxu0
    %v1446 = vadd.f32 0.0, %v1445
    %v1447 = vpop.f32.mrf.mxu0
    %v1448 = vpop.f32.mrf.mxu0
    %v1449 = vadd.f32 0.0, %v1448
    %v1450 = vpop.f32.mrf.mxu0
    %1451 = vmatprep.mubr.bf16.mxu0 0
    %1452 = vmatmul.mubr.bf16.gmra.mxu0 %v1403
    %v1453 = vpop.f32.mrf.mxu0
    %v1454 = vadd.f32 0.0, %v1453
    %v1455 = vpop.f32.mrf.mxu0
    %v1456 = vpop.f32.mrf.mxu0
    %v1457 = vadd.f32 0.0, %v1456
    %v1458 = vpop.f32.mrf.mxu0
    %1459 = vmatprep.mubr.bf16.mxu0 0
    %1460 = vmatmul.mubr.bf16.gmra.mxu0 %v1406
    %v1461 = vpop.f32.mrf.mxu0
    %v1462 = vadd.f32 0.0, %v1461
    %v1463 = vpop.f32.mrf.mxu0
    %v1464 = vpop.f32.mrf.mxu0
    %v1465 = vadd.f32 0.0, %v1464
    %v1466 = vpop.f32.mrf.mxu0
    %1467 = vmatprep.mubr.bf16.mxu0 0
    %1468 = vmatmul.mubr.bf16.gmra.mxu0 %v1409
    %v1469 = vpop.f32.mrf.mxu0
    %v1470 = vadd.f32 0.0, %v1469
    %v1471 = vpop.f32.mrf.mxu0
    %v1472 = vpop.f32.mrf.mxu0
    %v1473 = vadd.f32 0.0, %v1472
    %v1474 = vpop.f32.mrf.mxu0
    %1475 = vdwg.mxu0
    %v1476 = vadd.f32 %v1172, %v1446
    %v1477 = vadd.f32 %v1175, %v1449
    %v1478 = vadd.f32 %v1180, %v1454
    %v1479 = vadd.f32 %v1183, %v1457
    %v1480 = vadd.f32 %v1188, %v1462
    %v1481 = vadd.f32 %v1191, %v1465
    %v1482 = vadd.f32 %v1196, %v1470
    %v1483 = vadd.f32 %v1199, %v1473
    %v1484 = vlaneseq
    %v1485 = vshrl.u32 %v1484, 7
    %v1486 = vsub.s32 3, %v1485
    %v1487 = vrot.slane %v628, %v1486
    %v1488 = vmul.f32 %v633, %v1487
    %v1489 = vmul.f32 %v634, %v1487
    %v1490 = vmul.f32 %v635, %v1487
    %v1491 = vmul.f32 %v636, %v1487
    %v1492 = vmul.f32 %v637, %v1487
    %v1493 = vmul.f32 %v638, %v1487
    %v1494 = vmul.f32 %v639, %v1487
    %v1495 = vmul.f32 %v640, %v1487
    %v1496 = vpack.c.bf16 %v1489, %v1488
    %v1497 = vpack.c.bf16 %v1491, %v1490
    %v1498 = vpack.c.bf16 %v1493, %v1492
    %v1499 = vpack.c.bf16 %v1495, %v1494
    %v1501 = vsel %vm206, %v1496, 0
    %v1504 = vsel %vm206, %v1497, 0
    %v1507 = vsel %vm206, %v1498, 0
    %v1510 = vsel %vm206, %v1499, 0
    %1512 = vmatprep.subr.bf16.mxu0 0
    %1513 = vmatpush1.bf16.xpose.msra.mxu0 0
    %1514 = vmatprep.subr.bf16.mxu0 0
    %1515 = vmatpush1.bf16.xpose.msra.mxu0 0
    %1516 = vmatprep.subr.bf16.mxu0 0
    %1517 = vmatpush1.bf16.xpose.msra.mxu0 0
    %1518 = vmatprep.subr.bf16.mxu0 0
    %1519 = vmatpush1.bf16.xpose.msra.mxu0 0
    %1520 = vmatprep.subr.bf16.mxu0 0
    %1521 = vmatpush1.bf16.xpose.msra.mxu0 %v679
    %1522 = vmatprep.subr.bf16.mxu0 0
    %1523 = vmatpush1.bf16.xpose.msra.mxu0 %v676
    %1524 = vmatprep.subr.bf16.mxu0 0
    %1525 = vmatpush1.bf16.xpose.msra.mxu0 %v673
    %1526 = vmatprep.subr.bf16.mxu0 0
    %1527 = vmatpush1.bf16.xpose.msra.mxu0 %v670
    %1528 = vmatprep.subr.bf16.mxu0 0
    %1529 = vmatpush2.bf16.xpose.msra.mxu0 0
    %1530 = vmatprep.subr.bf16.mxu0 0
    %1531 = vmatpush2.bf16.xpose.msra.mxu0 0
    %1532 = vmatprep.subr.bf16.mxu0 0
    %1533 = vmatpush2.bf16.xpose.msra.mxu0 0
    %1534 = vmatprep.subr.bf16.mxu0 0
    %1535 = vmatpush2.bf16.xpose.msra.mxu0 0
    %1536 = vmatprep.subr.bf16.mxu0 0
    %1537 = vmatpush2.bf16.xpose.msra.mxu0 0
    %1538 = vmatprep.subr.bf16.mxu0 0
    %1539 = vmatpush2.bf16.xpose.msra.mxu0 0
    %1540 = vmatprep.subr.bf16.mxu0 0
    %1541 = vmatpush2.bf16.xpose.msra.mxu0 0
    %1542 = vmatprep.subr.bf16.mxu0 0
    %1543 = vmatpush2.bf16.xpose.msra.mxu0 0
    %1544 = vmatprep.mubr.bf16.mxu0 0
    %1545 = vmatmul.mubr.bf16.gmra.mxu0 %v1501
    %v1546 = vpop.f32.mrf.mxu0
    %v1547 = vadd.f32 %v620, %v1546
    %v1548 = vpop.f32.mrf.mxu0
    %v1549 = vpop.f32.mrf.mxu0
    %v1550 = vadd.f32 %v621, %v1549
    %v1551 = vpop.f32.mrf.mxu0
    %1552 = vmatprep.mubr.bf16.mxu0 0
    %1553 = vmatmul.mubr.bf16.gmra.mxu0 %v1504
    %v1554 = vpop.f32.mrf.mxu0
    %v1555 = vadd.f32 %v622, %v1554
    %v1556 = vpop.f32.mrf.mxu0
    %v1557 = vpop.f32.mrf.mxu0
    %v1558 = vadd.f32 %v623, %v1557
    %v1559 = vpop.f32.mrf.mxu0
    %1560 = vmatprep.mubr.bf16.mxu0 0
    %1561 = vmatmul.mubr.bf16.gmra.mxu0 %v1507
    %v1562 = vpop.f32.mrf.mxu0
    %v1563 = vadd.f32 %v624, %v1562
    %v1564 = vpop.f32.mrf.mxu0
    %v1565 = vpop.f32.mrf.mxu0
    %v1566 = vadd.f32 %v625, %v1565
    %v1567 = vpop.f32.mrf.mxu0
    %1568 = vmatprep.mubr.bf16.mxu0 0
    %1569 = vmatmul.mubr.bf16.gmra.mxu0 %v1510
    %v1570 = vpop.f32.mrf.mxu0
    %v1571 = vadd.f32 %v626, %v1570
    %v1572 = vpop.f32.mrf.mxu0
    %v1573 = vpop.f32.mrf.mxu0
    %v1574 = vadd.f32 %v627, %v1573
    %v1575 = vpop.f32.mrf.mxu0
    %1576 = vdwg.mxu0
    %v1577 = vsel %vm746, %v1547, -inf
    %1578 = vmax.xlane.f32.xlu0 %v1577
    %v1579 = vpop.xlane.xlu0 %1578
    %v1580 = vsel %vm746, %v1550, -inf
    %1581 = vmax.xlane.f32.xlu0 %v1580
    %v1582 = vpop.xlane.xlu0 %1581
    %v1583 = vsel %vm746, %v1555, -inf
    %1584 = vmax.xlane.f32.xlu0 %v1583
    %v1585 = vpop.xlane.xlu0 %1584
    %v1586 = vsel %vm746, %v1558, -inf
    %1587 = vmax.xlane.f32.xlu0 %v1586
    %v1588 = vpop.xlane.xlu0 %1587
    %v1589 = vsel %vm746, %v1563, -inf
    %1590 = vmax.xlane.f32.xlu0 %v1589
    %v1591 = vpop.xlane.xlu0 %1590
    %v1592 = vsel %vm746, %v1566, -inf
    %1593 = vmax.xlane.f32.xlu0 %v1592
    %v1594 = vpop.xlane.xlu0 %1593
    %v1595 = vsel %vm746, %v1571, -inf
    %1596 = vmax.xlane.f32.xlu0 %v1595
    %v1597 = vpop.xlane.xlu0 %1596
    %v1598 = vsel %vm746, %v1574, -inf
    %1599 = vmax.xlane.f32.xlu0 %v1598
    %v1600 = vpop.xlane.xlu0 %1599
    %v1601 = vsub.f32 %v1547, %v1579
    %v1602 = vsub.f32 %v1550, %v1582
    %v1603 = vsub.f32 %v1555, %v1585
    %v1604 = vsub.f32 %v1558, %v1588
    %v1605 = vsub.f32 %v1563, %v1591
    %v1606 = vsub.f32 %v1566, %v1594
    %v1607 = vsub.f32 %v1571, %v1597
    %v1608 = vsub.f32 %v1574, %v1600
    %v1609 = vmul.f32 %v1601, 1.442695
    %v1610 = vpow.pop %v1609
    %v1611 = vmul.f32 %v1602, 1.442695
    %v1612 = vpow.pop %v1611
    %v1613 = vmul.f32 %v1603, 1.442695
    %v1614 = vpow.pop %v1613
    %v1615 = vmul.f32 %v1604, 1.442695
    %v1616 = vpow.pop %v1615
    %v1617 = vmul.f32 %v1605, 1.442695
    %v1618 = vpow.pop %v1617
    %v1619 = vmul.f32 %v1606, 1.442695
    %v1620 = vpow.pop %v1619
    %v1621 = vmul.f32 %v1607, 1.442695
    %v1622 = vpow.pop %v1621
    %v1623 = vmul.f32 %v1608, 1.442695
    %v1624 = vpow.pop %v1623
    %v1625 = vsel %vm746, %v1610, 0.0
    %1626 = vadd.xlane.f32.xlu0 %v1625
    %v1627 = vpop.xlane.xlu0 %1626
    %v1628 = vsel %vm746, %v1612, 0.0
    %1629 = vadd.xlane.f32.xlu0 %v1628
    %v1630 = vpop.xlane.xlu0 %1629
    %v1631 = vsel %vm746, %v1614, 0.0
    %1632 = vadd.xlane.f32.xlu0 %v1631
    %v1633 = vpop.xlane.xlu0 %1632
    %v1634 = vsel %vm746, %v1616, 0.0
    %1635 = vadd.xlane.f32.xlu0 %v1634
    %v1636 = vpop.xlane.xlu0 %1635
    %v1637 = vsel %vm746, %v1618, 0.0
    %1638 = vadd.xlane.f32.xlu0 %v1637
    %v1639 = vpop.xlane.xlu0 %1638
    %v1640 = vsel %vm746, %v1620, 0.0
    %1641 = vadd.xlane.f32.xlu0 %v1640
    %v1642 = vpop.xlane.xlu0 %1641
    %v1643 = vsel %vm746, %v1622, 0.0
    %1644 = vadd.xlane.f32.xlu0 %v1643
    %v1645 = vpop.xlane.xlu0 %1644
    %v1646 = vsel %vm746, %v1624, 0.0
    %1647 = vadd.xlane.f32.xlu0 %v1646
    %v1648 = vpop.xlane.xlu0 %1647
    %v1649 = vrcp.pop %v1627
    %v1650 = vmul.f32 %v1610, %v1649
    %v1651 = vrcp.pop %v1630
    %v1652 = vmul.f32 %v1612, %v1651
    %v1653 = vrcp.pop %v1633
    %v1654 = vmul.f32 %v1614, %v1653
    %v1655 = vrcp.pop %v1636
    %v1656 = vmul.f32 %v1616, %v1655
    %v1657 = vrcp.pop %v1639
    %v1658 = vmul.f32 %v1618, %v1657
    %v1659 = vrcp.pop %v1642
    %v1660 = vmul.f32 %v1620, %v1659
    %v1661 = vrcp.pop %v1645
    %v1662 = vmul.f32 %v1622, %v1661
    %v1663 = vrcp.pop %v1648
    %v1664 = vmul.f32 %v1624, %v1663
    %v1665 = vmul.f32 %v590, %v1487
    %v1666 = vmul.f32 %v593, %v1487
    %v1667 = vmul.f32 %v598, %v1487
    %v1668 = vmul.f32 %v601, %v1487
    %v1669 = vmul.f32 %v606, %v1487
    %v1670 = vmul.f32 %v609, %v1487
    %v1671 = vmul.f32 %v614, %v1487
    %v1672 = vmul.f32 %v617, %v1487
    %v1673 = vpack.c.bf16 %v1666, %v1665
    %v1674 = vpack.c.bf16 %v1668, %v1667
    %v1675 = vpack.c.bf16 %v1670, %v1669
    %v1676 = vpack.c.bf16 %v1672, %v1671
    %v1677 = vpack.c.bf16 %v1652, %v1650
    %v1678 = vpack.c.bf16 %v1656, %v1654
    %v1679 = vpack.c.bf16 %v1660, %v1658
    %v1680 = vpack.c.bf16 %v1664, %v1662
    %v1682 = vsel %vm746, %v1677, 0
    %v1685 = vsel %vm746, %v1678, 0
    %v1688 = vsel %vm746, %v1679, 0
    %v1691 = vsel %vm746, %v1680, 0
    %1693 = vmatprep.subr.bf16.mxu0 0
    %1694 = vmatpush1.bf16.msra.mxu0 0
    %1695 = vmatprep.subr.bf16.mxu0 0
    %1696 = vmatpush1.bf16.msra.mxu0 0
    %1697 = vmatprep.subr.bf16.mxu0 0
    %1698 = vmatpush1.bf16.msra.mxu0 0
    %1699 = vmatprep.subr.bf16.mxu0 0
    %1700 = vmatpush1.bf16.msra.mxu0 0
    %1701 = vmatprep.subr.bf16.mxu0 0
    %1702 = vmatpush1.bf16.msra.mxu0 %v1676
    %1703 = vmatprep.subr.bf16.mxu0 0
    %1704 = vmatpush1.bf16.msra.mxu0 %v1675
    %1705 = vmatprep.subr.bf16.mxu0 0
    %1706 = vmatpush1.bf16.msra.mxu0 %v1674
    %1707 = vmatprep.subr.bf16.mxu0 0
    %1708 = vmatpush1.bf16.msra.mxu0 %v1673
    %1709 = vmatprep.subr.bf16.mxu0 0
    %1710 = vmatpush2.bf16.msra.mxu0 0
    %1711 = vmatprep.subr.bf16.mxu0 0
    %1712 = vmatpush2.bf16.msra.mxu0 0
    %1713 = vmatprep.subr.bf16.mxu0 0
    %1714 = vmatpush2.bf16.msra.mxu0 0
    %1715 = vmatprep.subr.bf16.mxu0 0
    %1716 = vmatpush2.bf16.msra.mxu0 0
    %1717 = vmatprep.subr.bf16.mxu0 0
    %1718 = vmatpush2.bf16.msra.mxu0 0
    %1719 = vmatprep.subr.bf16.mxu0 0
    %1720 = vmatpush2.bf16.msra.mxu0 0
    %1721 = vmatprep.subr.bf16.mxu0 0
    %1722 = vmatpush2.bf16.msra.mxu0 0
    %1723 = vmatprep.subr.bf16.mxu0 0
    %1724 = vmatpush2.bf16.msra.mxu0 0
    %1725 = vmatprep.mubr.bf16.mxu0 0
    %1726 = vmatmul.mubr.bf16.gmra.mxu0 %v1682
    %v1727 = vpop.f32.mrf.mxu0
    %v1728 = vadd.f32 0.0, %v1727
    %v1729 = vpop.f32.mrf.mxu0
    %v1730 = vpop.f32.mrf.mxu0
    %v1731 = vadd.f32 0.0, %v1730
    %v1732 = vpop.f32.mrf.mxu0
    %1733 = vmatprep.mubr.bf16.mxu0 0
    %1734 = vmatmul.mubr.bf16.gmra.mxu0 %v1685
    %v1735 = vpop.f32.mrf.mxu0
    %v1736 = vadd.f32 0.0, %v1735
    %v1737 = vpop.f32.mrf.mxu0
    %v1738 = vpop.f32.mrf.mxu0
    %v1739 = vadd.f32 0.0, %v1738
    %v1740 = vpop.f32.mrf.mxu0
    %1741 = vmatprep.mubr.bf16.mxu0 0
    %1742 = vmatmul.mubr.bf16.gmra.mxu0 %v1688
    %v1743 = vpop.f32.mrf.mxu0
    %v1744 = vadd.f32 0.0, %v1743
    %v1745 = vpop.f32.mrf.mxu0
    %v1746 = vpop.f32.mrf.mxu0
    %v1747 = vadd.f32 0.0, %v1746
    %v1748 = vpop.f32.mrf.mxu0
    %1749 = vmatprep.mubr.bf16.mxu0 0
    %1750 = vmatmul.mubr.bf16.gmra.mxu0 %v1691
    %v1751 = vpop.f32.mrf.mxu0
    %v1752 = vadd.f32 0.0, %v1751
    %v1753 = vpop.f32.mrf.mxu0
    %v1754 = vpop.f32.mrf.mxu0
    %v1755 = vadd.f32 0.0, %v1754
    %v1756 = vpop.f32.mrf.mxu0
    %1757 = vdwg.mxu0
    %v1758 = vadd.f32 %v1476, %v1728
    %v1759 = vadd.f32 %v1477, %v1731
    %v1760 = vadd.f32 %v1478, %v1736
    %v1761 = vadd.f32 %v1479, %v1739
    %v1762 = vadd.f32 %v1480, %v1744
    %v1763 = vadd.f32 %v1481, %v1747
    %v1764 = vadd.f32 %v1482, %v1752
    %v1765 = vadd.f32 %v1483, %v1755
    %v1766 = vpack.c.bf16 %v1759, %v1758
    %v1767 = vpack.c.bf16 %v1761, %v1760
    %v1768 = vpack.c.bf16 %v1763, %v1762
    %v1769 = vpack.c.bf16 %v1765, %v1764
    %v1770 = vld [vmem:[%s13] sm:$0xf]
    %v1771 = vld [vmem:[%s13 + $0x4] sm:$0xf]
    %v1772 = vld [vmem:[%s13 + $0x8] sm:$0xf]
    %v1773 = vld [vmem:[%s13 + $0xc] sm:$0xf]
    %v1778 = vunpack.c.l.b16 %v1770
    %v1779 = vunpack.c.l.b16 %v1771
    %v1780 = vunpack.c.l.b16 %v1772
    %v1781 = vunpack.c.l.b16 %v1773
    %v1782 = vpack.c.b16 %v1779, %v1778
    %v1783 = vpack.c.b16 %v1781, %v1780
    %v1787 = vsel %vm206, %v1766, 0
    %v1790 = vsel %vm206, %v1767, 0
    %v1793 = vsel %vm206, %v1768, 0
    %v1796 = vsel %vm206, %v1769, 0
    %1798 = vmatprep.subr.bf16.mxu0 0
    %1799 = vmatpush1.bf16.msra.mxu0 0
    %1800 = vmatprep.subr.bf16.mxu0 0
    %1801 = vmatpush1.bf16.msra.mxu0 0
    %1802 = vmatprep.subr.bf16.mxu0 0
    %1803 = vmatpush1.bf16.msra.mxu0 0
    %1804 = vmatprep.subr.bf16.mxu0 0
    %1805 = vmatpush1.bf16.msra.mxu0 0
    %1806 = vmatprep.subr.bf16.mxu0 0
    %1807 = vmatpush1.bf16.msra.mxu0 0
    %1808 = vmatprep.subr.bf16.mxu0 0
    %1809 = vmatpush1.bf16.msra.mxu0 0
    %1810 = vmatprep.subr.bf16.mxu0 0
    %1811 = vmatpush1.bf16.msra.mxu0 %v1783
    %1812 = vmatprep.subr.bf16.mxu0 0
    %1813 = vmatpush1.bf16.msra.mxu0 %v1782
    %1814 = vmatprep.subr.bf16.mxu0 0
    %1815 = vmatpush2.bf16.msra.mxu0 0
    %1816 = vmatprep.subr.bf16.mxu0 0
    %1817 = vmatpush2.bf16.msra.mxu0 0
    %1818 = vmatprep.subr.bf16.mxu0 0
    %1819 = vmatpush2.bf16.msra.mxu0 0
    %1820 = vmatprep.subr.bf16.mxu0 0
    %1821 = vmatpush2.bf16.msra.mxu0 0
    %1822 = vmatprep.subr.bf16.mxu0 0
    %1823 = vmatpush2.bf16.msra.mxu0 0
    %1824 = vmatprep.subr.bf16.mxu0 0
    %1825 = vmatpush2.bf16.msra.mxu0 0
    %1826 = vmatprep.subr.bf16.mxu0 0
    %1827 = vmatpush2.bf16.msra.mxu0 0
    %1828 = vmatprep.subr.bf16.mxu0 0
    %1829 = vmatpush2.bf16.msra.mxu0 0
    %1830 = vmatprep.mubr.bf16.mxu0 0
    %1831 = vmatmul.mubr.bf16.gmra.mxu0 %v1787
    %v1832 = vpop.f32.mrf.mxu0
    %v1833 = vadd.f32 0.0, %v1832
    %v1834 = vpop.f32.mrf.mxu0
    %v1835 = vpop.f32.mrf.mxu0
    %v1836 = vadd.f32 0.0, %v1835
    %v1837 = vpop.f32.mrf.mxu0
    %1838 = vmatprep.mubr.bf16.mxu0 0
    %1839 = vmatmul.mubr.bf16.gmra.mxu0 %v1790
    %v1840 = vpop.f32.mrf.mxu0
    %v1841 = vadd.f32 0.0, %v1840
    %v1842 = vpop.f32.mrf.mxu0
    %v1843 = vpop.f32.mrf.mxu0
    %v1844 = vadd.f32 0.0, %v1843
    %v1845 = vpop.f32.mrf.mxu0
    %1846 = vmatprep.mubr.bf16.mxu0 0
    %1847 = vmatmul.mubr.bf16.gmra.mxu0 %v1793
    %v1848 = vpop.f32.mrf.mxu0
    %v1849 = vadd.f32 0.0, %v1848
    %v1850 = vpop.f32.mrf.mxu0
    %v1851 = vpop.f32.mrf.mxu0
    %v1852 = vadd.f32 0.0, %v1851
    %v1853 = vpop.f32.mrf.mxu0
    %1854 = vmatprep.mubr.bf16.mxu0 0
    %1855 = vmatmul.mubr.bf16.gmra.mxu0 %v1796
    %v1856 = vpop.f32.mrf.mxu0
    %v1857 = vadd.f32 0.0, %v1856
    %v1858 = vpop.f32.mrf.mxu0
    %v1859 = vpop.f32.mrf.mxu0
    %v1860 = vadd.f32 0.0, %v1859
    %v1861 = vpop.f32.mrf.mxu0
    %1862 = vdwg.mxu0
    %v1863 = vadd.f32 %v174, %v1833
    %v1864 = vadd.f32 %v177, %v1836
    %v1865 = vadd.f32 %v182, %v1841
    %v1866 = vadd.f32 %v185, %v1844
    %v1867 = vadd.f32 %v190, %v1849
    %v1868 = vadd.f32 %v193, %v1852
    %v1869 = vadd.f32 %v198, %v1857
    %v1870 = vadd.f32 %v201, %v1860
    %v1871 = vld [vmem:[%s14] sm:$0x1]
    %v1873 = vlaneseq
    %v1874 = vshrl.u32 %v1873, 7
    %v1875 = vsub.s32 0, %v1874
    %v1876 = vrot.slane %v1871, %v1875
    %v1878 = vadd.f32 %v1863, %v1876
    %v1879 = vadd.f32 %v1864, %v1876
    %v1880 = vadd.f32 %v1865, %v1876
    %v1881 = vadd.f32 %v1866, %v1876
    %v1882 = vadd.f32 %v1867, %v1876
    %v1883 = vadd.f32 %v1868, %v1876
    %v1884 = vadd.f32 %v1869, %v1876
    %v1885 = vadd.f32 %v1870, %v1876
    %v1886 = vld [vmem:[%s15] sm:$0x1]
    %v1887 = vld [vmem:[%s16] sm:$0x1]
    %v1888 = vsel %vm206, %v1878, 0.0
    %1889 = vadd.xlane.f32.xlu0 %v1888
    %v1890 = vpop.xlane.xlu0 %1889
    %v1891 = vsel %vm206, %v1879, 0.0
    %1892 = vadd.xlane.f32.xlu0 %v1891
    %v1893 = vpop.xlane.xlu0 %1892
    %v1894 = vsel %vm206, %v1880, 0.0
    %1895 = vadd.xlane.f32.xlu0 %v1894
    %v1896 = vpop.xlane.xlu0 %1895
    %v1897 = vsel %vm206, %v1881, 0.0
    %1898 = vadd.xlane.f32.xlu0 %v1897
    %v1899 = vpop.xlane.xlu0 %1898
    %v1900 = vsel %vm206, %v1882, 0.0
    %1901 = vadd.xlane.f32.xlu0 %v1900
    %v1902 = vpop.xlane.xlu0 %1901
    %v1903 = vsel %vm206, %v1883, 0.0
    %1904 = vadd.xlane.f32.xlu0 %v1903
    %v1905 = vpop.xlane.xlu0 %1904
    %v1906 = vsel %vm206, %v1884, 0.0
    %1907 = vadd.xlane.f32.xlu0 %v1906
    %v1908 = vpop.xlane.xlu0 %1907
    %v1909 = vsel %vm206, %v1885, 0.0
    %1910 = vadd.xlane.f32.xlu0 %v1909
    %v1911 = vpop.xlane.xlu0 %1910
    %v1912 = vmul.f32 %v1890, %v231
    %v1913 = vmul.f32 %v1893, %v231
    %v1914 = vmul.f32 %v1896, %v231
    %v1915 = vmul.f32 %v1899, %v231
    %v1916 = vmul.f32 %v1902, %v231
    %v1917 = vmul.f32 %v1905, %v231
    %v1918 = vmul.f32 %v1908, %v231
    %v1919 = vmul.f32 %v1911, %v231
    %v1920 = vsub.f32 %v1878, %v1912
    %v1921 = vsub.f32 %v1879, %v1913
    %v1922 = vsub.f32 %v1880, %v1914
    %v1923 = vsub.f32 %v1881, %v1915
    %v1924 = vsub.f32 %v1882, %v1916
    %v1925 = vsub.f32 %v1883, %v1917
    %v1926 = vsub.f32 %v1884, %v1918
    %v1927 = vsub.f32 %v1885, %v1919
    %v1928 = vmul.f32 %v1920, %v1920
    %v1929 = vmul.f32 %v1921, %v1921
    %v1930 = vmul.f32 %v1922, %v1922
    %v1931 = vmul.f32 %v1923, %v1923
    %v1932 = vmul.f32 %v1924, %v1924
    %v1933 = vmul.f32 %v1925, %v1925
    %v1934 = vmul.f32 %v1926, %v1926
    %v1935 = vmul.f32 %v1927, %v1927
    %v1936 = vsel %vm206, %v1928, 0.0
    %1937 = vadd.xlane.f32.xlu0 %v1936
    %v1938 = vpop.xlane.xlu0 %1937
    %v1939 = vsel %vm206, %v1929, 0.0
    %1940 = vadd.xlane.f32.xlu0 %v1939
    %v1941 = vpop.xlane.xlu0 %1940
    %v1942 = vsel %vm206, %v1930, 0.0
    %1943 = vadd.xlane.f32.xlu0 %v1942
    %v1944 = vpop.xlane.xlu0 %1943
    %v1945 = vsel %vm206, %v1931, 0.0
    %1946 = vadd.xlane.f32.xlu0 %v1945
    %v1947 = vpop.xlane.xlu0 %1946
    %v1948 = vsel %vm206, %v1932, 0.0
    %1949 = vadd.xlane.f32.xlu0 %v1948
    %v1950 = vpop.xlane.xlu0 %1949
    %v1951 = vsel %vm206, %v1933, 0.0
    %1952 = vadd.xlane.f32.xlu0 %v1951
    %v1953 = vpop.xlane.xlu0 %1952
    %v1954 = vsel %vm206, %v1934, 0.0
    %1955 = vadd.xlane.f32.xlu0 %v1954
    %v1956 = vpop.xlane.xlu0 %1955
    %v1957 = vsel %vm206, %v1935, 0.0
    %1958 = vadd.xlane.f32.xlu0 %v1957
    %v1959 = vpop.xlane.xlu0 %1958
    %v1960 = vmul.f32 %v1938, %v231
    %v1961 = vmul.f32 %v1941, %v231
    %v1962 = vmul.f32 %v1944, %v231
    %v1963 = vmul.f32 %v1947, %v231
    %v1964 = vmul.f32 %v1950, %v231
    %v1965 = vmul.f32 %v1953, %v231
    %v1966 = vmul.f32 %v1956, %v231
    %v1967 = vmul.f32 %v1959, %v231
    %v1968 = vadd.f32 %v1960, 1e-05
    %v1969 = vadd.f32 %v1961, 1e-05
    %v1970 = vadd.f32 %v1962, 1e-05
    %v1971 = vadd.f32 %v1963, 1e-05
    %v1972 = vadd.f32 %v1964, 1e-05
    %v1973 = vadd.f32 %v1965, 1e-05
    %v1974 = vadd.f32 %v1966, 1e-05
    %v1975 = vadd.f32 %v1967, 1e-05
    %v1976 = vrsqrt.pop %v1968
    %v1977 = vrsqrt.pop %v1969
    %v1978 = vrsqrt.pop %v1970
    %v1979 = vrsqrt.pop %v1971
    %v1980 = vrsqrt.pop %v1972
    %v1981 = vrsqrt.pop %v1973
    %v1982 = vrsqrt.pop %v1974
    %v1983 = vrsqrt.pop %v1975
    %v1984 = vmul.f32 %v1920, %v1976
    %v1985 = vmul.f32 %v1921, %v1977
    %v1986 = vmul.f32 %v1922, %v1978
    %v1987 = vmul.f32 %v1923, %v1979
    %v1988 = vmul.f32 %v1924, %v1980
    %v1989 = vmul.f32 %v1925, %v1981
    %v1990 = vmul.f32 %v1926, %v1982
    %v1991 = vmul.f32 %v1927, %v1983
    %v1993 = vlaneseq
    %v1994 = vshrl.u32 %v1993, 7
    %v1995 = vsub.s32 0, %v1994
    %v1996 = vrot.slane %v1886, %v1995
    %v1998 = vmul.f32 %v1984, %v1996
    %v1999 = vmul.f32 %v1985, %v1996
    %v2000 = vmul.f32 %v1986, %v1996
    %v2001 = vmul.f32 %v1987, %v1996
    %v2002 = vmul.f32 %v1988, %v1996
    %v2003 = vmul.f32 %v1989, %v1996
    %v2004 = vmul.f32 %v1990, %v1996
    %v2005 = vmul.f32 %v1991, %v1996
    %v2007 = vlaneseq
    %v2008 = vshrl.u32 %v2007, 7
    %v2009 = vsub.s32 0, %v2008
    %v2010 = vrot.slane %v1887, %v2009
    %v2012 = vadd.f32 %v1998, %v2010
    %v2013 = vadd.f32 %v1999, %v2010
    %v2014 = vadd.f32 %v2000, %v2010
    %v2015 = vadd.f32 %v2001, %v2010
    %v2016 = vadd.f32 %v2002, %v2010
    %v2017 = vadd.f32 %v2003, %v2010
    %v2018 = vadd.f32 %v2004, %v2010
    %v2019 = vadd.f32 %v2005, %v2010
    %v2020 = vpack.c.bf16 %v2013, %v2012
    %v2021 = vpack.c.bf16 %v2015, %v2014
    %v2022 = vpack.c.bf16 %v2017, %v2016
    %v2023 = vpack.c.bf16 %v2019, %v2018
    %v2024 = vld [vmem:[%s17] sm:$0xf]
    %v2025 = vld [vmem:[%s17 + $0x4] sm:$0xf]
    %v2026 = vld [vmem:[%s17 + $0x8] sm:$0xf]
    %v2027 = vld [vmem:[%s17 + $0xc] sm:$0xf]
    %v2028 = vld [vmem:[%s18] sm:$0x1]
    %v2030 = vlaneseq
    %v2031 = vshrl.u32 %v2030, 7
    %v2032 = vsub.s32 0, %v2031
    %v2033 = vrot.slane %v2028, %v2032
    %v2039 = vunpack.c.l.b16 %v2024
    %v2040 = vunpack.c.l.b16 %v2025
    %v2041 = vunpack.c.l.b16 %v2026
    %v2042 = vunpack.c.l.b16 %v2027
    %v2043 = vpack.c.b16 %v2040, %v2039
    %v2044 = vpack.c.b16 %v2042, %v2041
    %v2048 = vsel %vm206, %v2020, 0
    %v2051 = vsel %vm206, %v2021, 0
    %v2054 = vsel %vm206, %v2022, 0
    %v2057 = vsel %vm206, %v2023, 0
    %2059 = vmatprep.subr.bf16.mxu0 0
    %2060 = vmatpush1.bf16.msra.mxu0 0
    %2061 = vmatprep.subr.bf16.mxu0 0
    %2062 = vmatpush1.bf16.msra.mxu0 0
    %2063 = vmatprep.subr.bf16.mxu0 0
    %2064 = vmatpush1.bf16.msra.mxu0 0
    %2065 = vmatprep.subr.bf16.mxu0 0
    %2066 = vmatpush1.bf16.msra.mxu0 0
    %2067 = vmatprep.subr.bf16.mxu0 0
    %2068 = vmatpush1.bf16.msra.mxu0 0
    %2069 = vmatprep.subr.bf16.mxu0 0
    %2070 = vmatpush1.bf16.msra.mxu0 0
    %2071 = vmatprep.subr.bf16.mxu0 0
    %2072 = vmatpush1.bf16.msra.mxu0 %v2044
    %2073 = vmatprep.subr.bf16.mxu0 0
    %2074 = vmatpush1.bf16.msra.mxu0 %v2043
    %2075 = vmatprep.subr.bf16.mxu0 0
    %2076 = vmatpush2.bf16.msra.mxu0 0
    %2077 = vmatprep.subr.bf16.mxu0 0
    %2078 = vmatpush2.bf16.msra.mxu0 0
    %2079 = vmatprep.subr.bf16.mxu0 0
    %2080 = vmatpush2.bf16.msra.mxu0 0
    %2081 = vmatprep.subr.bf16.mxu0 0
    %2082 = vmatpush2.bf16.msra.mxu0 0
    %2083 = vmatprep.subr.bf16.mxu0 0
    %2084 = vmatpush2.bf16.msra.mxu0 0
    %2085 = vmatprep.subr.bf16.mxu0 0
    %2086 = vmatpush2.bf16.msra.mxu0 0
    %2087 = vmatprep.subr.bf16.mxu0 0
    %2088 = vmatpush2.bf16.msra.mxu0 0
    %2089 = vmatprep.subr.bf16.mxu0 0
    %2090 = vmatpush2.bf16.msra.mxu0 0
    %2091 = vmatprep.mubr.bf16.mxu0 0
    %2092 = vmatmul.mubr.bf16.gmra.mxu0 %v2048
    %v2093 = vpop.f32.mrf.mxu0
    %v2094 = vadd.f32 %v2033, %v2093
    %v2095 = vpop.f32.mrf.mxu0
    %v2096 = vpop.f32.mrf.mxu0
    %v2097 = vadd.f32 %v2033, %v2096
    %v2098 = vpop.f32.mrf.mxu0
    %2099 = vmatprep.mubr.bf16.mxu0 0
    %2100 = vmatmul.mubr.bf16.gmra.mxu0 %v2051
    %v2101 = vpop.f32.mrf.mxu0
    %v2102 = vadd.f32 %v2033, %v2101
    %v2103 = vpop.f32.mrf.mxu0
    %v2104 = vpop.f32.mrf.mxu0
    %v2105 = vadd.f32 %v2033, %v2104
    %v2106 = vpop.f32.mrf.mxu0
    %2107 = vmatprep.mubr.bf16.mxu0 0
    %2108 = vmatmul.mubr.bf16.gmra.mxu0 %v2054
    %v2109 = vpop.f32.mrf.mxu0
    %v2110 = vadd.f32 %v2033, %v2109
    %v2111 = vpop.f32.mrf.mxu0
    %v2112 = vpop.f32.mrf.mxu0
    %v2113 = vadd.f32 %v2033, %v2112
    %v2114 = vpop.f32.mrf.mxu0
    %2115 = vmatprep.mubr.bf16.mxu0 0
    %2116 = vmatmul.mubr.bf16.gmra.mxu0 %v2057
    %v2117 = vpop.f32.mrf.mxu0
    %v2118 = vadd.f32 %v2033, %v2117
    %v2119 = vpop.f32.mrf.mxu0
    %v2120 = vpop.f32.mrf.mxu0
    %v2121 = vadd.f32 %v2033, %v2120
    %v2122 = vpop.f32.mrf.mxu0
    %2123 = vdwg.mxu0
    %v2124 = vmul.f32 %v2094, 0.5
    %v2125 = vmul.f32 %v2097, 0.5
    %v2126 = vmul.f32 %v2102, 0.5
    %v2127 = vmul.f32 %v2105, 0.5
    %v2128 = vmul.f32 %v2110, 0.5
    %v2129 = vmul.f32 %v2113, 0.5
    %v2130 = vmul.f32 %v2118, 0.5
    %v2131 = vmul.f32 %v2121, 0.5
    %v2132 = vmul.f32 %v2094, 0.70710677
    %v2133 = vmul.f32 %v2097, 0.70710677
    %v2134 = vmul.f32 %v2102, 0.70710677
    %v2135 = vmul.f32 %v2105, 0.70710677
    %v2136 = vmul.f32 %v2110, 0.70710677
    %v2137 = vmul.f32 %v2113, 0.70710677
    %v2138 = vmul.f32 %v2118, 0.70710677
    %v2139 = vmul.f32 %v2121, 0.70710677
    %vm2140 = vcmp.ge.f32.partialorder %v2132, 0.0
    %vm2141 = vcmp.ge.f32.partialorder %v2133, 0.0
    %vm2142 = vcmp.ge.f32.partialorder %v2134, 0.0
    %vm2143 = vcmp.ge.f32.partialorder %v2135, 0.0
    %vm2144 = vcmp.ge.f32.partialorder %v2136, 0.0
    %vm2145 = vcmp.ge.f32.partialorder %v2137, 0.0
    %vm2146 = vcmp.ge.f32.partialorder %v2138, 0.0
    %vm2147 = vcmp.ge.f32.partialorder %v2139, 0.0
    %v2148 = vsel %vm2140, 1.0, -1.0
    %v2149 = vsel %vm2141, 1.0, -1.0
    %v2150 = vsel %vm2142, 1.0, -1.0
    %v2151 = vsel %vm2143, 1.0, -1.0
    %v2152 = vsel %vm2144, 1.0, -1.0
    %v2153 = vsel %vm2145, 1.0, -1.0
    %v2154 = vsel %vm2146, 1.0, -1.0
    %v2155 = vsel %vm2147, 1.0, -1.0
    %v2156 = vand.u32 2147483647, %v2132
    %v2157 = vand.u32 2147483647, %v2133
    %v2158 = vand.u32 2147483647, %v2134
    %v2159 = vand.u32 2147483647, %v2135
    %v2160 = vand.u32 2147483647, %v2136
    %v2161 = vand.u32 2147483647, %v2137
    %v2162 = vand.u32 2147483647, %v2138
    %v2163 = vand.u32 2147483647, %v2139
    %v2164 = vmul.f32 %v2156, 0.3275911
    %v2165 = vmul.f32 %v2157, 0.3275911
    %v2166 = vmul.f32 %v2158, 0.3275911
    %v2167 = vmul.f32 %v2159, 0.3275911
    %v2168 = vmul.f32 %v2160, 0.3275911
    %v2169 = vmul.f32 %v2161, 0.3275911
    %v2170 = vmul.f32 %v2162, 0.3275911
    %v2171 = vmul.f32 %v2163, 0.3275911
    %v2172 = vadd.f32 %v2164, 1.0
    %v2173 = vadd.f32 %v2165, 1.0
    %v2174 = vadd.f32 %v2166, 1.0
    %v2175 = vadd.f32 %v2167, 1.0
    %v2176 = vadd.f32 %v2168, 1.0
    %v2177 = vadd.f32 %v2169, 1.0
    %v2178 = vadd.f32 %v2170, 1.0
    %v2179 = vadd.f32 %v2171, 1.0
    %v2180 = vrcp.pop %v2172
    %v2181 = vmul.f32 1.0, %v2180
    %v2182 = vrcp.pop %v2173
    %v2183 = vmul.f32 1.0, %v2182
    %v2184 = vrcp.pop %v2174
    %v2185 = vmul.f32 1.0, %v2184
    %v2186 = vrcp.pop %v2175
    %v2187 = vmul.f32 1.0, %v2186
    %v2188 = vrcp.pop %v2176
    %v2189 = vmul.f32 1.0, %v2188
    %v2190 = vrcp.pop %v2177
    %v2191 = vmul.f32 1.0, %v2190
    %v2192 = vrcp.pop %v2178
    %v2193 = vmul.f32 1.0, %v2192
    %v2194 = vrcp.pop %v2179
    %v2195 = vmul.f32 1.0, %v2194
    %v2196 = vmul.f32 %v2181, 1.0614054
    %v2197 = vmul.f32 %v2183, 1.0614054
    %v2198 = vmul.f32 %v2185, 1.0614054
    %v2199 = vmul.f32 %v2187, 1.0614054
    %v2200 = vmul.f32 %v2189, 1.0614054
    %v2201 = vmul.f32 %v2191, 1.0614054
    %v2202 = vmul.f32 %v2193, 1.0614054
    %v2203 = vmul.f32 %v2195, 1.0614054
    %v2204 = vadd.f32 %v2196, -1.4531521
    %v2205 = vadd.f32 %v2197, -1.4531521
    %v2206 = vadd.f32 %v2198, -1.4531521
    %v2207 = vadd.f32 %v2199, -1.4531521
    %v2208 = vadd.f32 %v2200, -1.4531521
    %v2209 = vadd.f32 %v2201, -1.4531521
    %v2210 = vadd.f32 %v2202, -1.4531521
    %v2211 = vadd.f32 %v2203, -1.4531521
    %v2212 = vmul.f32 %v2204, %v2181
    %v2213 = vmul.f32 %v2205, %v2183
    %v2214 = vmul.f32 %v2206, %v2185
    %v2215 = vmul.f32 %v2207, %v2187
    %v2216 = vmul.f32 %v2208, %v2189
    %v2217 = vmul.f32 %v2209, %v2191
    %v2218 = vmul.f32 %v2210, %v2193
    %v2219 = vmul.f32 %v2211, %v2195
    %v2220 = vadd.f32 %v2212, 1.4214138
    %v2221 = vadd.f32 %v2213, 1.4214138
    %v2222 = vadd.f32 %v2214, 1.4214138
    %v2223 = vadd.f32 %v2215, 1.4214138
    %v2224 = vadd.f32 %v2216, 1.4214138
    %v2225 = vadd.f32 %v2217, 1.4214138
    %v2226 = vadd.f32 %v2218, 1.4214138
    %v2227 = vadd.f32 %v2219, 1.4214138
    %v2228 = vmul.f32 %v2220, %v2181
    %v2229 = vmul.f32 %v2221, %v2183
    %v2230 = vmul.f32 %v2222, %v2185
    %v2231 = vmul.f32 %v2223, %v2187
    %v2232 = vmul.f32 %v2224, %v2189
    %v2233 = vmul.f32 %v2225, %v2191
    %v2234 = vmul.f32 %v2226, %v2193
    %v2235 = vmul.f32 %v2227, %v2195
    %v2236 = vadd.f32 %v2228, -0.28449672
    %v2237 = vadd.f32 %v2229, -0.28449672
    %v2238 = vadd.f32 %v2230, -0.28449672
    %v2239 = vadd.f32 %v2231, -0.28449672
    %v2240 = vadd.f32 %v2232, -0.28449672
    %v2241 = vadd.f32 %v2233, -0.28449672
    %v2242 = vadd.f32 %v2234, -0.28449672
    %v2243 = vadd.f32 %v2235, -0.28449672
    %v2244 = vmul.f32 %v2236, %v2181
    %v2245 = vmul.f32 %v2237, %v2183
    %v2246 = vmul.f32 %v2238, %v2185
    %v2247 = vmul.f32 %v2239, %v2187
    %v2248 = vmul.f32 %v2240, %v2189
    %v2249 = vmul.f32 %v2241, %v2191
    %v2250 = vmul.f32 %v2242, %v2193
    %v2251 = vmul.f32 %v2243, %v2195
    %v2252 = vadd.f32 %v2244, 0.2548296
    %v2253 = vadd.f32 %v2245, 0.2548296
    %v2254 = vadd.f32 %v2246, 0.2548296
    %v2255 = vadd.f32 %v2247, 0.2548296
    %v2256 = vadd.f32 %v2248, 0.2548296
    %v2257 = vadd.f32 %v2249, 0.2548296
    %v2258 = vadd.f32 %v2250, 0.2548296
    %v2259 = vadd.f32 %v2251, 0.2548296
    %v2260 = vmul.f32 %v2252, %v2181
    %v2261 = vmul.f32 %v2253, %v2183
    %v2262 = vmul.f32 %v2254, %v2185
    %v2263 = vmul.f32 %v2255, %v2187
    %v2264 = vmul.f32 %v2256, %v2189
    %v2265 = vmul.f32 %v2257, %v2191
    %v2266 = vmul.f32 %v2258, %v2193
    %v2267 = vmul.f32 %v2259, %v2195
    %v2268 = vsub.f32 0.0, %v2156
    %v2269 = vsub.f32 0.0, %v2157
    %v2270 = vsub.f32 0.0, %v2158
    %v2271 = vsub.f32 0.0, %v2159
    %v2272 = vsub.f32 0.0, %v2160
    %v2273 = vsub.f32 0.0, %v2161
    %v2274 = vsub.f32 0.0, %v2162
    %v2275 = vsub.f32 0.0, %v2163
    %v2276 = vmul.f32 %v2268, %v2156
    %v2277 = vmul.f32 %v2269, %v2157
    %v2278 = vmul.f32 %v2270, %v2158
    %v2279 = vmul.f32 %v2271, %v2159
    %v2280 = vmul.f32 %v2272, %v2160
    %v2281 = vmul.f32 %v2273, %v2161
    %v2282 = vmul.f32 %v2274, %v2162
    %v2283 = vmul.f32 %v2275, %v2163
    %v2284 = vmul.f32 %v2276, 1.442695
    %v2285 = vpow.pop %v2284
    %v2286 = vmul.f32 %v2277, 1.442695
    %v2287 = vpow.pop %v2286
    %v2288 = vmul.f32 %v2278, 1.442695
    %v2289 = vpow.pop %v2288
    %v2290 = vmul.f32 %v2279, 1.442695
    %v2291 = vpow.pop %v2290
    %v2292 = vmul.f32 %v2280, 1.442695
    %v2293 = vpow.pop %v2292
    %v2294 = vmul.f32 %v2281, 1.442695
    %v2295 = vpow.pop %v2294
    %v2296 = vmul.f32 %v2282, 1.442695
    %v2297 = vpow.pop %v2296
    %v2298 = vmul.f32 %v2283, 1.442695
    %v2299 = vpow.pop %v2298
    %v2300 = vmul.f32 %v2260, %v2285
    %v2301 = vmul.f32 %v2261, %v2287
    %v2302 = vmul.f32 %v2262, %v2289
    %v2303 = vmul.f32 %v2263, %v2291
    %v2304 = vmul.f32 %v2264, %v2293
    %v2305 = vmul.f32 %v2265, %v2295
    %v2306 = vmul.f32 %v2266, %v2297
    %v2307 = vmul.f32 %v2267, %v2299
    %v2308 = vsub.f32 1.0, %v2300
    %v2309 = vsub.f32 1.0, %v2301
    %v2310 = vsub.f32 1.0, %v2302
    %v2311 = vsub.f32 1.0, %v2303
    %v2312 = vsub.f32 1.0, %v2304
    %v2313 = vsub.f32 1.0, %v2305
    %v2314 = vsub.f32 1.0, %v2306
    %v2315 = vsub.f32 1.0, %v2307
    %v2316 = vmul.f32 %v2148, %v2308
    %v2317 = vmul.f32 %v2149, %v2309
    %v2318 = vmul.f32 %v2150, %v2310
    %v2319 = vmul.f32 %v2151, %v2311
    %v2320 = vmul.f32 %v2152, %v2312
    %v2321 = vmul.f32 %v2153, %v2313
    %v2322 = vmul.f32 %v2154, %v2314
    %v2323 = vmul.f32 %v2155, %v2315
    %v2324 = vadd.f32 %v2316, 1.0
    %v2325 = vadd.f32 %v2317, 1.0
    %v2326 = vadd.f32 %v2318, 1.0
    %v2327 = vadd.f32 %v2319, 1.0
    %v2328 = vadd.f32 %v2320, 1.0
    %v2329 = vadd.f32 %v2321, 1.0
    %v2330 = vadd.f32 %v2322, 1.0
    %v2331 = vadd.f32 %v2323, 1.0
    %v2332 = vmul.f32 %v2124, %v2324
    %v2333 = vmul.f32 %v2125, %v2325
    %v2334 = vmul.f32 %v2126, %v2326
    %v2335 = vmul.f32 %v2127, %v2327
    %v2336 = vmul.f32 %v2128, %v2328
    %v2337 = vmul.f32 %v2129, %v2329
    %v2338 = vmul.f32 %v2130, %v2330
    %v2339 = vmul.f32 %v2131, %v2331
    %v2340 = vpack.c.bf16 %v2333, %v2332
    %v2341 = vpack.c.bf16 %v2335, %v2334
    %v2342 = vpack.c.bf16 %v2337, %v2336
    %v2343 = vpack.c.bf16 %v2339, %v2338
    %v2344 = vld [vmem:[%s19] sm:$0xf]
    %v2345 = vld [vmem:[%s19 + $0x4] sm:$0xf]
    %v2346 = vld [vmem:[%s19 + $0x8] sm:$0xf]
    %v2347 = vld [vmem:[%s19 + $0xc] sm:$0xf]
    %v2348 = vld [vmem:[%s19 + $0x10] sm:$0xf]
    %v2349 = vld [vmem:[%s19 + $0x14] sm:$0xf]
    %v2350 = vld [vmem:[%s19 + $0x18] sm:$0xf]
    %v2351 = vld [vmem:[%s19 + $0x1c] sm:$0xf]
    %v2360 = vunpack.c.l.b16 %v2344
    %v2361 = vunpack.c.l.b16 %v2345
    %v2362 = vunpack.c.l.b16 %v2346
    %v2363 = vunpack.c.l.b16 %v2347
    %v2364 = vunpack.c.l.b16 %v2348
    %v2365 = vunpack.c.l.b16 %v2349
    %v2366 = vunpack.c.l.b16 %v2350
    %v2367 = vunpack.c.l.b16 %v2351
    %v2368 = vpack.c.b16 %v2361, %v2360
    %v2369 = vpack.c.b16 %v2363, %v2362
    %v2370 = vpack.c.b16 %v2365, %v2364
    %v2371 = vpack.c.b16 %v2367, %v2366
    %v2377 = vsel %vm746, %v2340, 0
    %v2380 = vsel %vm746, %v2341, 0
    %v2383 = vsel %vm746, %v2342, 0
    %v2386 = vsel %vm746, %v2343, 0
    %2388 = vmatprep.subr.bf16.mxu0 0
    %2389 = vmatpush1.bf16.msra.mxu0 0
    %2390 = vmatprep.subr.bf16.mxu0 0
    %2391 = vmatpush1.bf16.msra.mxu0 0
    %2392 = vmatprep.subr.bf16.mxu0 0
    %2393 = vmatpush1.bf16.msra.mxu0 0
    %2394 = vmatprep.subr.bf16.mxu0 0
    %2395 = vmatpush1.bf16.msra.mxu0 0
    %2396 = vmatprep.subr.bf16.mxu0 0
    %2397 = vmatpush1.bf16.msra.mxu0 %v2371
    %2398 = vmatprep.subr.bf16.mxu0 0
    %2399 = vmatpush1.bf16.msra.mxu0 %v2370
    %2400 = vmatprep.subr.bf16.mxu0 0
    %2401 = vmatpush1.bf16.msra.mxu0 %v2369
    %2402 = vmatprep.subr.bf16.mxu0 0
    %2403 = vmatpush1.bf16.msra.mxu0 %v2368
    %2404 = vmatprep.subr.bf16.mxu0 0
    %2405 = vmatpush2.bf16.msra.mxu0 0
    %2406 = vmatprep.subr.bf16.mxu0 0
    %2407 = vmatpush2.bf16.msra.mxu0 0
    %2408 = vmatprep.subr.bf16.mxu0 0
    %2409 = vmatpush2.bf16.msra.mxu0 0
    %2410 = vmatprep.subr.bf16.mxu0 0
    %2411 = vmatpush2.bf16.msra.mxu0 0
    %2412 = vmatprep.subr.bf16.mxu0 0
    %2413 = vmatpush2.bf16.msra.mxu0 0
    %2414 = vmatprep.subr.bf16.mxu0 0
    %2415 = vmatpush2.bf16.msra.mxu0 0
    %2416 = vmatprep.subr.bf16.mxu0 0
    %2417 = vmatpush2.bf16.msra.mxu0 0
    %2418 = vmatprep.subr.bf16.mxu0 0
    %2419 = vmatpush2.bf16.msra.mxu0 0
    %2420 = vmatprep.mubr.bf16.mxu0 0
    %2421 = vmatmul.mubr.bf16.gmra.mxu0 %v2377
    %v2422 = vpop.f32.mrf.mxu0
    %v2423 = vadd.f32 0.0, %v2422
    %v2424 = vpop.f32.mrf.mxu0
    %v2425 = vpop.f32.mrf.mxu0
    %v2426 = vadd.f32 0.0, %v2425
    %v2427 = vpop.f32.mrf.mxu0
    %2428 = vmatprep.mubr.bf16.mxu0 0
    %2429 = vmatmul.mubr.bf16.gmra.mxu0 %v2380
    %v2430 = vpop.f32.mrf.mxu0
    %v2431 = vadd.f32 0.0, %v2430
    %v2432 = vpop.f32.mrf.mxu0
    %v2433 = vpop.f32.mrf.mxu0
    %v2434 = vadd.f32 0.0, %v2433
    %v2435 = vpop.f32.mrf.mxu0
    %2436 = vmatprep.mubr.bf16.mxu0 0
    %2437 = vmatmul.mubr.bf16.gmra.mxu0 %v2383
    %v2438 = vpop.f32.mrf.mxu0
    %v2439 = vadd.f32 0.0, %v2438
    %v2440 = vpop.f32.mrf.mxu0
    %v2441 = vpop.f32.mrf.mxu0
    %v2442 = vadd.f32 0.0, %v2441
    %v2443 = vpop.f32.mrf.mxu0
    %2444 = vmatprep.mubr.bf16.mxu0 0
    %2445 = vmatmul.mubr.bf16.gmra.mxu0 %v2386
    %v2446 = vpop.f32.mrf.mxu0
    %v2447 = vadd.f32 0.0, %v2446
    %v2448 = vpop.f32.mrf.mxu0
    %v2449 = vpop.f32.mrf.mxu0
    %v2450 = vadd.f32 0.0, %v2449
    %v2451 = vpop.f32.mrf.mxu0
    %2452 = vdwg.mxu0
    %v2453 = vadd.f32 %v1878, %v2423
    %v2454 = vadd.f32 %v1879, %v2426
    %v2455 = vadd.f32 %v1880, %v2431
    %v2456 = vadd.f32 %v1881, %v2434
    %v2457 = vadd.f32 %v1882, %v2439
    %v2458 = vadd.f32 %v1883, %v2442
    %v2459 = vadd.f32 %v1884, %v2447
    %v2460 = vadd.f32 %v1885, %v2450
    %v2461 = vld [vmem:[%s20] sm:$0x1]
    %v2463 = vlaneseq
    %v2464 = vshrl.u32 %v2463, 7
    %v2465 = vsub.s32 0, %v2464
    %v2466 = vrot.slane %v2461, %v2465
    %v2468 = vadd.f32 %v2453, %v2466
    %v2469 = vadd.f32 %v2454, %v2466
    %v2470 = vadd.f32 %v2455, %v2466
    %v2471 = vadd.f32 %v2456, %v2466
    %v2472 = vadd.f32 %v2457, %v2466
    %v2473 = vadd.f32 %v2458, %v2466
    %v2474 = vadd.f32 %v2459, %v2466
    %v2475 = vadd.f32 %v2460, %v2466
    %v2476 = vld [vmem:[#allocation2] sm:$0x1]
    %v2477 = vld [vmem:[#allocation4] sm:$0x1]
    %v2478 = vsel %vm206, %v2468, 0.0
    %2479 = vadd.xlane.f32.xlu0 %v2478
    %v2480 = vpop.xlane.xlu0 %2479
    %v2481 = vsel %vm206, %v2469, 0.0
    %2482 = vadd.xlane.f32.xlu0 %v2481
    %v2483 = vpop.xlane.xlu0 %2482
    %v2484 = vsel %vm206, %v2470, 0.0
    %2485 = vadd.xlane.f32.xlu0 %v2484
    %v2486 = vpop.xlane.xlu0 %2485
    %v2487 = vsel %vm206, %v2471, 0.0
    %2488 = vadd.xlane.f32.xlu0 %v2487
    %v2489 = vpop.xlane.xlu0 %2488
    %v2490 = vsel %vm206, %v2472, 0.0
    %2491 = vadd.xlane.f32.xlu0 %v2490
    %v2492 = vpop.xlane.xlu0 %2491
    %v2493 = vsel %vm206, %v2473, 0.0
    %2494 = vadd.xlane.f32.xlu0 %v2493
    %v2495 = vpop.xlane.xlu0 %2494
    %v2496 = vsel %vm206, %v2474, 0.0
    %2497 = vadd.xlane.f32.xlu0 %v2496
    %v2498 = vpop.xlane.xlu0 %2497
    %v2499 = vsel %vm206, %v2475, 0.0
    %2500 = vadd.xlane.f32.xlu0 %v2499
    %v2501 = vpop.xlane.xlu0 %2500
    %v2502 = vmul.f32 %v2480, %v231
    %v2503 = vmul.f32 %v2483, %v231
    %v2504 = vmul.f32 %v2486, %v231
    %v2505 = vmul.f32 %v2489, %v231
    %v2506 = vmul.f32 %v2492, %v231
    %v2507 = vmul.f32 %v2495, %v231
    %v2508 = vmul.f32 %v2498, %v231
    %v2509 = vmul.f32 %v2501, %v231
    %v2510 = vsub.f32 %v2468, %v2502
    %v2511 = vsub.f32 %v2469, %v2503
    %v2512 = vsub.f32 %v2470, %v2504
    %v2513 = vsub.f32 %v2471, %v2505
    %v2514 = vsub.f32 %v2472, %v2506
    %v2515 = vsub.f32 %v2473, %v2507
    %v2516 = vsub.f32 %v2474, %v2508
    %v2517 = vsub.f32 %v2475, %v2509
    %v2518 = vmul.f32 %v2510, %v2510
    %v2519 = vmul.f32 %v2511, %v2511
    %v2520 = vmul.f32 %v2512, %v2512
    %v2521 = vmul.f32 %v2513, %v2513
    %v2522 = vmul.f32 %v2514, %v2514
    %v2523 = vmul.f32 %v2515, %v2515
    %v2524 = vmul.f32 %v2516, %v2516
    %v2525 = vmul.f32 %v2517, %v2517
    %v2526 = vsel %vm206, %v2518, 0.0
    %2527 = vadd.xlane.f32.xlu0 %v2526
    %v2528 = vpop.xlane.xlu0 %2527
    %v2529 = vsel %vm206, %v2519, 0.0
    %2530 = vadd.xlane.f32.xlu0 %v2529
    %v2531 = vpop.xlane.xlu0 %2530
    %v2532 = vsel %vm206, %v2520, 0.0
    %2533 = vadd.xlane.f32.xlu0 %v2532
    %v2534 = vpop.xlane.xlu0 %2533
    %v2535 = vsel %vm206, %v2521, 0.0
    %2536 = vadd.xlane.f32.xlu0 %v2535
    %v2537 = vpop.xlane.xlu0 %2536
    %v2538 = vsel %vm206, %v2522, 0.0
    %2539 = vadd.xlane.f32.xlu0 %v2538
    %v2540 = vpop.xlane.xlu0 %2539
    %v2541 = vsel %vm206, %v2523, 0.0
    %2542 = vadd.xlane.f32.xlu0 %v2541
    %v2543 = vpop.xlane.xlu0 %2542
    %v2544 = vsel %vm206, %v2524, 0.0
    %2545 = vadd.xlane.f32.xlu0 %v2544
    %v2546 = vpop.xlane.xlu0 %2545
    %v2547 = vsel %vm206, %v2525, 0.0
    %2548 = vadd.xlane.f32.xlu0 %v2547
    %v2549 = vpop.xlane.xlu0 %2548
    %v2550 = vmul.f32 %v2528, %v231
    %v2551 = vmul.f32 %v2531, %v231
    %v2552 = vmul.f32 %v2534, %v231
    %v2553 = vmul.f32 %v2537, %v231
    %v2554 = vmul.f32 %v2540, %v231
    %v2555 = vmul.f32 %v2543, %v231
    %v2556 = vmul.f32 %v2546, %v231
    %v2557 = vmul.f32 %v2549, %v231
    %v2558 = vadd.f32 %v2550, 1e-05
    %v2559 = vadd.f32 %v2551, 1e-05
    %v2560 = vadd.f32 %v2552, 1e-05
    %v2561 = vadd.f32 %v2553, 1e-05
    %v2562 = vadd.f32 %v2554, 1e-05
    %v2563 = vadd.f32 %v2555, 1e-05
    %v2564 = vadd.f32 %v2556, 1e-05
    %v2565 = vadd.f32 %v2557, 1e-05
    %v2566 = vrsqrt.pop %v2558
    %v2567 = vrsqrt.pop %v2559
    %v2568 = vrsqrt.pop %v2560
    %v2569 = vrsqrt.pop %v2561
    %v2570 = vrsqrt.pop %v2562
    %v2571 = vrsqrt.pop %v2563
    %v2572 = vrsqrt.pop %v2564
    %v2573 = vrsqrt.pop %v2565
    %v2574 = vmul.f32 %v2510, %v2566
    %v2575 = vmul.f32 %v2511, %v2567
    %v2576 = vmul.f32 %v2512, %v2568
    %v2577 = vmul.f32 %v2513, %v2569
    %v2578 = vmul.f32 %v2514, %v2570
    %v2579 = vmul.f32 %v2515, %v2571
    %v2580 = vmul.f32 %v2516, %v2572
    %v2581 = vmul.f32 %v2517, %v2573
    %v2583 = vlaneseq
    %v2584 = vshrl.u32 %v2583, 7
    %v2585 = vsub.s32 0, %v2584
    %v2586 = vrot.slane %v2476, %v2585
    %v2588 = vmul.f32 %v2574, %v2586
    %v2589 = vmul.f32 %v2575, %v2586
    %v2590 = vmul.f32 %v2576, %v2586
    %v2591 = vmul.f32 %v2577, %v2586
    %v2592 = vmul.f32 %v2578, %v2586
    %v2593 = vmul.f32 %v2579, %v2586
    %v2594 = vmul.f32 %v2580, %v2586
    %v2595 = vmul.f32 %v2581, %v2586
    %v2597 = vlaneseq
    %v2598 = vshrl.u32 %v2597, 7
    %v2599 = vsub.s32 0, %v2598
    %v2600 = vrot.slane %v2477, %v2599
    %v2602 = vadd.f32 %v2588, %v2600
    %v2603 = vadd.f32 %v2589, %v2600
    %v2604 = vadd.f32 %v2590, %v2600
    %v2605 = vadd.f32 %v2591, %v2600
    %v2606 = vadd.f32 %v2592, %v2600
    %v2607 = vadd.f32 %v2593, %v2600
    %v2608 = vadd.f32 %v2594, %v2600
    %v2609 = vadd.f32 %v2595, %v2600
    %2610 = vst.msk [vmem:[%s23] sm:$0xff] %vm206, %v2602
    %2611 = vst.msk [vmem:[%s23 + $0x8] sm:$0xff] %vm206, %v2603
    %2612 = vst.msk [vmem:[%s23 + $0x10] sm:$0xff] %vm206, %v2604
    %2613 = vst.msk [vmem:[%s23 + $0x18] sm:$0xff] %vm206, %v2605
    %2614 = vst.msk [vmem:[%s23 + $0x20] sm:$0xff] %vm206, %v2606
    %2615 = vst.msk [vmem:[%s23 + $0x28] sm:$0xff] %vm206, %v2607
    %2616 = vst.msk [vmem:[%s23 + $0x30] sm:$0xff] %vm206, %v2608
    %2617 = vst.msk [vmem:[%s23 + $0x38] sm:$0xff] %vm206, %v2609
    // Predicated region
    $region102: #{hierarchical_transformer_forward.4} parent=1 // pred_check
      _
    $region103: #{hierarchical_transformer_forward.4} parent=1 // pred_check_branch
      %2619 = sbr.rel (0) target = $region105
    $region104: #{hierarchical_transformer_forward.4} parent=1 // pred_region
      _
    $region105: #{hierarchical_transformer_forward.4} parent=1 // pred_fallthru
      _
    // Predicated region
    $region106: #{hierarchical_transformer_forward.4} parent=1 // pred_check
      _
    $region107: #{hierarchical_transformer_forward.4} parent=1 // pred_check_branch
      %2621 = sbr.rel (0) target = $region109
    $region108: #{hierarchical_transformer_forward.4} parent=1 // pred_region
      _
    $region109: #{hierarchical_transformer_forward.4} parent=1 // pred_fallthru
      _
    %2622 = vsyncpa [#allocation3], 1
    %2623 = vsyncpa [#allocation5], 1

</llo_original>
